<compile_context>
chip_gen: v6e
topology: v6e:2x2x1
jax: 0.10.0
libtpu: 0.0.40
codegen_flags: <defaults>
</compile_context>

<pallas_src>
import math
import jax
import jax.numpy as jnp
from jax.experimental import pallas as pl
from jax.experimental.pallas import tpu as pltpu

# ----------------------------- config (small) -----------------------------
B, S = 2, 8          # batch, seq
H = 32               # encoder hidden size
NH, DH = 4, 8        # heads, head dim (NH*DH == H)
FFN = 64             # intermediate size
L = 2                # encoder layers
V = 120              # vocab size (for sampling ids)
V_PAD = 128          # word-embedding rows (padded)
MAXPOS = 4 * S       # position-embedding rows
EMB_ROWS = 256       # combined (word | position) embedding table rows, lane-aligned
PAD_IDX = 1          # roberta padding idx (position offset)
HEAD_HIDDEN = 256    # classifier hidden size (as in the PyTorch module)
NUM_INTENT = 7
NUM_SLOT = 13
HEAD_OUT = 256       # fused logits width: intent in [0,128), slot in [128,256)
LN_EPS = 1e-5
BS = B * S
VEC_W = 3 * H        # width of the packed per-layer bias/LN slab

_BF16 = jnp.bfloat16
_F32 = jnp.float32


def _f32(shape):
    return jax.ShapeDtypeStruct(shape, jnp.float32)


def _layernorm(x, g, b):
    mu = jnp.mean(x, axis=-1, keepdims=True)
    var = jnp.mean((x - mu) ** 2, axis=-1, keepdims=True)
    return (x - mu) * jax.lax.rsqrt(var + LN_EPS) * g + b


# ----------------------------- fused forward kernel -----------------------------

def _fused_forward_kernel(idx_ref, bias_ref, emb_tab_ref, emb_misc_ref,
                          wqkv_ref, wo_ref, wf1_ref, wf2_ref, vecs_ref,
                          hw1_ref, hw2_ref, hb_ref, out_ref):
    # ---- word + position embeddings via a single one-hot matmul ----
    widx = idx_ref[:, 0:1]                                              # [BS,1] word row
    pidx = idx_ref[:, 1:2]                                              # [BS,1] pos row (pre-offset)
    rows = jax.lax.broadcasted_iota(jnp.int32, (BS, EMB_ROWS), 1)
    onehot = jnp.logical_or(rows == widx, rows == pidx)
    onehot = onehot.astype(_F32).astype(_BF16)                          # two ones per row
    emb = jnp.dot(onehot, emb_tab_ref[...], preferred_element_type=_F32)  # word + pos
    emb = emb + emb_misc_ref[0:1, :]                                    # token-type-0 emb
    h = _layernorm(emb, emb_misc_ref[1:2, :], emb_misc_ref[2:3, :])     # [BS, H] f32

    bias = bias_ref[...]                                                # [BS,BS] block-diag + key mask
    scale = 1.0 / math.sqrt(DH)

    # ---- encoder layers (fully unrolled, everything stays in VMEM/vregs) ----
    for l in range(L):
        vec = vecs_ref[l]                                               # [8, 3H] packed bias/LN slab

        # fused Q/K/V projection: one [BS,H] x [H,3H] bf16 matmul
        qkv = jnp.dot(h.astype(_BF16), wqkv_ref[l],
                      preferred_element_type=_F32) + vec[0:1, :]        # [BS, 3H]

        # attention batched over B via block-diagonal bias (one [BS,BS] softmax per head)
        heads = []
        for hd in range(NH):
            c = hd * DH
            q = (qkv[:, c:c + DH] * scale).astype(_BF16)                # fold 1/sqrt(DH)
            k = qkv[:, H + c:H + c + DH].astype(_BF16)
            v = qkv[:, 2 * H + c:2 * H + c + DH].astype(_BF16)
            sc = jax.lax.dot_general(q, k, (((1,), (1,)), ((), ())),
                                     preferred_element_type=_F32)       # [BS, BS]
            sc = sc + bias
            m = jnp.max(sc, axis=-1, keepdims=True)
            p = jnp.exp(sc - m)
            p = p * pl.reciprocal(jnp.sum(p, axis=-1, keepdims=True), approx=True)
            heads.append(jnp.dot(p.astype(_BF16), v, preferred_element_type=_F32))
        ctx = jnp.concatenate(heads, axis=-1)                           # [BS, H]

        attn = jnp.dot(ctx.astype(_BF16), wo_ref[l],
                       preferred_element_type=_F32) + vec[1:2, 0:H]
        h = _layernorm(attn + h, vec[2:3, 0:H], vec[3:4, 0:H])

        ff = jnp.dot(h.astype(_BF16), wf1_ref[l],
                     preferred_element_type=_F32) + vec[4:5, 0:FFN]
        # TODO(synk): HF XLM-Roberta uses exact (erf) GELU; tanh approximation used here.
        ff = jax.nn.gelu(ff, approximate=True)
        ff = jnp.dot(ff.astype(_BF16), wf2_ref[l],
                     preferred_element_type=_F32) + vec[5:6, 0:H]
        h = _layernorm(ff + h, vec[6:7, 0:H], vec[7:8, 0:H])

    # ---- fused classifier heads (Dropout(0.3) == identity at inference) ----
    # intent head runs on all BS rows (same weights); the wrapper keeps rows ::S only.
    hid = jnp.maximum(
        jnp.dot(h.astype(_BF16), hw1_ref[...], preferred_element_type=_F32)
        + hb_ref[0:1, :], 0.0)                                          # [BS, 512]
    out_ref[...] = (jnp.dot(hid.astype(_BF16), hw2_ref[...],
                            preferred_element_type=_F32)
                    + hb_ref[1:2, 0:HEAD_OUT])                          # [BS, 256] lane-dense


# ----------------------------- parameters -----------------------------

def init_params(key):
    def nrm(k, shape, scale=0.02):
        return (scale * jax.random.normal(k, shape)).astype(jnp.float32)

    keys = iter(jax.random.split(key, 64))

    # Combined embedding table: rows [0,128) word emb, [128,160) position emb, rest zero.
    # TODO(synk): HF zero-initializes the padding_idx rows of word/pos tables; kept random here.
    emb_table = jnp.zeros((EMB_ROWS, H), jnp.float32)
    emb_table = emb_table.at[:V_PAD].set(nrm(next(keys), (V_PAD, H)))
    emb_table = emb_table.at[V_PAD:V_PAD + MAXPOS].set(nrm(next(keys), (MAXPOS, H)))
    temb = nrm(next(keys), (H,))
    emb_misc = jnp.stack([temb,
                          jnp.ones((H,), jnp.float32),    # emb LN gamma
                          jnp.zeros((H,), jnp.float32)])  # emb LN beta

    wqkv, wo, wf1, wf2, vecs = [], [], [], [], []
    for _ in range(L):
        wqkv.append(nrm(next(keys), (H, 3 * H)))
        wo.append(nrm(next(keys), (H, H)))
        wf1.append(nrm(next(keys), (H, FFN)))
        wf2.append(nrm(next(keys), (FFN, H)))
        # packed per-layer vector slab [8, 3H]:
        # 0: bqkv(3H) 1: bo(H) 2: ln1_g(H) 3: ln1_b(H) 4: bf1(FFN) 5: bf2(H) 6: ln2_g(H) 7: ln2_b(H)
        vec = jnp.zeros((8, VEC_W), jnp.float32)
        vec = vec.at[2, :H].set(1.0)
        vec = vec.at[6, :H].set(1.0)
        vecs.append(vec)

    # fused classifier heads
    iw1 = nrm(next(keys), (H, HEAD_HIDDEN))
    sw1 = nrm(next(keys), (H, HEAD_HIDDEN))
    iw2 = nrm(next(keys), (HEAD_HIDDEN, NUM_INTENT))
    sw2 = nrm(next(keys), (HEAD_HIDDEN, NUM_SLOT))
    head_w1 = jnp.concatenate([iw1, sw1], axis=1)                   # [H, 512]
    head_w2 = jnp.zeros((2 * HEAD_HIDDEN, HEAD_OUT), jnp.float32)   # block-diagonal [512, 256]
    head_w2 = head_w2.at[:HEAD_HIDDEN, :NUM_INTENT].set(iw2)
    head_w2 = head_w2.at[HEAD_HIDDEN:, 128:128 + NUM_SLOT].set(sw2)
    head_b = jnp.zeros((2, 2 * HEAD_HIDDEN), jnp.float32)           # row0: b1, row1: b2 (padded)

    return {
        'emb_table': emb_table.astype(_BF16),
        'emb_misc': emb_misc,
        'wqkv': jnp.stack(wqkv).astype(_BF16),
        'wo': jnp.stack(wo).astype(_BF16),
        'wf1': jnp.stack(wf1).astype(_BF16),
        'wf2': jnp.stack(wf2).astype(_BF16),
        'layer_vecs': jnp.stack(vecs),
        'head_w1': head_w1.astype(_BF16),
        'head_w2': head_w2.astype(_BF16),
        'head_b': head_b,
    }


# ----------------------------- forward wrapper -----------------------------

def joint_intent_slot_forward(p, input_ids, attention_mask):
    # XLM-Roberta position ids (HF create_position_ids_from_input_ids).
    pos_mask = (input_ids != PAD_IDX).astype(jnp.int32)
    position_ids = jnp.cumsum(pos_mask, axis=1) * pos_mask + PAD_IDX

    # packed gather indices into the combined embedding table
    idx = jnp.stack([input_ids.reshape(BS),
                     V_PAD + position_ids.reshape(BS)], axis=1).astype(jnp.int32)  # [BS,2]

    # block-diagonal attention bias: 0 for same-batch & valid key, -1e9 otherwise
    batch_ids = jnp.repeat(jnp.arange(B), S)
    same_batch = batch_ids[:, None] == batch_ids[None, :]
    key_valid = attention_mask.reshape(BS) != 0
    attn_bias = jnp.where(same_batch & key_valid[None, :], 0.0, -1e9).astype(jnp.float32)

    args = (idx, attn_bias,
            p['emb_table'], p['emb_misc'],
            p['wqkv'], p['wo'], p['wf1'], p['wf2'], p['layer_vecs'],
            p['head_w1'], p['head_w2'], p['head_b'])

    vmem = pl.BlockSpec(memory_space=pltpu.MemorySpace.VMEM)
    logits = pl.pallas_call(
        _fused_forward_kernel,
        out_shape=_f32((BS, HEAD_OUT)),
        in_specs=[vmem] * len(args),
        out_specs=vmem,
    )(*args)

    intent_logits = logits[0::S, :NUM_INTENT]                           # CLS rows only
    slot_logits = logits[:, 128:128 + NUM_SLOT].reshape(B, S, NUM_SLOT)
    return {'intent_logits': intent_logits, 'slot_logits': slot_logits}


# ----------------------------- main -----------------------------
if __name__ == "__main__":
    key = jax.random.PRNGKey(0)
    k_param, k_ids = jax.random.split(key)

    params = init_params(k_param)

    input_ids = jax.random.randint(k_ids, (B, S), 2, V, dtype=jnp.int32)
    attention_mask = jnp.ones((B, S), jnp.int32)
    attention_mask = attention_mask.at[1, S - 2:].set(0)               # pad tail of 2nd example
    # padded positions carry the pad token id (consistent with HF position-id derivation)
    input_ids = jnp.where(attention_mask == 1, input_ids, PAD_IDX)

    fwd = jax.jit(lambda ids, m: joint_intent_slot_forward(params, ids, m))
    out = fwd(input_ids, attention_mask)
    jax.block_until_ready(out)

    assert out['intent_logits'].shape == (B, NUM_INTENT)
    assert out['slot_logits'].shape == (B, S, NUM_SLOT)
    assert bool(jnp.all(jnp.isfinite(out['intent_logits'])))
    assert bool(jnp.all(jnp.isfinite(out['slot_logits'])))
    print("KERNEL_OK")
</pallas_src>

<mosaic_0001>
module attributes {stable_mosaic.version = 11 : i64} {
  func.func @_fused_forward_kernel(%arg0: memref<16x2xi32, #tpu.memory_space<vmem>>, %arg1: memref<16x16xf32, #tpu.memory_space<vmem>>, %arg2: memref<256x32xbf16, #tpu.memory_space<vmem>>, %arg3: memref<3x32xf32, #tpu.memory_space<vmem>>, %arg4: memref<2x32x96xbf16, #tpu.memory_space<vmem>>, %arg5: memref<2x32x32xbf16, #tpu.memory_space<vmem>>, %arg6: memref<2x32x64xbf16, #tpu.memory_space<vmem>>, %arg7: memref<2x64x32xbf16, #tpu.memory_space<vmem>>, %arg8: memref<2x8x96xf32, #tpu.memory_space<vmem>>, %arg9: memref<32x512xbf16, #tpu.memory_space<vmem>>, %arg10: memref<512x256xbf16, #tpu.memory_space<vmem>>, %arg11: memref<2x512xf32, #tpu.memory_space<vmem>>, %arg12: memref<16x256xf32, #tpu.memory_space<vmem>>) attributes {dimension_semantics = [], scalar_prefetch = 0 : i64, scratch_operands = 0 : i64, tpu.core_type = #tpu.core_type<tc>} {
    %c0 = arith.constant 0 : index
    %c0_0 = arith.constant 0 : index
    %0 = vector.load %arg0[%c0, %c0_0] : memref<16x2xi32, #tpu.memory_space<vmem>>, vector<16x1xi32>
    %c0_1 = arith.constant 0 : index
    %c1 = arith.constant 1 : index
    %1 = vector.load %arg0[%c0_1, %c1] : memref<16x2xi32, #tpu.memory_space<vmem>>, vector<16x1xi32>
    %2 = tpu.iota {dimensions = array<i32: 1>} : vector<16x256xi32>
    %3 = vector.broadcast %0 : vector<16x1xi32> to vector<16x256xi32>
    %4 = arith.cmpi eq, %2, %3 : vector<16x256xi32>
    %5 = vector.broadcast %1 : vector<16x1xi32> to vector<16x256xi32>
    %6 = arith.cmpi eq, %2, %5 : vector<16x256xi32>
    %7 = arith.ori %4, %6 : vector<16x256xi1>
    %8 = arith.extui %7 : vector<16x256xi1> to vector<16x256xi32>
    %9 = arith.sitofp %8 : vector<16x256xi32> to vector<16x256xf32>
    %10 = arith.truncf %9 : vector<16x256xf32> to vector<16x256xbf16>
    %c0_2 = arith.constant 0 : index
    %c0_3 = arith.constant 0 : index
    %11 = vector.load %arg2[%c0_2, %c0_3] : memref<256x32xbf16, #tpu.memory_space<vmem>>, vector<256x32xbf16>
    %cst = arith.constant dense<0.000000e+00> : vector<16x32xf32>
    %12 = tpu.matmul %10, %11, %cst {dimension_numbers = #tpu.dot_dimension_numbers<[1], [0], [0], [1], [0, 0, 1, 1], [], []>} : vector<16x256xbf16>, vector<256x32xbf16>, vector<16x32xf32> -> vector<16x32xf32>
    %c0_4 = arith.constant 0 : index
    %c0_5 = arith.constant 0 : index
    %13 = vector.load %arg3[%c0_4, %c0_5] : memref<3x32xf32, #tpu.memory_space<vmem>>, vector<1x32xf32>
    %14 = vector.broadcast %13 : vector<1x32xf32> to vector<16x32xf32>
    %15 = arith.addf %12, %14 : vector<16x32xf32>
    %c1_6 = arith.constant 1 : index
    %c0_7 = arith.constant 0 : index
    %16 = vector.load %arg3[%c1_6, %c0_7] : memref<3x32xf32, #tpu.memory_space<vmem>>, vector<1x32xf32>
    %c2 = arith.constant 2 : index
    %c0_8 = arith.constant 0 : index
    %17 = vector.load %arg3[%c2, %c0_8] : memref<3x32xf32, #tpu.memory_space<vmem>>, vector<1x32xf32>
    %cst_9 = arith.constant dense<0.000000e+00> : vector<16xf32>
    %18 = vector.multi_reduction <add>, %15, %cst_9 [1] : vector<16x32xf32> to vector<16xf32>
    %19 = vector.shape_cast %18 : vector<16xf32> to vector<16x1xf32>
    %cst_10 = arith.constant 3.200000e+01 : f32
    %20 = vector.broadcast %cst_10 : f32 to vector<16x1xf32>
    %21 = arith.divf %19, %20 : vector<16x1xf32>
    %22 = vector.broadcast %21 : vector<16x1xf32> to vector<16x32xf32>
    %23 = arith.subf %15, %22 : vector<16x32xf32>
    %24 = arith.mulf %23, %23 : vector<16x32xf32>
    %cst_11 = arith.constant dense<0.000000e+00> : vector<16xf32>
    %25 = vector.multi_reduction <add>, %24, %cst_11 [1] : vector<16x32xf32> to vector<16xf32>
    %26 = vector.shape_cast %25 : vector<16xf32> to vector<16x1xf32>
    %cst_12 = arith.constant 3.200000e+01 : f32
    %27 = vector.broadcast %cst_12 : f32 to vector<16x1xf32>
    %28 = arith.divf %26, %27 : vector<16x1xf32>
    %29 = vector.broadcast %21 : vector<16x1xf32> to vector<16x32xf32>
    %30 = arith.subf %15, %29 : vector<16x32xf32>
    %cst_13 = arith.constant 9.99999974E-6 : f32
    %31 = vector.broadcast %cst_13 : f32 to vector<16x1xf32>
    %32 = arith.addf %28, %31 : vector<16x1xf32>
    %33 = math.rsqrt %32 : vector<16x1xf32>
    %34 = vector.broadcast %33 : vector<16x1xf32> to vector<16x32xf32>
    %35 = arith.mulf %30, %34 : vector<16x32xf32>
    %36 = vector.broadcast %16 : vector<1x32xf32> to vector<16x32xf32>
    %37 = arith.mulf %35, %36 : vector<16x32xf32>
    %38 = vector.broadcast %17 : vector<1x32xf32> to vector<16x32xf32>
    %39 = arith.addf %37, %38 : vector<16x32xf32>
    %c0_14 = arith.constant 0 : index
    %c0_15 = arith.constant 0 : index
    %40 = vector.load %arg1[%c0_14, %c0_15] : memref<16x16xf32, #tpu.memory_space<vmem>>, vector<16x16xf32>
    %c0_16 = arith.constant 0 : index
    %c0_17 = arith.constant 0 : index
    %c0_18 = arith.constant 0 : index
    %41 = vector.load %arg8[%c0_16, %c0_17, %c0_18] : memref<2x8x96xf32, #tpu.memory_space<vmem>>, vector<1x8x96xf32>
    %42 = vector.shape_cast %41 : vector<1x8x96xf32> to vector<8x96xf32>
    %43 = arith.truncf %39 : vector<16x32xf32> to vector<16x32xbf16>
    %c0_19 = arith.constant 0 : index
    %c0_20 = arith.constant 0 : index
    %c0_21 = arith.constant 0 : index
    %44 = vector.load %arg4[%c0_19, %c0_20, %c0_21] : memref<2x32x96xbf16, #tpu.memory_space<vmem>>, vector<1x32x96xbf16>
    %45 = vector.shape_cast %44 : vector<1x32x96xbf16> to vector<32x96xbf16>
    %cst_22 = arith.constant dense<0.000000e+00> : vector<16x96xf32>
    %46 = tpu.matmul %43, %45, %cst_22 {dimension_numbers = #tpu.dot_dimension_numbers<[1], [0], [0], [1], [0, 0, 1, 1], [], []>} : vector<16x32xbf16>, vector<32x96xbf16>, vector<16x96xf32> -> vector<16x96xf32>
    %47 = vector.extract_strided_slice %42 {offsets = [0, 0], sizes = [1, 96], strides = [1, 1]} : vector<8x96xf32> to vector<1x96xf32>
    %48 = vector.broadcast %47 : vector<1x96xf32> to vector<16x96xf32>
    %49 = arith.addf %46, %48 : vector<16x96xf32>
    %50 = vector.extract_strided_slice %49 {offsets = [0, 0], sizes = [16, 8], strides = [1, 1]} : vector<16x96xf32> to vector<16x8xf32>
    %cst_23 = arith.constant 0.353553385 : f32
    %51 = vector.broadcast %cst_23 : f32 to vector<16x8xf32>
    %52 = arith.mulf %50, %51 : vector<16x8xf32>
    %53 = arith.truncf %52 : vector<16x8xf32> to vector<16x8xbf16>
    %54 = vector.extract_strided_slice %49 {offsets = [0, 32], sizes = [16, 8], strides = [1, 1]} : vector<16x96xf32> to vector<16x8xf32>
    %55 = arith.truncf %54 : vector<16x8xf32> to vector<16x8xbf16>
    %56 = vector.extract_strided_slice %49 {offsets = [0, 64], sizes = [16, 8], strides = [1, 1]} : vector<16x96xf32> to vector<16x8xf32>
    %57 = arith.truncf %56 : vector<16x8xf32> to vector<16x8xbf16>
    %cst_24 = arith.constant dense<0.000000e+00> : vector<16x16xf32>
    %58 = tpu.matmul %53, %55, %cst_24 {dimension_numbers = #tpu.dot_dimension_numbers<[1], [1], [0], [0], [0, 0, 1, 0], [], []>} : vector<16x8xbf16>, vector<16x8xbf16>, vector<16x16xf32> -> vector<16x16xf32>
    %59 = arith.addf %58, %40 : vector<16x16xf32>
    %cst_25 = arith.constant dense<0xFF800000> : vector<16xf32>
    %60 = vector.multi_reduction <maximumf>, %59, %cst_25 [1] : vector<16x16xf32> to vector<16xf32>
    %61 = vector.shape_cast %60 : vector<16xf32> to vector<16x1xf32>
    %62 = vector.broadcast %61 : vector<16x1xf32> to vector<16x16xf32>
    %63 = arith.subf %59, %62 : vector<16x16xf32>
    %64 = math.exp %63 : vector<16x16xf32>
    %cst_26 = arith.constant dense<0.000000e+00> : vector<16xf32>
    %65 = vector.multi_reduction <add>, %64, %cst_26 [1] : vector<16x16xf32> to vector<16xf32>
    %66 = vector.shape_cast %65 : vector<16xf32> to vector<16x1xf32>
    %67 = tpu.reciprocal %66 {approx = true} : vector<16x1xf32> -> vector<16x1xf32>
    %68 = vector.broadcast %67 : vector<16x1xf32> to vector<16x16xf32>
    %69 = arith.mulf %64, %68 : vector<16x16xf32>
    %70 = arith.truncf %69 : vector<16x16xf32> to vector<16x16xbf16>
    %cst_27 = arith.constant dense<0.000000e+00> : vector<16x8xf32>
    %71 = tpu.matmul %70, %57, %cst_27 {dimension_numbers = #tpu.dot_dimension_numbers<[1], [0], [0], [1], [0, 0, 1, 1], [], []>} : vector<16x16xbf16>, vector<16x8xbf16>, vector<16x8xf32> -> vector<16x8xf32>
    %72 = vector.extract_strided_slice %49 {offsets = [0, 8], sizes = [16, 8], strides = [1, 1]} : vector<16x96xf32> to vector<16x8xf32>
    %cst_28 = arith.constant 0.353553385 : f32
    %73 = vector.broadcast %cst_28 : f32 to vector<16x8xf32>
    %74 = arith.mulf %72, %73 : vector<16x8xf32>
    %75 = arith.truncf %74 : vector<16x8xf32> to vector<16x8xbf16>
    %76 = vector.extract_strided_slice %49 {offsets = [0, 40], sizes = [16, 8], strides = [1, 1]} : vector<16x96xf32> to vector<16x8xf32>
    %77 = arith.truncf %76 : vector<16x8xf32> to vector<16x8xbf16>
    %78 = vector.extract_strided_slice %49 {offsets = [0, 72], sizes = [16, 8], strides = [1, 1]} : vector<16x96xf32> to vector<16x8xf32>
    %79 = arith.truncf %78 : vector<16x8xf32> to vector<16x8xbf16>
    %cst_29 = arith.constant dense<0.000000e+00> : vector<16x16xf32>
    %80 = tpu.matmul %75, %77, %cst_29 {dimension_numbers = #tpu.dot_dimension_numbers<[1], [1], [0], [0], [0, 0, 1, 0], [], []>} : vector<16x8xbf16>, vector<16x8xbf16>, vector<16x16xf32> -> vector<16x16xf32>
    %81 = arith.addf %80, %40 : vector<16x16xf32>
    %cst_30 = arith.constant dense<0xFF800000> : vector<16xf32>
    %82 = vector.multi_reduction <maximumf>, %81, %cst_30 [1] : vector<16x16xf32> to vector<16xf32>
    %83 = vector.shape_cast %82 : vector<16xf32> to vector<16x1xf32>
    %84 = vector.broadcast %83 : vector<16x1xf32> to vector<16x16xf32>
    %85 = arith.subf %81, %84 : vector<16x16xf32>
    %86 = math.exp %85 : vector<16x16xf32>
    %cst_31 = arith.constant dense<0.000000e+00> : vector<16xf32>
    %87 = vector.multi_reduction <add>, %86, %cst_31 [1] : vector<16x16xf32> to vector<16xf32>
    %88 = vector.shape_cast %87 : vector<16xf32> to vector<16x1xf32>
    %89 = tpu.reciprocal %88 {approx = true} : vector<16x1xf32> -> vector<16x1xf32>
    %90 = vector.broadcast %89 : vector<16x1xf32> to vector<16x16xf32>
    %91 = arith.mulf %86, %90 : vector<16x16xf32>
    %92 = arith.truncf %91 : vector<16x16xf32> to vector<16x16xbf16>
    %cst_32 = arith.constant dense<0.000000e+00> : vector<16x8xf32>
    %93 = tpu.matmul %92, %79, %cst_32 {dimension_numbers = #tpu.dot_dimension_numbers<[1], [0], [0], [1], [0, 0, 1, 1], [], []>} : vector<16x16xbf16>, vector<16x8xbf16>, vector<16x8xf32> -> vector<16x8xf32>
    %94 = vector.extract_strided_slice %49 {offsets = [0, 16], sizes = [16, 8], strides = [1, 1]} : vector<16x96xf32> to vector<16x8xf32>
    %cst_33 = arith.constant 0.353553385 : f32
    %95 = vector.broadcast %cst_33 : f32 to vector<16x8xf32>
    %96 = arith.mulf %94, %95 : vector<16x8xf32>
    %97 = arith.truncf %96 : vector<16x8xf32> to vector<16x8xbf16>
    %98 = vector.extract_strided_slice %49 {offsets = [0, 48], sizes = [16, 8], strides = [1, 1]} : vector<16x96xf32> to vector<16x8xf32>
    %99 = arith.truncf %98 : vector<16x8xf32> to vector<16x8xbf16>
    %100 = vector.extract_strided_slice %49 {offsets = [0, 80], sizes = [16, 8], strides = [1, 1]} : vector<16x96xf32> to vector<16x8xf32>
    %101 = arith.truncf %100 : vector<16x8xf32> to vector<16x8xbf16>
    %cst_34 = arith.constant dense<0.000000e+00> : vector<16x16xf32>
    %102 = tpu.matmul %97, %99, %cst_34 {dimension_numbers = #tpu.dot_dimension_numbers<[1], [1], [0], [0], [0, 0, 1, 0], [], []>} : vector<16x8xbf16>, vector<16x8xbf16>, vector<16x16xf32> -> vector<16x16xf32>
    %103 = arith.addf %102, %40 : vector<16x16xf32>
    %cst_35 = arith.constant dense<0xFF800000> : vector<16xf32>
    %104 = vector.multi_reduction <maximumf>, %103, %cst_35 [1] : vector<16x16xf32> to vector<16xf32>
    %105 = vector.shape_cast %104 : vector<16xf32> to vector<16x1xf32>
    %106 = vector.broadcast %105 : vector<16x1xf32> to vector<16x16xf32>
    %107 = arith.subf %103, %106 : vector<16x16xf32>
    %108 = math.exp %107 : vector<16x16xf32>
    %cst_36 = arith.constant dense<0.000000e+00> : vector<16xf32>
    %109 = vector.multi_reduction <add>, %108, %cst_36 [1] : vector<16x16xf32> to vector<16xf32>
    %110 = vector.shape_cast %109 : vector<16xf32> to vector<16x1xf32>
    %111 = tpu.reciprocal %110 {approx = true} : vector<16x1xf32> -> vector<16x1xf32>
    %112 = vector.broadcast %111 : vector<16x1xf32> to vector<16x16xf32>
    %113 = arith.mulf %108, %112 : vector<16x16xf32>
    %114 = arith.truncf %113 : vector<16x16xf32> to vector<16x16xbf16>
    %cst_37 = arith.constant dense<0.000000e+00> : vector<16x8xf32>
    %115 = tpu.matmul %114, %101, %cst_37 {dimension_numbers = #tpu.dot_dimension_numbers<[1], [0], [0], [1], [0, 0, 1, 1], [], []>} : vector<16x16xbf16>, vector<16x8xbf16>, vector<16x8xf32> -> vector<16x8xf32>
    %116 = vector.extract_strided_slice %49 {offsets = [0, 24], sizes = [16, 8], strides = [1, 1]} : vector<16x96xf32> to vector<16x8xf32>
    %cst_38 = arith.constant 0.353553385 : f32
    %117 = vector.broadcast %cst_38 : f32 to vector<16x8xf32>
    %118 = arith.mulf %116, %117 : vector<16x8xf32>
    %119 = arith.truncf %118 : vector<16x8xf32> to vector<16x8xbf16>
    %120 = vector.extract_strided_slice %49 {offsets = [0, 56], sizes = [16, 8], strides = [1, 1]} : vector<16x96xf32> to vector<16x8xf32>
    %121 = arith.truncf %120 : vector<16x8xf32> to vector<16x8xbf16>
    %122 = vector.extract_strided_slice %49 {offsets = [0, 88], sizes = [16, 8], strides = [1, 1]} : vector<16x96xf32> to vector<16x8xf32>
    %123 = arith.truncf %122 : vector<16x8xf32> to vector<16x8xbf16>
    %cst_39 = arith.constant dense<0.000000e+00> : vector<16x16xf32>
    %124 = tpu.matmul %119, %121, %cst_39 {dimension_numbers = #tpu.dot_dimension_numbers<[1], [1], [0], [0], [0, 0, 1, 0], [], []>} : vector<16x8xbf16>, vector<16x8xbf16>, vector<16x16xf32> -> vector<16x16xf32>
    %125 = arith.addf %124, %40 : vector<16x16xf32>
    %cst_40 = arith.constant dense<0xFF800000> : vector<16xf32>
    %126 = vector.multi_reduction <maximumf>, %125, %cst_40 [1] : vector<16x16xf32> to vector<16xf32>
    %127 = vector.shape_cast %126 : vector<16xf32> to vector<16x1xf32>
    %128 = vector.broadcast %127 : vector<16x1xf32> to vector<16x16xf32>
    %129 = arith.subf %125, %128 : vector<16x16xf32>
    %130 = math.exp %129 : vector<16x16xf32>
    %cst_41 = arith.constant dense<0.000000e+00> : vector<16xf32>
    %131 = vector.multi_reduction <add>, %130, %cst_41 [1] : vector<16x16xf32> to vector<16xf32>
    %132 = vector.shape_cast %131 : vector<16xf32> to vector<16x1xf32>
    %133 = tpu.reciprocal %132 {approx = true} : vector<16x1xf32> -> vector<16x1xf32>
    %134 = vector.broadcast %133 : vector<16x1xf32> to vector<16x16xf32>
    %135 = arith.mulf %130, %134 : vector<16x16xf32>
    %136 = arith.truncf %135 : vector<16x16xf32> to vector<16x16xbf16>
    %cst_42 = arith.constant dense<0.000000e+00> : vector<16x8xf32>
    %137 = tpu.matmul %136, %123, %cst_42 {dimension_numbers = #tpu.dot_dimension_numbers<[1], [0], [0], [1], [0, 0, 1, 1], [], []>} : vector<16x16xbf16>, vector<16x8xbf16>, vector<16x8xf32> -> vector<16x8xf32>
    %138 = tpu.concatenate %71, %93, %115, %137 in 1 : vector<16x8xf32>, vector<16x8xf32>, vector<16x8xf32>, vector<16x8xf32> -> vector<16x32xf32>
    %139 = arith.truncf %138 : vector<16x32xf32> to vector<16x32xbf16>
    %c0_43 = arith.constant 0 : index
    %c0_44 = arith.constant 0 : index
    %c0_45 = arith.constant 0 : index
    %140 = vector.load %arg5[%c0_43, %c0_44, %c0_45] : memref<2x32x32xbf16, #tpu.memory_space<vmem>>, vector<1x32x32xbf16>
    %141 = vector.shape_cast %140 : vector<1x32x32xbf16> to vector<32x32xbf16>
    %cst_46 = arith.constant dense<0.000000e+00> : vector<16x32xf32>
    %142 = tpu.matmul %139, %141, %cst_46 {dimension_numbers = #tpu.dot_dimension_numbers<[1], [0], [0], [1], [0, 0, 1, 1], [], []>} : vector<16x32xbf16>, vector<32x32xbf16>, vector<16x32xf32> -> vector<16x32xf32>
    %143 = vector.extract_strided_slice %42 {offsets = [1, 0], sizes = [1, 32], strides = [1, 1]} : vector<8x96xf32> to vector<1x32xf32>
    %144 = vector.broadcast %143 : vector<1x32xf32> to vector<16x32xf32>
    %145 = arith.addf %142, %144 : vector<16x32xf32>
    %146 = arith.addf %145, %39 : vector<16x32xf32>
    %147 = vector.extract_strided_slice %42 {offsets = [2, 0], sizes = [1, 32], strides = [1, 1]} : vector<8x96xf32> to vector<1x32xf32>
    %148 = vector.extract_strided_slice %42 {offsets = [3, 0], sizes = [1, 32], strides = [1, 1]} : vector<8x96xf32> to vector<1x32xf32>
    %cst_47 = arith.constant dense<0.000000e+00> : vector<16xf32>
    %149 = vector.multi_reduction <add>, %146, %cst_47 [1] : vector<16x32xf32> to vector<16xf32>
    %150 = vector.shape_cast %149 : vector<16xf32> to vector<16x1xf32>
    %cst_48 = arith.constant 3.200000e+01 : f32
    %151 = vector.broadcast %cst_48 : f32 to vector<16x1xf32>
    %152 = arith.divf %150, %151 : vector<16x1xf32>
    %153 = vector.broadcast %152 : vector<16x1xf32> to vector<16x32xf32>
    %154 = arith.subf %146, %153 : vector<16x32xf32>
    %155 = arith.mulf %154, %154 : vector<16x32xf32>
    %cst_49 = arith.constant dense<0.000000e+00> : vector<16xf32>
    %156 = vector.multi_reduction <add>, %155, %cst_49 [1] : vector<16x32xf32> to vector<16xf32>
    %157 = vector.shape_cast %156 : vector<16xf32> to vector<16x1xf32>
    %cst_50 = arith.constant 3.200000e+01 : f32
    %158 = vector.broadcast %cst_50 : f32 to vector<16x1xf32>
    %159 = arith.divf %157, %158 : vector<16x1xf32>
    %160 = vector.broadcast %152 : vector<16x1xf32> to vector<16x32xf32>
    %161 = arith.subf %146, %160 : vector<16x32xf32>
    %cst_51 = arith.constant 9.99999974E-6 : f32
    %162 = vector.broadcast %cst_51 : f32 to vector<16x1xf32>
    %163 = arith.addf %159, %162 : vector<16x1xf32>
    %164 = math.rsqrt %163 : vector<16x1xf32>
    %165 = vector.broadcast %164 : vector<16x1xf32> to vector<16x32xf32>
    %166 = arith.mulf %161, %165 : vector<16x32xf32>
    %167 = vector.broadcast %147 : vector<1x32xf32> to vector<16x32xf32>
    %168 = arith.mulf %166, %167 : vector<16x32xf32>
    %169 = vector.broadcast %148 : vector<1x32xf32> to vector<16x32xf32>
    %170 = arith.addf %168, %169 : vector<16x32xf32>
    %171 = arith.truncf %170 : vector<16x32xf32> to vector<16x32xbf16>
    %c0_52 = arith.constant 0 : index
    %c0_53 = arith.constant 0 : index
    %c0_54 = arith.constant 0 : index
    %172 = vector.load %arg6[%c0_52, %c0_53, %c0_54] : memref<2x32x64xbf16, #tpu.memory_space<vmem>>, vector<1x32x64xbf16>
    %173 = vector.shape_cast %172 : vector<1x32x64xbf16> to vector<32x64xbf16>
    %cst_55 = arith.constant dense<0.000000e+00> : vector<16x64xf32>
    %174 = tpu.matmul %171, %173, %cst_55 {dimension_numbers = #tpu.dot_dimension_numbers<[1], [0], [0], [1], [0, 0, 1, 1], [], []>} : vector<16x32xbf16>, vector<32x64xbf16>, vector<16x64xf32> -> vector<16x64xf32>
    %175 = vector.extract_strided_slice %42 {offsets = [4, 0], sizes = [1, 64], strides = [1, 1]} : vector<8x96xf32> to vector<1x64xf32>
    %176 = vector.broadcast %175 : vector<1x64xf32> to vector<16x64xf32>
    %177 = arith.addf %174, %176 : vector<16x64xf32>
    %178 = arith.mulf %177, %177 : vector<16x64xf32>
    %179 = arith.mulf %177, %178 : vector<16x64xf32>
    %cst_56 = arith.constant 4.471500e-02 : f32
    %180 = vector.broadcast %cst_56 : f32 to vector<16x64xf32>
    %181 = arith.mulf %180, %179 : vector<16x64xf32>
    %182 = arith.addf %177, %181 : vector<16x64xf32>
    %cst_57 = arith.constant 0.797884583 : f32
    %183 = vector.broadcast %cst_57 : f32 to vector<16x64xf32>
    %184 = arith.mulf %183, %182 : vector<16x64xf32>
    %185 = math.tanh %184 : vector<16x64xf32>
    %cst_58 = arith.constant 1.000000e+00 : f32
    %186 = vector.broadcast %cst_58 : f32 to vector<16x64xf32>
    %187 = arith.addf %186, %185 : vector<16x64xf32>
    %cst_59 = arith.constant 5.000000e-01 : f32
    %188 = vector.broadcast %cst_59 : f32 to vector<16x64xf32>
    %189 = arith.mulf %188, %187 : vector<16x64xf32>
    %190 = arith.mulf %177, %189 : vector<16x64xf32>
    %191 = arith.truncf %190 : vector<16x64xf32> to vector<16x64xbf16>
    %c0_60 = arith.constant 0 : index
    %c0_61 = arith.constant 0 : index
    %c0_62 = arith.constant 0 : index
    %192 = vector.load %arg7[%c0_60, %c0_61, %c0_62] : memref<2x64x32xbf16, #tpu.memory_space<vmem>>, vector<1x64x32xbf16>
    %193 = vector.shape_cast %192 : vector<1x64x32xbf16> to vector<64x32xbf16>
    %cst_63 = arith.constant dense<0.000000e+00> : vector<16x32xf32>
    %194 = tpu.matmul %191, %193, %cst_63 {dimension_numbers = #tpu.dot_dimension_numbers<[1], [0], [0], [1], [0, 0, 1, 1], [], []>} : vector<16x64xbf16>, vector<64x32xbf16>, vector<16x32xf32> -> vector<16x32xf32>
    %195 = vector.extract_strided_slice %42 {offsets = [5, 0], sizes = [1, 32], strides = [1, 1]} : vector<8x96xf32> to vector<1x32xf32>
    %196 = vector.broadcast %195 : vector<1x32xf32> to vector<16x32xf32>
    %197 = arith.addf %194, %196 : vector<16x32xf32>
    %198 = arith.addf %197, %170 : vector<16x32xf32>
    %199 = vector.extract_strided_slice %42 {offsets = [6, 0], sizes = [1, 32], strides = [1, 1]} : vector<8x96xf32> to vector<1x32xf32>
    %200 = vector.extract_strided_slice %42 {offsets = [7, 0], sizes = [1, 32], strides = [1, 1]} : vector<8x96xf32> to vector<1x32xf32>
    %cst_64 = arith.constant dense<0.000000e+00> : vector<16xf32>
    %201 = vector.multi_reduction <add>, %198, %cst_64 [1] : vector<16x32xf32> to vector<16xf32>
    %202 = vector.shape_cast %201 : vector<16xf32> to vector<16x1xf32>
    %cst_65 = arith.constant 3.200000e+01 : f32
    %203 = vector.broadcast %cst_65 : f32 to vector<16x1xf32>
    %204 = arith.divf %202, %203 : vector<16x1xf32>
    %205 = vector.broadcast %204 : vector<16x1xf32> to vector<16x32xf32>
    %206 = arith.subf %198, %205 : vector<16x32xf32>
    %207 = arith.mulf %206, %206 : vector<16x32xf32>
    %cst_66 = arith.constant dense<0.000000e+00> : vector<16xf32>
    %208 = vector.multi_reduction <add>, %207, %cst_66 [1] : vector<16x32xf32> to vector<16xf32>
    %209 = vector.shape_cast %208 : vector<16xf32> to vector<16x1xf32>
    %cst_67 = arith.constant 3.200000e+01 : f32
    %210 = vector.broadcast %cst_67 : f32 to vector<16x1xf32>
    %211 = arith.divf %209, %210 : vector<16x1xf32>
    %212 = vector.broadcast %204 : vector<16x1xf32> to vector<16x32xf32>
    %213 = arith.subf %198, %212 : vector<16x32xf32>
    %cst_68 = arith.constant 9.99999974E-6 : f32
    %214 = vector.broadcast %cst_68 : f32 to vector<16x1xf32>
    %215 = arith.addf %211, %214 : vector<16x1xf32>
    %216 = math.rsqrt %215 : vector<16x1xf32>
    %217 = vector.broadcast %216 : vector<16x1xf32> to vector<16x32xf32>
    %218 = arith.mulf %213, %217 : vector<16x32xf32>
    %219 = vector.broadcast %199 : vector<1x32xf32> to vector<16x32xf32>
    %220 = arith.mulf %218, %219 : vector<16x32xf32>
    %221 = vector.broadcast %200 : vector<1x32xf32> to vector<16x32xf32>
    %222 = arith.addf %220, %221 : vector<16x32xf32>
    %c1_69 = arith.constant 1 : index
    %c0_70 = arith.constant 0 : index
    %c0_71 = arith.constant 0 : index
    %223 = vector.load %arg8[%c1_69, %c0_70, %c0_71] : memref<2x8x96xf32, #tpu.memory_space<vmem>>, vector<1x8x96xf32>
    %224 = vector.shape_cast %223 : vector<1x8x96xf32> to vector<8x96xf32>
    %225 = arith.truncf %222 : vector<16x32xf32> to vector<16x32xbf16>
    %c1_72 = arith.constant 1 : index
    %c0_73 = arith.constant 0 : index
    %c0_74 = arith.constant 0 : index
    %226 = vector.load %arg4[%c1_72, %c0_73, %c0_74] : memref<2x32x96xbf16, #tpu.memory_space<vmem>>, vector<1x32x96xbf16>
    %227 = vector.shape_cast %226 : vector<1x32x96xbf16> to vector<32x96xbf16>
    %cst_75 = arith.constant dense<0.000000e+00> : vector<16x96xf32>
    %228 = tpu.matmul %225, %227, %cst_75 {dimension_numbers = #tpu.dot_dimension_numbers<[1], [0], [0], [1], [0, 0, 1, 1], [], []>} : vector<16x32xbf16>, vector<32x96xbf16>, vector<16x96xf32> -> vector<16x96xf32>
    %229 = vector.extract_strided_slice %224 {offsets = [0, 0], sizes = [1, 96], strides = [1, 1]} : vector<8x96xf32> to vector<1x96xf32>
    %230 = vector.broadcast %229 : vector<1x96xf32> to vector<16x96xf32>
    %231 = arith.addf %228, %230 : vector<16x96xf32>
    %232 = vector.extract_strided_slice %231 {offsets = [0, 0], sizes = [16, 8], strides = [1, 1]} : vector<16x96xf32> to vector<16x8xf32>
    %cst_76 = arith.constant 0.353553385 : f32
    %233 = vector.broadcast %cst_76 : f32 to vector<16x8xf32>
    %234 = arith.mulf %232, %233 : vector<16x8xf32>
    %235 = arith.truncf %234 : vector<16x8xf32> to vector<16x8xbf16>
    %236 = vector.extract_strided_slice %231 {offsets = [0, 32], sizes = [16, 8], strides = [1, 1]} : vector<16x96xf32> to vector<16x8xf32>
    %237 = arith.truncf %236 : vector<16x8xf32> to vector<16x8xbf16>
    %238 = vector.extract_strided_slice %231 {offsets = [0, 64], sizes = [16, 8], strides = [1, 1]} : vector<16x96xf32> to vector<16x8xf32>
    %239 = arith.truncf %238 : vector<16x8xf32> to vector<16x8xbf16>
    %cst_77 = arith.constant dense<0.000000e+00> : vector<16x16xf32>
    %240 = tpu.matmul %235, %237, %cst_77 {dimension_numbers = #tpu.dot_dimension_numbers<[1], [1], [0], [0], [0, 0, 1, 0], [], []>} : vector<16x8xbf16>, vector<16x8xbf16>, vector<16x16xf32> -> vector<16x16xf32>
    %241 = arith.addf %240, %40 : vector<16x16xf32>
    %cst_78 = arith.constant dense<0xFF800000> : vector<16xf32>
    %242 = vector.multi_reduction <maximumf>, %241, %cst_78 [1] : vector<16x16xf32> to vector<16xf32>
    %243 = vector.shape_cast %242 : vector<16xf32> to vector<16x1xf32>
    %244 = vector.broadcast %243 : vector<16x1xf32> to vector<16x16xf32>
    %245 = arith.subf %241, %244 : vector<16x16xf32>
    %246 = math.exp %245 : vector<16x16xf32>
    %cst_79 = arith.constant dense<0.000000e+00> : vector<16xf32>
    %247 = vector.multi_reduction <add>, %246, %cst_79 [1] : vector<16x16xf32> to vector<16xf32>
    %248 = vector.shape_cast %247 : vector<16xf32> to vector<16x1xf32>
    %249 = tpu.reciprocal %248 {approx = true} : vector<16x1xf32> -> vector<16x1xf32>
    %250 = vector.broadcast %249 : vector<16x1xf32> to vector<16x16xf32>
    %251 = arith.mulf %246, %250 : vector<16x16xf32>
    %252 = arith.truncf %251 : vector<16x16xf32> to vector<16x16xbf16>
    %cst_80 = arith.constant dense<0.000000e+00> : vector<16x8xf32>
    %253 = tpu.matmul %252, %239, %cst_80 {dimension_numbers = #tpu.dot_dimension_numbers<[1], [0], [0], [1], [0, 0, 1, 1], [], []>} : vector<16x16xbf16>, vector<16x8xbf16>, vector<16x8xf32> -> vector<16x8xf32>
    %254 = vector.extract_strided_slice %231 {offsets = [0, 8], sizes = [16, 8], strides = [1, 1]} : vector<16x96xf32> to vector<16x8xf32>
    %cst_81 = arith.constant 0.353553385 : f32
    %255 = vector.broadcast %cst_81 : f32 to vector<16x8xf32>
    %256 = arith.mulf %254, %255 : vector<16x8xf32>
    %257 = arith.truncf %256 : vector<16x8xf32> to vector<16x8xbf16>
    %258 = vector.extract_strided_slice %231 {offsets = [0, 40], sizes = [16, 8], strides = [1, 1]} : vector<16x96xf32> to vector<16x8xf32>
    %259 = arith.truncf %258 : vector<16x8xf32> to vector<16x8xbf16>
    %260 = vector.extract_strided_slice %231 {offsets = [0, 72], sizes = [16, 8], strides = [1, 1]} : vector<16x96xf32> to vector<16x8xf32>
    %261 = arith.truncf %260 : vector<16x8xf32> to vector<16x8xbf16>
    %cst_82 = arith.constant dense<0.000000e+00> : vector<16x16xf32>
    %262 = tpu.matmul %257, %259, %cst_82 {dimension_numbers = #tpu.dot_dimension_numbers<[1], [1], [0], [0], [0, 0, 1, 0], [], []>} : vector<16x8xbf16>, vector<16x8xbf16>, vector<16x16xf32> -> vector<16x16xf32>
    %263 = arith.addf %262, %40 : vector<16x16xf32>
    %cst_83 = arith.constant dense<0xFF800000> : vector<16xf32>
    %264 = vector.multi_reduction <maximumf>, %263, %cst_83 [1] : vector<16x16xf32> to vector<16xf32>
    %265 = vector.shape_cast %264 : vector<16xf32> to vector<16x1xf32>
    %266 = vector.broadcast %265 : vector<16x1xf32> to vector<16x16xf32>
    %267 = arith.subf %263, %266 : vector<16x16xf32>
    %268 = math.exp %267 : vector<16x16xf32>
    %cst_84 = arith.constant dense<0.000000e+00> : vector<16xf32>
    %269 = vector.multi_reduction <add>, %268, %cst_84 [1] : vector<16x16xf32> to vector<16xf32>
    %270 = vector.shape_cast %269 : vector<16xf32> to vector<16x1xf32>
    %271 = tpu.reciprocal %270 {approx = true} : vector<16x1xf32> -> vector<16x1xf32>
    %272 = vector.broadcast %271 : vector<16x1xf32> to vector<16x16xf32>
    %273 = arith.mulf %268, %272 : vector<16x16xf32>
    %274 = arith.truncf %273 : vector<16x16xf32> to vector<16x16xbf16>
    %cst_85 = arith.constant dense<0.000000e+00> : vector<16x8xf32>
    %275 = tpu.matmul %274, %261, %cst_85 {dimension_numbers = #tpu.dot_dimension_numbers<[1], [0], [0], [1], [0, 0, 1, 1], [], []>} : vector<16x16xbf16>, vector<16x8xbf16>, vector<16x8xf32> -> vector<16x8xf32>
    %276 = vector.extract_strided_slice %231 {offsets = [0, 16], sizes = [16, 8], strides = [1, 1]} : vector<16x96xf32> to vector<16x8xf32>
    %cst_86 = arith.constant 0.353553385 : f32
    %277 = vector.broadcast %cst_86 : f32 to vector<16x8xf32>
    %278 = arith.mulf %276, %277 : vector<16x8xf32>
    %279 = arith.truncf %278 : vector<16x8xf32> to vector<16x8xbf16>
    %280 = vector.extract_strided_slice %231 {offsets = [0, 48], sizes = [16, 8], strides = [1, 1]} : vector<16x96xf32> to vector<16x8xf32>
    %281 = arith.truncf %280 : vector<16x8xf32> to vector<16x8xbf16>
    %282 = vector.extract_strided_slice %231 {offsets = [0, 80], sizes = [16, 8], strides = [1, 1]} : vector<16x96xf32> to vector<16x8xf32>
    %283 = arith.truncf %282 : vector<16x8xf32> to vector<16x8xbf16>
    %cst_87 = arith.constant dense<0.000000e+00> : vector<16x16xf32>
    %284 = tpu.matmul %279, %281, %cst_87 {dimension_numbers = #tpu.dot_dimension_numbers<[1], [1], [0], [0], [0, 0, 1, 0], [], []>} : vector<16x8xbf16>, vector<16x8xbf16>, vector<16x16xf32> -> vector<16x16xf32>
    %285 = arith.addf %284, %40 : vector<16x16xf32>
    %cst_88 = arith.constant dense<0xFF800000> : vector<16xf32>
    %286 = vector.multi_reduction <maximumf>, %285, %cst_88 [1] : vector<16x16xf32> to vector<16xf32>
    %287 = vector.shape_cast %286 : vector<16xf32> to vector<16x1xf32>
    %288 = vector.broadcast %287 : vector<16x1xf32> to vector<16x16xf32>
    %289 = arith.subf %285, %288 : vector<16x16xf32>
    %290 = math.exp %289 : vector<16x16xf32>
    %cst_89 = arith.constant dense<0.000000e+00> : vector<16xf32>
    %291 = vector.multi_reduction <add>, %290, %cst_89 [1] : vector<16x16xf32> to vector<16xf32>
    %292 = vector.shape_cast %291 : vector<16xf32> to vector<16x1xf32>
    %293 = tpu.reciprocal %292 {approx = true} : vector<16x1xf32> -> vector<16x1xf32>
    %294 = vector.broadcast %293 : vector<16x1xf32> to vector<16x16xf32>
    %295 = arith.mulf %290, %294 : vector<16x16xf32>
    %296 = arith.truncf %295 : vector<16x16xf32> to vector<16x16xbf16>
    %cst_90 = arith.constant dense<0.000000e+00> : vector<16x8xf32>
    %297 = tpu.matmul %296, %283, %cst_90 {dimension_numbers = #tpu.dot_dimension_numbers<[1], [0], [0], [1], [0, 0, 1, 1], [], []>} : vector<16x16xbf16>, vector<16x8xbf16>, vector<16x8xf32> -> vector<16x8xf32>
    %298 = vector.extract_strided_slice %231 {offsets = [0, 24], sizes = [16, 8], strides = [1, 1]} : vector<16x96xf32> to vector<16x8xf32>
    %cst_91 = arith.constant 0.353553385 : f32
    %299 = vector.broadcast %cst_91 : f32 to vector<16x8xf32>
    %300 = arith.mulf %298, %299 : vector<16x8xf32>
    %301 = arith.truncf %300 : vector<16x8xf32> to vector<16x8xbf16>
    %302 = vector.extract_strided_slice %231 {offsets = [0, 56], sizes = [16, 8], strides = [1, 1]} : vector<16x96xf32> to vector<16x8xf32>
    %303 = arith.truncf %302 : vector<16x8xf32> to vector<16x8xbf16>
    %304 = vector.extract_strided_slice %231 {offsets = [0, 88], sizes = [16, 8], strides = [1, 1]} : vector<16x96xf32> to vector<16x8xf32>
    %305 = arith.truncf %304 : vector<16x8xf32> to vector<16x8xbf16>
    %cst_92 = arith.constant dense<0.000000e+00> : vector<16x16xf32>
    %306 = tpu.matmul %301, %303, %cst_92 {dimension_numbers = #tpu.dot_dimension_numbers<[1], [1], [0], [0], [0, 0, 1, 0], [], []>} : vector<16x8xbf16>, vector<16x8xbf16>, vector<16x16xf32> -> vector<16x16xf32>
    %307 = arith.addf %306, %40 : vector<16x16xf32>
    %cst_93 = arith.constant dense<0xFF800000> : vector<16xf32>
    %308 = vector.multi_reduction <maximumf>, %307, %cst_93 [1] : vector<16x16xf32> to vector<16xf32>
    %309 = vector.shape_cast %308 : vector<16xf32> to vector<16x1xf32>
    %310 = vector.broadcast %309 : vector<16x1xf32> to vector<16x16xf32>
    %311 = arith.subf %307, %310 : vector<16x16xf32>
    %312 = math.exp %311 : vector<16x16xf32>
    %cst_94 = arith.constant dense<0.000000e+00> : vector<16xf32>
    %313 = vector.multi_reduction <add>, %312, %cst_94 [1] : vector<16x16xf32> to vector<16xf32>
    %314 = vector.shape_cast %313 : vector<16xf32> to vector<16x1xf32>
    %315 = tpu.reciprocal %314 {approx = true} : vector<16x1xf32> -> vector<16x1xf32>
    %316 = vector.broadcast %315 : vector<16x1xf32> to vector<16x16xf32>
    %317 = arith.mulf %312, %316 : vector<16x16xf32>
    %318 = arith.truncf %317 : vector<16x16xf32> to vector<16x16xbf16>
    %cst_95 = arith.constant dense<0.000000e+00> : vector<16x8xf32>
    %319 = tpu.matmul %318, %305, %cst_95 {dimension_numbers = #tpu.dot_dimension_numbers<[1], [0], [0], [1], [0, 0, 1, 1], [], []>} : vector<16x16xbf16>, vector<16x8xbf16>, vector<16x8xf32> -> vector<16x8xf32>
    %320 = tpu.concatenate %253, %275, %297, %319 in 1 : vector<16x8xf32>, vector<16x8xf32>, vector<16x8xf32>, vector<16x8xf32> -> vector<16x32xf32>
    %321 = arith.truncf %320 : vector<16x32xf32> to vector<16x32xbf16>
    %c1_96 = arith.constant 1 : index
    %c0_97 = arith.constant 0 : index
    %c0_98 = arith.constant 0 : index
    %322 = vector.load %arg5[%c1_96, %c0_97, %c0_98] : memref<2x32x32xbf16, #tpu.memory_space<vmem>>, vector<1x32x32xbf16>
    %323 = vector.shape_cast %322 : vector<1x32x32xbf16> to vector<32x32xbf16>
    %cst_99 = arith.constant dense<0.000000e+00> : vector<16x32xf32>
    %324 = tpu.matmul %321, %323, %cst_99 {dimension_numbers = #tpu.dot_dimension_numbers<[1], [0], [0], [1], [0, 0, 1, 1], [], []>} : vector<16x32xbf16>, vector<32x32xbf16>, vector<16x32xf32> -> vector<16x32xf32>
    %325 = vector.extract_strided_slice %224 {offsets = [1, 0], sizes = [1, 32], strides = [1, 1]} : vector<8x96xf32> to vector<1x32xf32>
    %326 = vector.broadcast %325 : vector<1x32xf32> to vector<16x32xf32>
    %327 = arith.addf %324, %326 : vector<16x32xf32>
    %328 = arith.addf %327, %222 : vector<16x32xf32>
    %329 = vector.extract_strided_slice %224 {offsets = [2, 0], sizes = [1, 32], strides = [1, 1]} : vector<8x96xf32> to vector<1x32xf32>
    %330 = vector.extract_strided_slice %224 {offsets = [3, 0], sizes = [1, 32], strides = [1, 1]} : vector<8x96xf32> to vector<1x32xf32>
    %cst_100 = arith.constant dense<0.000000e+00> : vector<16xf32>
    %331 = vector.multi_reduction <add>, %328, %cst_100 [1] : vector<16x32xf32> to vector<16xf32>
    %332 = vector.shape_cast %331 : vector<16xf32> to vector<16x1xf32>
    %cst_101 = arith.constant 3.200000e+01 : f32
    %333 = vector.broadcast %cst_101 : f32 to vector<16x1xf32>
    %334 = arith.divf %332, %333 : vector<16x1xf32>
    %335 = vector.broadcast %334 : vector<16x1xf32> to vector<16x32xf32>
    %336 = arith.subf %328, %335 : vector<16x32xf32>
    %337 = arith.mulf %336, %336 : vector<16x32xf32>
    %cst_102 = arith.constant dense<0.000000e+00> : vector<16xf32>
    %338 = vector.multi_reduction <add>, %337, %cst_102 [1] : vector<16x32xf32> to vector<16xf32>
    %339 = vector.shape_cast %338 : vector<16xf32> to vector<16x1xf32>
    %cst_103 = arith.constant 3.200000e+01 : f32
    %340 = vector.broadcast %cst_103 : f32 to vector<16x1xf32>
    %341 = arith.divf %339, %340 : vector<16x1xf32>
    %342 = vector.broadcast %334 : vector<16x1xf32> to vector<16x32xf32>
    %343 = arith.subf %328, %342 : vector<16x32xf32>
    %cst_104 = arith.constant 9.99999974E-6 : f32
    %344 = vector.broadcast %cst_104 : f32 to vector<16x1xf32>
    %345 = arith.addf %341, %344 : vector<16x1xf32>
    %346 = math.rsqrt %345 : vector<16x1xf32>
    %347 = vector.broadcast %346 : vector<16x1xf32> to vector<16x32xf32>
    %348 = arith.mulf %343, %347 : vector<16x32xf32>
    %349 = vector.broadcast %329 : vector<1x32xf32> to vector<16x32xf32>
    %350 = arith.mulf %348, %349 : vector<16x32xf32>
    %351 = vector.broadcast %330 : vector<1x32xf32> to vector<16x32xf32>
    %352 = arith.addf %350, %351 : vector<16x32xf32>
    %353 = arith.truncf %352 : vector<16x32xf32> to vector<16x32xbf16>
    %c1_105 = arith.constant 1 : index
    %c0_106 = arith.constant 0 : index
    %c0_107 = arith.constant 0 : index
    %354 = vector.load %arg6[%c1_105, %c0_106, %c0_107] : memref<2x32x64xbf16, #tpu.memory_space<vmem>>, vector<1x32x64xbf16>
    %355 = vector.shape_cast %354 : vector<1x32x64xbf16> to vector<32x64xbf16>
    %cst_108 = arith.constant dense<0.000000e+00> : vector<16x64xf32>
    %356 = tpu.matmul %353, %355, %cst_108 {dimension_numbers = #tpu.dot_dimension_numbers<[1], [0], [0], [1], [0, 0, 1, 1], [], []>} : vector<16x32xbf16>, vector<32x64xbf16>, vector<16x64xf32> -> vector<16x64xf32>
    %357 = vector.extract_strided_slice %224 {offsets = [4, 0], sizes = [1, 64], strides = [1, 1]} : vector<8x96xf32> to vector<1x64xf32>
    %358 = vector.broadcast %357 : vector<1x64xf32> to vector<16x64xf32>
    %359 = arith.addf %356, %358 : vector<16x64xf32>
    %360 = arith.mulf %359, %359 : vector<16x64xf32>
    %361 = arith.mulf %359, %360 : vector<16x64xf32>
    %cst_109 = arith.constant 4.471500e-02 : f32
    %362 = vector.broadcast %cst_109 : f32 to vector<16x64xf32>
    %363 = arith.mulf %362, %361 : vector<16x64xf32>
    %364 = arith.addf %359, %363 : vector<16x64xf32>
    %cst_110 = arith.constant 0.797884583 : f32
    %365 = vector.broadcast %cst_110 : f32 to vector<16x64xf32>
    %366 = arith.mulf %365, %364 : vector<16x64xf32>
    %367 = math.tanh %366 : vector<16x64xf32>
    %cst_111 = arith.constant 1.000000e+00 : f32
    %368 = vector.broadcast %cst_111 : f32 to vector<16x64xf32>
    %369 = arith.addf %368, %367 : vector<16x64xf32>
    %cst_112 = arith.constant 5.000000e-01 : f32
    %370 = vector.broadcast %cst_112 : f32 to vector<16x64xf32>
    %371 = arith.mulf %370, %369 : vector<16x64xf32>
    %372 = arith.mulf %359, %371 : vector<16x64xf32>
    %373 = arith.truncf %372 : vector<16x64xf32> to vector<16x64xbf16>
    %c1_113 = arith.constant 1 : index
    %c0_114 = arith.constant 0 : index
    %c0_115 = arith.constant 0 : index
    %374 = vector.load %arg7[%c1_113, %c0_114, %c0_115] : memref<2x64x32xbf16, #tpu.memory_space<vmem>>, vector<1x64x32xbf16>
    %375 = vector.shape_cast %374 : vector<1x64x32xbf16> to vector<64x32xbf16>
    %cst_116 = arith.constant dense<0.000000e+00> : vector<16x32xf32>
    %376 = tpu.matmul %373, %375, %cst_116 {dimension_numbers = #tpu.dot_dimension_numbers<[1], [0], [0], [1], [0, 0, 1, 1], [], []>} : vector<16x64xbf16>, vector<64x32xbf16>, vector<16x32xf32> -> vector<16x32xf32>
    %377 = vector.extract_strided_slice %224 {offsets = [5, 0], sizes = [1, 32], strides = [1, 1]} : vector<8x96xf32> to vector<1x32xf32>
    %378 = vector.broadcast %377 : vector<1x32xf32> to vector<16x32xf32>
    %379 = arith.addf %376, %378 : vector<16x32xf32>
    %380 = arith.addf %379, %352 : vector<16x32xf32>
    %381 = vector.extract_strided_slice %224 {offsets = [6, 0], sizes = [1, 32], strides = [1, 1]} : vector<8x96xf32> to vector<1x32xf32>
    %382 = vector.extract_strided_slice %224 {offsets = [7, 0], sizes = [1, 32], strides = [1, 1]} : vector<8x96xf32> to vector<1x32xf32>
    %cst_117 = arith.constant dense<0.000000e+00> : vector<16xf32>
    %383 = vector.multi_reduction <add>, %380, %cst_117 [1] : vector<16x32xf32> to vector<16xf32>
    %384 = vector.shape_cast %383 : vector<16xf32> to vector<16x1xf32>
    %cst_118 = arith.constant 3.200000e+01 : f32
    %385 = vector.broadcast %cst_118 : f32 to vector<16x1xf32>
    %386 = arith.divf %384, %385 : vector<16x1xf32>
    %387 = vector.broadcast %386 : vector<16x1xf32> to vector<16x32xf32>
    %388 = arith.subf %380, %387 : vector<16x32xf32>
    %389 = arith.mulf %388, %388 : vector<16x32xf32>
    %cst_119 = arith.constant dense<0.000000e+00> : vector<16xf32>
    %390 = vector.multi_reduction <add>, %389, %cst_119 [1] : vector<16x32xf32> to vector<16xf32>
    %391 = vector.shape_cast %390 : vector<16xf32> to vector<16x1xf32>
    %cst_120 = arith.constant 3.200000e+01 : f32
    %392 = vector.broadcast %cst_120 : f32 to vector<16x1xf32>
    %393 = arith.divf %391, %392 : vector<16x1xf32>
    %394 = vector.broadcast %386 : vector<16x1xf32> to vector<16x32xf32>
    %395 = arith.subf %380, %394 : vector<16x32xf32>
    %cst_121 = arith.constant 9.99999974E-6 : f32
    %396 = vector.broadcast %cst_121 : f32 to vector<16x1xf32>
    %397 = arith.addf %393, %396 : vector<16x1xf32>
    %398 = math.rsqrt %397 : vector<16x1xf32>
    %399 = vector.broadcast %398 : vector<16x1xf32> to vector<16x32xf32>
    %400 = arith.mulf %395, %399 : vector<16x32xf32>
    %401 = vector.broadcast %381 : vector<1x32xf32> to vector<16x32xf32>
    %402 = arith.mulf %400, %401 : vector<16x32xf32>
    %403 = vector.broadcast %382 : vector<1x32xf32> to vector<16x32xf32>
    %404 = arith.addf %402, %403 : vector<16x32xf32>
    %405 = arith.truncf %404 : vector<16x32xf32> to vector<16x32xbf16>
    %c0_122 = arith.constant 0 : index
    %c0_123 = arith.constant 0 : index
    %406 = vector.load %arg9[%c0_122, %c0_123] : memref<32x512xbf16, #tpu.memory_space<vmem>>, vector<32x512xbf16>
    %cst_124 = arith.constant dense<0.000000e+00> : vector<16x512xf32>
    %407 = tpu.matmul %405, %406, %cst_124 {dimension_numbers = #tpu.dot_dimension_numbers<[1], [0], [0], [1], [0, 0, 1, 1], [], []>} : vector<16x32xbf16>, vector<32x512xbf16>, vector<16x512xf32> -> vector<16x512xf32>
    %c0_125 = arith.constant 0 : index
    %c0_126 = arith.constant 0 : index
    %408 = vector.load %arg11[%c0_125, %c0_126] : memref<2x512xf32, #tpu.memory_space<vmem>>, vector<1x512xf32>
    %409 = vector.broadcast %408 : vector<1x512xf32> to vector<16x512xf32>
    %410 = arith.addf %407, %409 : vector<16x512xf32>
    %cst_127 = arith.constant 0.000000e+00 : f32
    %411 = vector.broadcast %cst_127 : f32 to vector<16x512xf32>
    %412 = arith.maximumf %410, %411 : vector<16x512xf32>
    %413 = arith.truncf %412 : vector<16x512xf32> to vector<16x512xbf16>
    %c0_128 = arith.constant 0 : index
    %c0_129 = arith.constant 0 : index
    %414 = vector.load %arg10[%c0_128, %c0_129] : memref<512x256xbf16, #tpu.memory_space<vmem>>, vector<512x256xbf16>
    %cst_130 = arith.constant dense<0.000000e+00> : vector<16x256xf32>
    %415 = tpu.matmul %413, %414, %cst_130 {dimension_numbers = #tpu.dot_dimension_numbers<[1], [0], [0], [1], [0, 0, 1, 1], [], []>} : vector<16x512xbf16>, vector<512x256xbf16>, vector<16x256xf32> -> vector<16x256xf32>
    %c1_131 = arith.constant 1 : index
    %c0_132 = arith.constant 0 : index
    %416 = vector.load %arg11[%c1_131, %c0_132] : memref<2x512xf32, #tpu.memory_space<vmem>>, vector<1x256xf32>
    %417 = vector.broadcast %416 : vector<1x256xf32> to vector<16x256xf32>
    %418 = arith.addf %415, %417 : vector<16x256xf32>
    %c0_133 = arith.constant 0 : index
    %c0_134 = arith.constant 0 : index
    %419 = vector.load %arg12[%c0_133, %c0_134] : memref<16x256xf32, #tpu.memory_space<vmem>>, vector<16x256xf32>
    tpu.vector_store %arg12[%c0_133, %c0_134], %418 {strides = array<i32>} : memref<16x256xf32, #tpu.memory_space<vmem>>, vector<16x256xf32>,
    return
  }
}

</mosaic_0001>

<llo_original>
// kernel: eq.8
$region0: #{eq.8}
  %s0 = inlined_call_operand.vmem [shape: s32[2,8], index: 0, kind: input, shape index: {}]
  %s1 = inlined_call_operand.vmem [shape: s32[16], index: 1, kind: output, shape index: {}]
  $region1: #{eq.8} parent=0
    #allocation0 [shape = 'u8[4096]{0}', space=vmem, size = 0x1000, scoped, tag = 'scoped mem for output reshape']
    #allocation1 [shape = 'u8[4096]{0}', space=vmem, size = 0x1000, scoped, tag = 'scoped mem for input reshape']
    %s3 = sshll.u32 1, 2
    %s4 = ssub.s32 %s3, 1
    %v5 = vld [vmem:[%s0] sm:%s4]
    %6 = vst [vmem:[#allocation1] sm:%s4] %v5
    %v7 = vld [vmem:[#allocation1] sm:$0x1]
    %vm8 = vcmask 64512
    %9 = vst.msk [vmem:[#allocation0] sm:$0x1] %vm8, %v7
    %s10 = scalar_lea.vmem [#allocation1], 1
    %v11 = vld [vmem:[%s10] sm:$0x1]
    %12 = vrot.lane.b32.xlu0 %v11, 8
    %v13 = vpop.permute.xlu0 %12
    %vm14 = vcmask 130112
    %15 = vst.msk [vmem:[#allocation0] sm:$0x1] %vm14, %v13
    %s17 = sshll.u32 1, 1
    %s18 = ssub.s32 %s17, 1
    %v20 = vld [vmem:[#allocation0] sm:%s18]
    %s21 = sshll.u32 1, 1
    %s22 = ssub.s32 %s21, 1
    %23 = vst [vmem:[%s1] sm:%s22] %v20

// kernel: _lambda_.1
$region0: #{_lambda_.1}
  #allocation0 [shape = 'u32[]', space=smem, size = 0x4, offset = 0x4, fixed_abs, tag = 'smem constant byte address 0x4 - core index']
  #allocation1 [shape = 'u32[144,128]{1,0:T(1,128)}', space=vmem, size = 0x12000, scoped, tag = 'internal scratch']
  %s0 = inlined_call_operand.vmem [shape: s32[16,2], index: 0, kind: input, shape index: {}]
  %s1 = inlined_call_operand.vmem [shape: f32[16,16], index: 1, kind: input, shape index: {}]
  %s2 = inlined_call_operand.hbm [shape: bf16[256,32], index: 2, kind: input, shape index: {}]
  %s3 = inlined_call_operand.hbm [shape: f32[3,32], index: 3, kind: input, shape index: {}]
  %s4 = inlined_call_operand.hbm [shape: bf16[2,32,96], index: 4, kind: input, shape index: {}]
  %s5 = inlined_call_operand.hbm [shape: bf16[2,32,32], index: 5, kind: input, shape index: {}]
  %s6 = inlined_call_operand.vmem [shape: bf16[2,32,64], index: 6, kind: input, shape index: {}]
  %s7 = inlined_call_operand.hbm [shape: bf16[2,64,32], index: 7, kind: input, shape index: {}]
  %s8 = inlined_call_operand.hbm [shape: f32[2,8,96], index: 8, kind: input, shape index: {}]
  %s9 = inlined_call_operand.vmem [shape: bf16[32,512], index: 9, kind: input, shape index: {}]
  %s10 = inlined_call_operand.hbm [shape: bf16[512,256], index: 10, kind: input, shape index: {}]
  %s11 = inlined_call_operand.vmem [shape: f32[2,512], index: 11, kind: input, shape index: {}]
  %s12 = inlined_call_operand.vmem [shape: f32[16,256], index: 12, kind: output, shape index: {}]
  %s13 = sld [smem:[#allocation0]]
  $region86: #{_lambda_.1} parent=0
    _
  %s15 = ssub.s32 1, %s13
  %s16 = scalar_select 0, %s15, %s13
  $region1: #{_lambda_.1} parent=0
    #allocation2 [shape = 'u8[65536]{0}', space=vmem, size = 0x10000, scoped, tag = 'input window, operand 2, single buffered']
    #allocation3 [shape = 's32[1]{0}', space=sflag, size = 0x4, scoped, tag = 'scoped memory for _lambda_.1']
    #allocation4 [shape = 'u8[2048]{0}', space=vmem, size = 0x800, scoped, tag = 'input window, operand 3, single buffered']
    #allocation5 [shape = 's32[1]{0}', space=sflag, size = 0x4, scoped, tag = 'scoped memory for _lambda_.1']
    #allocation6 [shape = 'u8[16384]{0}', space=vmem, size = 0x4000, scoped, tag = 'input window, operand 4, single buffered']
    #allocation7 [shape = 'u8[16384]{0}', space=vmem, size = 0x4000, scoped, tag = 'input window, operand 5, single buffered']
    #allocation8 [shape = 's32[1]{0}', space=sflag, size = 0x4, scoped, tag = 'scoped memory for _lambda_.1']
    #allocation9 [shape = 'u8[32768]{0}', space=vmem, size = 0x8000, scoped, tag = 'input window, operand 7, single buffered']
    #allocation10 [shape = 'u8[8192]{0}', space=vmem, size = 0x2000, scoped, tag = 'input window, operand 8, single buffered']
    #allocation11 [shape = 's32[1]{0}', space=sflag, size = 0x4, scoped, tag = 'scoped memory for _lambda_.1']
    #allocation12 [shape = 'u8[262144]{0}', space=vmem, size = 0x40000, scoped, tag = 'input window, operand 10, single buffered']
    %17 = vsyncpa [#allocation3], 0
    %18 = vsyncpa [#allocation5], 0
    %19 = vsyncpa [#allocation8], 0
    %20 = vsyncpa [#allocation11], 0
    // Predicated region
    $region2: #{_lambda_.1} parent=1 // pred_check
      _
    $region3: #{_lambda_.1} parent=1 // pred_check_branch
      %22 = sbr.rel (0) target = $region5
    $region4: #{_lambda_.1} parent=1 // pred_region
      _
    $region5: #{_lambda_.1} parent=1 // pred_fallthru
      _
    // Predicated region
    $region6: #{_lambda_.1} parent=1 // pred_check
      _
    $region7: #{_lambda_.1} parent=1 // pred_check_branch
      %24 = sbr.rel (0) target = $region9
    $region8: #{_lambda_.1} parent=1 // pred_region
      _
    $region9: #{_lambda_.1} parent=1 // pred_fallthru
      _
    // Predicated region
    $region10: #{_lambda_.1} parent=1 // pred_check
      _
    $region11: #{_lambda_.1} parent=1 // pred_check_branch
      %26 = sbr.rel (0) target = $region13
    $region12: #{_lambda_.1} parent=1 // pred_region
      %s28 = ssub.s32 2048, 2048
      %29 = vsyncadd [#allocation3], %s28
      %s30 = sshll.u32 [#allocation2], 4
      %s31 = int_to_ptr.vmem [resolvable:$true] %s30
      %36 = dma.hbm_to_vmem [thread:$0]  %s2, 2048, %s31, [#allocation3], 64, 64, 4
    $region13: #{_lambda_.1} parent=1 // pred_fallthru
      _
    // Predicated region
    $region14: #{_lambda_.1} parent=1 // pred_check
      _
    $region15: #{_lambda_.1} parent=1 // pred_check_branch
      %38 = sbr.rel (0) target = $region17
    $region16: #{_lambda_.1} parent=1 // pred_region
      %s40 = ssub.s32 64, 64
      %41 = vsyncadd [#allocation5], %s40
      %s43 = sshll.u32 [#allocation4], 4
      %s44 = int_to_ptr.vmem [resolvable:$true] %s43
      %46 = dma.hbm_to_vmem [thread:$0]  %s3, 64, %s44, [#allocation5]
    $region17: #{_lambda_.1} parent=1 // pred_fallthru
      _
    // Predicated region
    $region18: #{_lambda_.1} parent=1 // pred_check
      _
    $region19: #{_lambda_.1} parent=1 // pred_check_branch
      %48 = sbr.rel (0) target = $region21
    $region20: #{_lambda_.1} parent=1 // pred_region
      %s50 = ssub.s32 512, 512
      %51 = vsyncadd [#allocation5], %s50
      %s52 = sshll.u32 [#allocation6], 4
      %s53 = int_to_ptr.vmem [resolvable:$true] %s52
      %58 = dma.hbm_to_vmem [thread:$0]  %s4, 512, %s53, [#allocation5], 64, 64, 4
    $region21: #{_lambda_.1} parent=1 // pred_fallthru
      _
    // Predicated region
    $region22: #{_lambda_.1} parent=1 // pred_check
      _
    $region23: #{_lambda_.1} parent=1 // pred_check_branch
      %60 = sbr.rel (0) target = $region25
    $region24: #{_lambda_.1} parent=1 // pred_region
      %s62 = ssub.s32 512, 512
      %63 = vsyncadd [#allocation8], %s62
      %s64 = sshll.u32 [#allocation7], 4
      %s65 = int_to_ptr.vmem [resolvable:$true] %s64
      %70 = dma.hbm_to_vmem [thread:$0]  %s5, 512, %s65, [#allocation8], 64, 64, 4
    $region25: #{_lambda_.1} parent=1 // pred_fallthru
      _
    // Predicated region
    $region26: #{_lambda_.1} parent=1 // pred_check
      _
    $region27: #{_lambda_.1} parent=1 // pred_check_branch
      %72 = sbr.rel (0) target = $region29
    $region28: #{_lambda_.1} parent=1 // pred_region
      _
    $region29: #{_lambda_.1} parent=1 // pred_fallthru
      _
    // Predicated region
    $region30: #{_lambda_.1} parent=1 // pred_check
      _
    $region31: #{_lambda_.1} parent=1 // pred_check_branch
      %74 = sbr.rel (0) target = $region33
    $region32: #{_lambda_.1} parent=1 // pred_region
      %s76 = ssub.s32 1024, 1024
      %77 = vsyncadd [#allocation8], %s76
      %s78 = sshll.u32 [#allocation9], 4
      %s79 = int_to_ptr.vmem [resolvable:$true] %s78
      %84 = dma.hbm_to_vmem [thread:$0]  %s7, 1024, %s79, [#allocation8], 64, 64, 4
    $region33: #{_lambda_.1} parent=1 // pred_fallthru
      _
    // Predicated region
    $region34: #{_lambda_.1} parent=1 // pred_check
      _
    $region35: #{_lambda_.1} parent=1 // pred_check_branch
      %86 = sbr.rel (0) target = $region37
    $region36: #{_lambda_.1} parent=1 // pred_region
      %s88 = ssub.s32 256, 256
      %89 = vsyncadd [#allocation11], %s88
      %s90 = sshll.u32 [#allocation10], 4
      %s91 = int_to_ptr.vmem [resolvable:$true] %s90
      %96 = dma.hbm_to_vmem [thread:$0]  %s8, 256, %s91, [#allocation11], 128, 128, 8
    $region37: #{_lambda_.1} parent=1 // pred_fallthru
      _
    // Predicated region
    $region38: #{_lambda_.1} parent=1 // pred_check
      _
    $region39: #{_lambda_.1} parent=1 // pred_check_branch
      %98 = sbr.rel (0) target = $region41
    $region40: #{_lambda_.1} parent=1 // pred_region
      _
    $region41: #{_lambda_.1} parent=1 // pred_fallthru
      _
    // Predicated region
    $region42: #{_lambda_.1} parent=1 // pred_check
      _
    $region43: #{_lambda_.1} parent=1 // pred_check_branch
      %100 = sbr.rel (0) target = $region45
    $region44: #{_lambda_.1} parent=1 // pred_region
      %s102 = ssub.s32 8192, 8192
      %103 = vsyncadd [#allocation11], %s102
      %s104 = sshll.u32 [#allocation12], 4
      %s105 = int_to_ptr.vmem [resolvable:$true] %s104
      %110 = dma.hbm_to_vmem [thread:$0]  %s10, 8192, %s105, [#allocation11], 128, 128, 8
    $region45: #{_lambda_.1} parent=1 // pred_fallthru
      _
    // Predicated region
    $region46: #{_lambda_.1} parent=1 // pred_check
      _
    $region47: #{_lambda_.1} parent=1 // pred_check_branch
      %112 = sbr.rel (0) target = $region49
    $region48: #{_lambda_.1} parent=1 // pred_region
      _
    $region49: #{_lambda_.1} parent=1 // pred_fallthru
      _
    // Predicated region
    $region50: #{_lambda_.1} parent=1 // pred_check
      _
    $region51: #{_lambda_.1} parent=1 // pred_check_branch
      %114 = sbr.rel (0) target = $region53
    $region52: #{_lambda_.1} parent=1 // pred_region
      %115 = dma.done [#allocation3], 2048
    $region53: #{_lambda_.1} parent=1 // pred_fallthru
      _
    // Predicated region
    $region54: #{_lambda_.1} parent=1 // pred_check
      _
    $region55: #{_lambda_.1} parent=1 // pred_check_branch
      %117 = sbr.rel (0) target = $region57
    $region56: #{_lambda_.1} parent=1 // pred_region
      %118 = dma.done [#allocation5], 64
    $region57: #{_lambda_.1} parent=1 // pred_fallthru
      _
    // Predicated region
    $region58: #{_lambda_.1} parent=1 // pred_check
      _
    $region59: #{_lambda_.1} parent=1 // pred_check_branch
      %120 = sbr.rel (0) target = $region61
    $region60: #{_lambda_.1} parent=1 // pred_region
      %121 = dma.done [#allocation5], 512
    $region61: #{_lambda_.1} parent=1 // pred_fallthru
      _
    // Predicated region
    $region62: #{_lambda_.1} parent=1 // pred_check
      _
    $region63: #{_lambda_.1} parent=1 // pred_check_branch
      %123 = sbr.rel (0) target = $region65
    $region64: #{_lambda_.1} parent=1 // pred_region
      %124 = dma.done [#allocation8], 512
    $region65: #{_lambda_.1} parent=1 // pred_fallthru
      _
    // Predicated region
    $region66: #{_lambda_.1} parent=1 // pred_check
      _
    $region67: #{_lambda_.1} parent=1 // pred_check_branch
      %126 = sbr.rel (0) target = $region69
    $region68: #{_lambda_.1} parent=1 // pred_region
      %127 = dma.done [#allocation8], 1024
    $region69: #{_lambda_.1} parent=1 // pred_fallthru
      _
    // Predicated region
    $region70: #{_lambda_.1} parent=1 // pred_check
      _
    $region71: #{_lambda_.1} parent=1 // pred_check_branch
      %129 = sbr.rel (0) target = $region73
    $region72: #{_lambda_.1} parent=1 // pred_region
      %130 = dma.done [#allocation11], 256
    $region73: #{_lambda_.1} parent=1 // pred_fallthru
      _
    // Predicated region
    $region74: #{_lambda_.1} parent=1 // pred_check
      _
    $region75: #{_lambda_.1} parent=1 // pred_check_branch
      %132 = sbr.rel (0) target = $region77
    $region76: #{_lambda_.1} parent=1 // pred_region
      %133 = dma.done [#allocation11], 8192
    $region77: #{_lambda_.1} parent=1 // pred_fallthru
      _
    %v135 = vld [vmem:[%s0] sm:$0xff]
    %v136 = vld [vmem:[%s0 + $0x8] sm:$0xff]
    %v137 = vlaneseq
    %v138 = vand.u32 %v137, 127
    %v139 = vadd.s32 %v138, 128
    %140 = vset.pattern.permute.xlu0 0
    %141 = vperm.xlu0 %140, %v135
    %v142 = vpop.permute.xlu0 %141
    %143 = vset.pattern.permute.xlu0 0
    %144 = vperm.xlu0 %143, %v136
    %v145 = vpop.permute.xlu0 %144
    %vm146 = vcmp.eq.s32.totalorder %v138, %v142
    %vm147 = vcmp.eq.s32.totalorder %v139, %v142
    %vm148 = vcmp.eq.s32.totalorder %v138, %v145
    %vm149 = vcmp.eq.s32.totalorder %v139, %v145
    %150 = vset.pattern.permute.xlu0 1
    %151 = vperm.xlu0 %150, %v135
    %v152 = vpop.permute.xlu0 %151
    %153 = vset.pattern.permute.xlu0 1
    %154 = vperm.xlu0 %153, %v136
    %v155 = vpop.permute.xlu0 %154
    %vm156 = vcmp.eq.s32.totalorder %v138, %v152
    %vm157 = vcmp.eq.s32.totalorder %v139, %v152
    %vm158 = vcmp.eq.s32.totalorder %v138, %v155
    %vm159 = vcmp.eq.s32.totalorder %v139, %v155
    %vm160 = vmor %vm146, %vm156
    %vm161 = vmor %vm147, %vm157
    %vm162 = vmor %vm148, %vm158
    %vm163 = vmor %vm149, %vm159
    %v164 = vsel %vm160, 1, 0
    %v165 = vsel %vm161, 1, 0
    %v166 = vsel %vm162, 1, 0
    %v167 = vsel %vm163, 1, 0
    %v168 = vcvt.s32.f32 %v164
    %v169 = vcvt.s32.f32 %v165
    %v170 = vcvt.s32.f32 %v166
    %v171 = vcvt.s32.f32 %v167
    %v172 = vpack.c.bf16 %v170, %v168
    %v173 = vpack.c.bf16 %v171, %v169
    %v174 = vld [vmem:[#allocation2] sm:$0xf]
    %v175 = vld [vmem:[#allocation2 + $0x4] sm:$0xf]
    %v176 = vld [vmem:[#allocation2 + $0x8] sm:$0xf]
    %v177 = vld [vmem:[#allocation2 + $0xc] sm:$0xf]
    %v178 = vld [vmem:[#allocation2 + $0x10] sm:$0xf]
    %v179 = vld [vmem:[#allocation2 + $0x14] sm:$0xf]
    %v180 = vld [vmem:[#allocation2 + $0x18] sm:$0xf]
    %v181 = vld [vmem:[#allocation2 + $0x1c] sm:$0xf]
    %v182 = vld [vmem:[#allocation2 + $0x20] sm:$0xf]
    %v183 = vld [vmem:[#allocation2 + $0x24] sm:$0xf]
    %v184 = vld [vmem:[#allocation2 + $0x28] sm:$0xf]
    %v185 = vld [vmem:[#allocation2 + $0x2c] sm:$0xf]
    %v186 = vld [vmem:[#allocation2 + $0x30] sm:$0xf]
    %v187 = vld [vmem:[#allocation2 + $0x34] sm:$0xf]
    %v188 = vld [vmem:[#allocation2 + $0x38] sm:$0xf]
    %v189 = vld [vmem:[#allocation2 + $0x3c] sm:$0xf]
    %v190 = vld [vmem:[#allocation2 + $0x40] sm:$0xf]
    %v191 = vld [vmem:[#allocation2 + $0x44] sm:$0xf]
    %v192 = vld [vmem:[#allocation2 + $0x48] sm:$0xf]
    %v193 = vld [vmem:[#allocation2 + $0x4c] sm:$0xf]
    %v194 = vld [vmem:[#allocation2 + $0x50] sm:$0xf]
    %v195 = vld [vmem:[#allocation2 + $0x54] sm:$0xf]
    %v196 = vld [vmem:[#allocation2 + $0x58] sm:$0xf]
    %v197 = vld [vmem:[#allocation2 + $0x5c] sm:$0xf]
    %v198 = vld [vmem:[#allocation2 + $0x60] sm:$0xf]
    %v199 = vld [vmem:[#allocation2 + $0x64] sm:$0xf]
    %v200 = vld [vmem:[#allocation2 + $0x68] sm:$0xf]
    %v201 = vld [vmem:[#allocation2 + $0x6c] sm:$0xf]
    %v202 = vld [vmem:[#allocation2 + $0x70] sm:$0xf]
    %v203 = vld [vmem:[#allocation2 + $0x74] sm:$0xf]
    %v204 = vld [vmem:[#allocation2 + $0x78] sm:$0xf]
    %v205 = vld [vmem:[#allocation2 + $0x7c] sm:$0xf]
    %v206 = vld [vmem:[#allocation4] sm:$0x1]
    %v207 = vlaneseq
    %v208 = vshrl.u32 %v207, 7
    %v209 = vsub.s32 0, %v208
    %v210 = vrot.slane %v206, %v209
    %v243 = vunpack.c.l.b16 %v174
    %v244 = vunpack.c.l.b16 %v175
    %v245 = vunpack.c.l.b16 %v176
    %v246 = vunpack.c.l.b16 %v177
    %v247 = vunpack.c.l.b16 %v178
    %v248 = vunpack.c.l.b16 %v179
    %v249 = vunpack.c.l.b16 %v180
    %v250 = vunpack.c.l.b16 %v181
    %v251 = vunpack.c.l.b16 %v182
    %v252 = vunpack.c.l.b16 %v183
    %v253 = vunpack.c.l.b16 %v184
    %v254 = vunpack.c.l.b16 %v185
    %v255 = vunpack.c.l.b16 %v186
    %v256 = vunpack.c.l.b16 %v187
    %v257 = vunpack.c.l.b16 %v188
    %v258 = vunpack.c.l.b16 %v189
    %v259 = vunpack.c.l.b16 %v190
    %v260 = vunpack.c.l.b16 %v191
    %v261 = vunpack.c.l.b16 %v192
    %v262 = vunpack.c.l.b16 %v193
    %v263 = vunpack.c.l.b16 %v194
    %v264 = vunpack.c.l.b16 %v195
    %v265 = vunpack.c.l.b16 %v196
    %v266 = vunpack.c.l.b16 %v197
    %v267 = vunpack.c.l.b16 %v198
    %v268 = vunpack.c.l.b16 %v199
    %v269 = vunpack.c.l.b16 %v200
    %v270 = vunpack.c.l.b16 %v201
    %v271 = vunpack.c.l.b16 %v202
    %v272 = vunpack.c.l.b16 %v203
    %v273 = vunpack.c.l.b16 %v204
    %v274 = vunpack.c.l.b16 %v205
    %v275 = vpack.c.b16 %v244, %v243
    %v276 = vpack.c.b16 %v246, %v245
    %v277 = vpack.c.b16 %v248, %v247
    %v278 = vpack.c.b16 %v250, %v249
    %v279 = vpack.c.b16 %v252, %v251
    %v280 = vpack.c.b16 %v254, %v253
    %v281 = vpack.c.b16 %v256, %v255
    %v282 = vpack.c.b16 %v258, %v257
    %v283 = vpack.c.b16 %v260, %v259
    %v284 = vpack.c.b16 %v262, %v261
    %v285 = vpack.c.b16 %v264, %v263
    %v286 = vpack.c.b16 %v266, %v265
    %v287 = vpack.c.b16 %v268, %v267
    %v288 = vpack.c.b16 %v270, %v269
    %v289 = vpack.c.b16 %v272, %v271
    %v290 = vpack.c.b16 %v274, %v273
    %307 = vmatprep.subr.bf16.mxu0 0
    %308 = vmatpush1.bf16.msra.mxu0 %v282
    %309 = vmatprep.subr.bf16.mxu0 0
    %310 = vmatpush1.bf16.msra.mxu0 %v281
    %311 = vmatprep.subr.bf16.mxu0 0
    %312 = vmatpush1.bf16.msra.mxu0 %v280
    %313 = vmatprep.subr.bf16.mxu0 0
    %314 = vmatpush1.bf16.msra.mxu0 %v279
    %315 = vmatprep.subr.bf16.mxu0 0
    %316 = vmatpush1.bf16.msra.mxu0 %v278
    %317 = vmatprep.subr.bf16.mxu0 0
    %318 = vmatpush1.bf16.msra.mxu0 %v277
    %319 = vmatprep.subr.bf16.mxu0 0
    %320 = vmatpush1.bf16.msra.mxu0 %v276
    %321 = vmatprep.subr.bf16.mxu0 0
    %322 = vmatpush1.bf16.msra.mxu0 %v275
    %323 = vmatprep.subr.bf16.mxu0 0
    %324 = vmatpush2.bf16.msra.mxu0 %v290
    %325 = vmatprep.subr.bf16.mxu0 0
    %326 = vmatpush2.bf16.msra.mxu0 %v289
    %327 = vmatprep.subr.bf16.mxu0 0
    %328 = vmatpush2.bf16.msra.mxu0 %v288
    %329 = vmatprep.subr.bf16.mxu0 0
    %330 = vmatpush2.bf16.msra.mxu0 %v287
    %331 = vmatprep.subr.bf16.mxu0 0
    %332 = vmatpush2.bf16.msra.mxu0 %v286
    %333 = vmatprep.subr.bf16.mxu0 0
    %334 = vmatpush2.bf16.msra.mxu0 %v285
    %335 = vmatprep.subr.bf16.mxu0 0
    %336 = vmatpush2.bf16.msra.mxu0 %v284
    %337 = vmatprep.subr.bf16.mxu0 0
    %338 = vmatpush2.bf16.msra.mxu0 %v283
    %339 = vmatprep.mubr.bf16.mxu0 %v173
    %340 = vmatmul.mubr.bf16.gmra.mxu0 %v172
    %v341 = vpop.f32.mrf.mxu0
    %v342 = vadd.f32 %v210, %v341
    %v343 = vpop.f32.mrf.mxu0
    %v344 = vpop.f32.mrf.mxu0
    %v345 = vadd.f32 %v210, %v344
    %v346 = vpop.f32.mrf.mxu0
    %347 = vdwg.mxu0
    %v348 = vld [vmem:[#allocation4 + $0x1] sm:$0x1]
    %v349 = vld [vmem:[#allocation4 + $0x2] sm:$0x1]
    %vm350 = vcmask 261120
    %v351 = vsel %vm350, %v342, 0.0
    %352 = vadd.xlane.f32.xlu0 %v351
    %v353 = vpop.xlane.xlu0 %352
    %v354 = vsel %vm350, %v345, 0.0
    %355 = vadd.xlane.f32.xlu0 %v354
    %v356 = vpop.xlane.xlu0 %355
    %v357 = vrcp.pop 32.0
    %v358 = vmul.f32 %v353, %v357
    %v359 = vmul.f32 %v356, %v357
    %v360 = vsub.f32 %v342, %v358
    %v361 = vsub.f32 %v345, %v359
    %v362 = vmul.f32 %v360, %v360
    %v363 = vmul.f32 %v361, %v361
    %v364 = vsel %vm350, %v362, 0.0
    %365 = vadd.xlane.f32.xlu0 %v364
    %v366 = vpop.xlane.xlu0 %365
    %v367 = vsel %vm350, %v363, 0.0
    %368 = vadd.xlane.f32.xlu0 %v367
    %v369 = vpop.xlane.xlu0 %368
    %v370 = vmul.f32 %v366, %v357
    %v371 = vmul.f32 %v369, %v357
    %v372 = vadd.f32 %v370, 1e-05
    %v373 = vadd.f32 %v371, 1e-05
    %v374 = vrsqrt.pop %v372
    %v375 = vrsqrt.pop %v373
    %v376 = vmul.f32 %v360, %v374
    %v377 = vmul.f32 %v361, %v375
    %v378 = vlaneseq
    %v379 = vshrl.u32 %v378, 7
    %v380 = vsub.s32 0, %v379
    %v381 = vrot.slane %v348, %v380
    %v382 = vmul.f32 %v376, %v381
    %v383 = vmul.f32 %v377, %v381
    %v384 = vlaneseq
    %v385 = vshrl.u32 %v384, 7
    %v386 = vsub.s32 0, %v385
    %v387 = vrot.slane %v349, %v386
    %v388 = vadd.f32 %v382, %v387
    %v389 = vadd.f32 %v383, %v387
    %v390 = vld [vmem:[%s1] sm:$0xff]
    %v391 = vld [vmem:[%s1 + $0x8] sm:$0xff]
    %v392 = vld [vmem:[#allocation10] sm:$0xff]
    %v393 = vpack.c.bf16 %v389, %v388
    %v394 = vld [vmem:[#allocation6] sm:$0xf]
    %v395 = vld [vmem:[#allocation6 + $0x4] sm:$0xf]
    %v396 = vld [vmem:[#allocation6 + $0x8] sm:$0xf]
    %v397 = vld [vmem:[#allocation6 + $0xc] sm:$0xf]
    %v398 = vlaneseq
    %v399 = vshrl.u32 %v398, 7
    %v400 = vsub.s32 0, %v399
    %v401 = vrot.slane %v392, %v400
    %v406 = vunpack.c.l.b16 %v394
    %v407 = vunpack.c.l.b16 %v395
    %v408 = vunpack.c.l.b16 %v396
    %v409 = vunpack.c.l.b16 %v397
    %v410 = vpack.c.b16 %v407, %v406
    %v411 = vpack.c.b16 %v409, %v408
    %v415 = vsel %vm350, %v393, 0
    %417 = vmatprep.subr.bf16.mxu0 0
    %418 = vmatpush1.bf16.msra.mxu0 0
    %419 = vmatprep.subr.bf16.mxu0 0
    %420 = vmatpush1.bf16.msra.mxu0 0
    %421 = vmatprep.subr.bf16.mxu0 0
    %422 = vmatpush1.bf16.msra.mxu0 0
    %423 = vmatprep.subr.bf16.mxu0 0
    %424 = vmatpush1.bf16.msra.mxu0 0
    %425 = vmatprep.subr.bf16.mxu0 0
    %426 = vmatpush1.bf16.msra.mxu0 0
    %427 = vmatprep.subr.bf16.mxu0 0
    %428 = vmatpush1.bf16.msra.mxu0 0
    %429 = vmatprep.subr.bf16.mxu0 0
    %430 = vmatpush1.bf16.msra.mxu0 %v411
    %431 = vmatprep.subr.bf16.mxu0 0
    %432 = vmatpush1.bf16.msra.mxu0 %v410
    %433 = vmatprep.subr.bf16.mxu0 0
    %434 = vmatpush2.bf16.msra.mxu0 0
    %435 = vmatprep.subr.bf16.mxu0 0
    %436 = vmatpush2.bf16.msra.mxu0 0
    %437 = vmatprep.subr.bf16.mxu0 0
    %438 = vmatpush2.bf16.msra.mxu0 0
    %439 = vmatprep.subr.bf16.mxu0 0
    %440 = vmatpush2.bf16.msra.mxu0 0
    %441 = vmatprep.subr.bf16.mxu0 0
    %442 = vmatpush2.bf16.msra.mxu0 0
    %443 = vmatprep.subr.bf16.mxu0 0
    %444 = vmatpush2.bf16.msra.mxu0 0
    %445 = vmatprep.subr.bf16.mxu0 0
    %446 = vmatpush2.bf16.msra.mxu0 0
    %447 = vmatprep.subr.bf16.mxu0 0
    %448 = vmatpush2.bf16.msra.mxu0 0
    %449 = vmatprep.mubr.bf16.mxu0 0
    %450 = vmatmul.mubr.bf16.gmra.mxu0 %v415
    %v451 = vpop.f32.mrf.mxu0
    %v452 = vadd.f32 %v401, %v451
    %v453 = vpop.f32.mrf.mxu0
    %v454 = vpop.f32.mrf.mxu0
    %v455 = vadd.f32 %v401, %v454
    %v456 = vpop.f32.mrf.mxu0
    %457 = vdwg.mxu0
    %v458 = vmul.f32 %v452, 0.35355338
    %v459 = vmul.f32 %v455, 0.35355338
    %v460 = vpack.c.bf16 %v459, %v458
    %v461 = vpack.c.bf16 %v455, %v452
    %463 = vrot.lane.b32.xlu0 %v461, 96
    %v464 = vpop.permute.xlu0 %463
    %vm465 = vcmask 64512
    %v467 = vsel %vm465, %v460, 0
    %v470 = vsel %vm465, %v464, 0
    %472 = vmatprep.subr.bf16.mxu0 0
    %473 = vmatpush1.bf16.xpose.msra.mxu0 0
    %474 = vmatprep.subr.bf16.mxu0 0
    %475 = vmatpush1.bf16.xpose.msra.mxu0 0
    %476 = vmatprep.subr.bf16.mxu0 0
    %477 = vmatpush1.bf16.xpose.msra.mxu0 0
    %478 = vmatprep.subr.bf16.mxu0 0
    %479 = vmatpush1.bf16.xpose.msra.mxu0 0
    %480 = vmatprep.subr.bf16.mxu0 0
    %481 = vmatpush1.bf16.xpose.msra.mxu0 0
    %482 = vmatprep.subr.bf16.mxu0 0
    %483 = vmatpush1.bf16.xpose.msra.mxu0 0
    %484 = vmatprep.subr.bf16.mxu0 0
    %485 = vmatpush1.bf16.xpose.msra.mxu0 0
    %486 = vmatprep.subr.bf16.mxu0 0
    %487 = vmatpush1.bf16.xpose.msra.mxu0 %v470
    %488 = vmatprep.subr.bf16.mxu0 0
    %489 = vmatpush2.bf16.xpose.msra.mxu0 0
    %490 = vmatprep.subr.bf16.mxu0 0
    %491 = vmatpush2.bf16.xpose.msra.mxu0 0
    %492 = vmatprep.subr.bf16.mxu0 0
    %493 = vmatpush2.bf16.xpose.msra.mxu0 0
    %494 = vmatprep.subr.bf16.mxu0 0
    %495 = vmatpush2.bf16.xpose.msra.mxu0 0
    %496 = vmatprep.subr.bf16.mxu0 0
    %497 = vmatpush2.bf16.xpose.msra.mxu0 0
    %498 = vmatprep.subr.bf16.mxu0 0
    %499 = vmatpush2.bf16.xpose.msra.mxu0 0
    %500 = vmatprep.subr.bf16.mxu0 0
    %501 = vmatpush2.bf16.xpose.msra.mxu0 0
    %502 = vmatprep.subr.bf16.mxu0 0
    %503 = vmatpush2.bf16.xpose.msra.mxu0 0
    %504 = vmatprep.mubr.bf16.mxu0 0
    %505 = vmatmul.mubr.bf16.gmra.mxu0 %v467
    %v506 = vpop.f32.mrf.mxu0
    %v507 = vadd.f32 %v390, %v506
    %v508 = vpop.f32.mrf.mxu0
    %v509 = vpop.f32.mrf.mxu0
    %v510 = vadd.f32 %v391, %v509
    %v511 = vpop.f32.mrf.mxu0
    %512 = vdwg.mxu0
    %vm513 = vcmask 130048
    %v514 = vsel %vm513, %v507, -inf
    %515 = vmax.xlane.f32.xlu0 %v514
    %v516 = vpop.xlane.xlu0 %515
    %v517 = vsel %vm513, %v510, -inf
    %518 = vmax.xlane.f32.xlu0 %v517
    %v519 = vpop.xlane.xlu0 %518
    %v520 = vsub.f32 %v507, %v516
    %v521 = vsub.f32 %v510, %v519
    %v522 = vmul.f32 %v520, 1.442695
    %v523 = vpow.pop %v522
    %v524 = vmul.f32 %v521, 1.442695
    %v525 = vpow.pop %v524
    %v526 = vsel %vm513, %v523, 0.0
    %527 = vadd.xlane.f32.xlu0 %v526
    %v528 = vpop.xlane.xlu0 %527
    %v529 = vsel %vm513, %v525, 0.0
    %530 = vadd.xlane.f32.xlu0 %v529
    %v531 = vpop.xlane.xlu0 %530
    %v532 = vrcp.pop %v528
    %v533 = vrcp.pop %v531
    %v534 = vmul.f32 %v523, %v532
    %v535 = vmul.f32 %v525, %v533
    %v536 = vpack.c.bf16 %v535, %v534
    %537 = vrot.lane.b32.xlu0 %v461, 64
    %v538 = vpop.permute.xlu0 %537
    %v541 = vsel %vm513, %v536, 0
    %543 = vmatprep.subr.bf16.mxu0 0
    %544 = vmatpush1.bf16.msra.mxu0 0
    %545 = vmatprep.subr.bf16.mxu0 0
    %546 = vmatpush1.bf16.msra.mxu0 0
    %547 = vmatprep.subr.bf16.mxu0 0
    %548 = vmatpush1.bf16.msra.mxu0 0
    %549 = vmatprep.subr.bf16.mxu0 0
    %550 = vmatpush1.bf16.msra.mxu0 0
    %551 = vmatprep.subr.bf16.mxu0 0
    %552 = vmatpush1.bf16.msra.mxu0 0
    %553 = vmatprep.subr.bf16.mxu0 0
    %554 = vmatpush1.bf16.msra.mxu0 0
    %555 = vmatprep.subr.bf16.mxu0 0
    %556 = vmatpush1.bf16.msra.mxu0 0
    %557 = vmatprep.subr.bf16.mxu0 0
    %558 = vmatpush1.bf16.msra.mxu0 %v538
    %559 = vmatprep.subr.bf16.mxu0 0
    %560 = vmatpush2.bf16.msra.mxu0 0
    %561 = vmatprep.subr.bf16.mxu0 0
    %562 = vmatpush2.bf16.msra.mxu0 0
    %563 = vmatprep.subr.bf16.mxu0 0
    %564 = vmatpush2.bf16.msra.mxu0 0
    %565 = vmatprep.subr.bf16.mxu0 0
    %566 = vmatpush2.bf16.msra.mxu0 0
    %567 = vmatprep.subr.bf16.mxu0 0
    %568 = vmatpush2.bf16.msra.mxu0 0
    %569 = vmatprep.subr.bf16.mxu0 0
    %570 = vmatpush2.bf16.msra.mxu0 0
    %571 = vmatprep.subr.bf16.mxu0 0
    %572 = vmatpush2.bf16.msra.mxu0 0
    %573 = vmatprep.subr.bf16.mxu0 0
    %574 = vmatpush2.bf16.msra.mxu0 0
    %575 = vmatprep.mubr.bf16.mxu0 0
    %576 = vmatmul.mubr.bf16.gmra.mxu0 %v541
    %v577 = vpop.f32.mrf.mxu0
    %v578 = vadd.f32 0.0, %v577
    %v579 = vpop.f32.mrf.mxu0
    %v580 = vpop.f32.mrf.mxu0
    %v581 = vadd.f32 0.0, %v580
    %v582 = vpop.f32.mrf.mxu0
    %583 = vdwg.mxu0
    %585 = vrot.lane.b32.xlu0 %v460, 120
    %v586 = vpop.permute.xlu0 %585
    %587 = vrot.lane.b32.xlu0 %v461, 88
    %v588 = vpop.permute.xlu0 %587
    %v590 = vsel %vm465, %v586, 0
    %v593 = vsel %vm465, %v588, 0
    %595 = vmatprep.subr.bf16.mxu0 0
    %596 = vmatpush1.bf16.xpose.msra.mxu0 0
    %597 = vmatprep.subr.bf16.mxu0 0
    %598 = vmatpush1.bf16.xpose.msra.mxu0 0
    %599 = vmatprep.subr.bf16.mxu0 0
    %600 = vmatpush1.bf16.xpose.msra.mxu0 0
    %601 = vmatprep.subr.bf16.mxu0 0
    %602 = vmatpush1.bf16.xpose.msra.mxu0 0
    %603 = vmatprep.subr.bf16.mxu0 0
    %604 = vmatpush1.bf16.xpose.msra.mxu0 0
    %605 = vmatprep.subr.bf16.mxu0 0
    %606 = vmatpush1.bf16.xpose.msra.mxu0 0
    %607 = vmatprep.subr.bf16.mxu0 0
    %608 = vmatpush1.bf16.xpose.msra.mxu0 0
    %609 = vmatprep.subr.bf16.mxu0 0
    %610 = vmatpush1.bf16.xpose.msra.mxu0 %v593
    %611 = vmatprep.subr.bf16.mxu0 0
    %612 = vmatpush2.bf16.xpose.msra.mxu0 0
    %613 = vmatprep.subr.bf16.mxu0 0
    %614 = vmatpush2.bf16.xpose.msra.mxu0 0
    %615 = vmatprep.subr.bf16.mxu0 0
    %616 = vmatpush2.bf16.xpose.msra.mxu0 0
    %617 = vmatprep.subr.bf16.mxu0 0
    %618 = vmatpush2.bf16.xpose.msra.mxu0 0
    %619 = vmatprep.subr.bf16.mxu0 0
    %620 = vmatpush2.bf16.xpose.msra.mxu0 0
    %621 = vmatprep.subr.bf16.mxu0 0
    %622 = vmatpush2.bf16.xpose.msra.mxu0 0
    %623 = vmatprep.subr.bf16.mxu0 0
    %624 = vmatpush2.bf16.xpose.msra.mxu0 0
    %625 = vmatprep.subr.bf16.mxu0 0
    %626 = vmatpush2.bf16.xpose.msra.mxu0 0
    %627 = vmatprep.mubr.bf16.mxu0 0
    %628 = vmatmul.mubr.bf16.gmra.mxu0 %v590
    %v629 = vpop.f32.mrf.mxu0
    %v630 = vadd.f32 %v390, %v629
    %v631 = vpop.f32.mrf.mxu0
    %v632 = vpop.f32.mrf.mxu0
    %v633 = vadd.f32 %v391, %v632
    %v634 = vpop.f32.mrf.mxu0
    %635 = vdwg.mxu0
    %v636 = vsel %vm513, %v630, -inf
    %637 = vmax.xlane.f32.xlu0 %v636
    %v638 = vpop.xlane.xlu0 %637
    %v639 = vsel %vm513, %v633, -inf
    %640 = vmax.xlane.f32.xlu0 %v639
    %v641 = vpop.xlane.xlu0 %640
    %v642 = vsub.f32 %v630, %v638
    %v643 = vsub.f32 %v633, %v641
    %v644 = vmul.f32 %v642, 1.442695
    %v645 = vpow.pop %v644
    %v646 = vmul.f32 %v643, 1.442695
    %v647 = vpow.pop %v646
    %v648 = vsel %vm513, %v645, 0.0
    %649 = vadd.xlane.f32.xlu0 %v648
    %v650 = vpop.xlane.xlu0 %649
    %v651 = vsel %vm513, %v647, 0.0
    %652 = vadd.xlane.f32.xlu0 %v651
    %v653 = vpop.xlane.xlu0 %652
    %v654 = vrcp.pop %v650
    %v655 = vrcp.pop %v653
    %v656 = vmul.f32 %v645, %v654
    %v657 = vmul.f32 %v647, %v655
    %v658 = vpack.c.bf16 %v657, %v656
    %659 = vrot.lane.b32.xlu0 %v461, 56
    %v660 = vpop.permute.xlu0 %659
    %v663 = vsel %vm513, %v658, 0
    %665 = vmatprep.subr.bf16.mxu0 0
    %666 = vmatpush1.bf16.msra.mxu0 0
    %667 = vmatprep.subr.bf16.mxu0 0
    %668 = vmatpush1.bf16.msra.mxu0 0
    %669 = vmatprep.subr.bf16.mxu0 0
    %670 = vmatpush1.bf16.msra.mxu0 0
    %671 = vmatprep.subr.bf16.mxu0 0
    %672 = vmatpush1.bf16.msra.mxu0 0
    %673 = vmatprep.subr.bf16.mxu0 0
    %674 = vmatpush1.bf16.msra.mxu0 0
    %675 = vmatprep.subr.bf16.mxu0 0
    %676 = vmatpush1.bf16.msra.mxu0 0
    %677 = vmatprep.subr.bf16.mxu0 0
    %678 = vmatpush1.bf16.msra.mxu0 0
    %679 = vmatprep.subr.bf16.mxu0 0
    %680 = vmatpush1.bf16.msra.mxu0 %v660
    %681 = vmatprep.subr.bf16.mxu0 0
    %682 = vmatpush2.bf16.msra.mxu0 0
    %683 = vmatprep.subr.bf16.mxu0 0
    %684 = vmatpush2.bf16.msra.mxu0 0
    %685 = vmatprep.subr.bf16.mxu0 0
    %686 = vmatpush2.bf16.msra.mxu0 0
    %687 = vmatprep.subr.bf16.mxu0 0
    %688 = vmatpush2.bf16.msra.mxu0 0
    %689 = vmatprep.subr.bf16.mxu0 0
    %690 = vmatpush2.bf16.msra.mxu0 0
    %691 = vmatprep.subr.bf16.mxu0 0
    %692 = vmatpush2.bf16.msra.mxu0 0
    %693 = vmatprep.subr.bf16.mxu0 0
    %694 = vmatpush2.bf16.msra.mxu0 0
    %695 = vmatprep.subr.bf16.mxu0 0
    %696 = vmatpush2.bf16.msra.mxu0 0
    %697 = vmatprep.mubr.bf16.mxu0 0
    %698 = vmatmul.mubr.bf16.gmra.mxu0 %v663
    %v699 = vpop.f32.mrf.mxu0
    %v700 = vadd.f32 0.0, %v699
    %v701 = vpop.f32.mrf.mxu0
    %v702 = vpop.f32.mrf.mxu0
    %v703 = vadd.f32 0.0, %v702
    %v704 = vpop.f32.mrf.mxu0
    %705 = vdwg.mxu0
    %706 = vrot.lane.b32.xlu0 %v460, 112
    %v707 = vpop.permute.xlu0 %706
    %708 = vrot.lane.b32.xlu0 %v461, 80
    %v709 = vpop.permute.xlu0 %708
    %v711 = vsel %vm465, %v707, 0
    %v714 = vsel %vm465, %v709, 0
    %716 = vmatprep.subr.bf16.mxu0 0
    %717 = vmatpush1.bf16.xpose.msra.mxu0 0
    %718 = vmatprep.subr.bf16.mxu0 0
    %719 = vmatpush1.bf16.xpose.msra.mxu0 0
    %720 = vmatprep.subr.bf16.mxu0 0
    %721 = vmatpush1.bf16.xpose.msra.mxu0 0
    %722 = vmatprep.subr.bf16.mxu0 0
    %723 = vmatpush1.bf16.xpose.msra.mxu0 0
    %724 = vmatprep.subr.bf16.mxu0 0
    %725 = vmatpush1.bf16.xpose.msra.mxu0 0
    %726 = vmatprep.subr.bf16.mxu0 0
    %727 = vmatpush1.bf16.xpose.msra.mxu0 0
    %728 = vmatprep.subr.bf16.mxu0 0
    %729 = vmatpush1.bf16.xpose.msra.mxu0 0
    %730 = vmatprep.subr.bf16.mxu0 0
    %731 = vmatpush1.bf16.xpose.msra.mxu0 %v714
    %732 = vmatprep.subr.bf16.mxu0 0
    %733 = vmatpush2.bf16.xpose.msra.mxu0 0
    %734 = vmatprep.subr.bf16.mxu0 0
    %735 = vmatpush2.bf16.xpose.msra.mxu0 0
    %736 = vmatprep.subr.bf16.mxu0 0
    %737 = vmatpush2.bf16.xpose.msra.mxu0 0
    %738 = vmatprep.subr.bf16.mxu0 0
    %739 = vmatpush2.bf16.xpose.msra.mxu0 0
    %740 = vmatprep.subr.bf16.mxu0 0
    %741 = vmatpush2.bf16.xpose.msra.mxu0 0
    %742 = vmatprep.subr.bf16.mxu0 0
    %743 = vmatpush2.bf16.xpose.msra.mxu0 0
    %744 = vmatprep.subr.bf16.mxu0 0
    %745 = vmatpush2.bf16.xpose.msra.mxu0 0
    %746 = vmatprep.subr.bf16.mxu0 0
    %747 = vmatpush2.bf16.xpose.msra.mxu0 0
    %748 = vmatprep.mubr.bf16.mxu0 0
    %749 = vmatmul.mubr.bf16.gmra.mxu0 %v711
    %v750 = vpop.f32.mrf.mxu0
    %v751 = vadd.f32 %v390, %v750
    %v752 = vpop.f32.mrf.mxu0
    %v753 = vpop.f32.mrf.mxu0
    %v754 = vadd.f32 %v391, %v753
    %v755 = vpop.f32.mrf.mxu0
    %756 = vdwg.mxu0
    %v757 = vsel %vm513, %v751, -inf
    %758 = vmax.xlane.f32.xlu0 %v757
    %v759 = vpop.xlane.xlu0 %758
    %v760 = vsel %vm513, %v754, -inf
    %761 = vmax.xlane.f32.xlu0 %v760
    %v762 = vpop.xlane.xlu0 %761
    %v763 = vsub.f32 %v751, %v759
    %v764 = vsub.f32 %v754, %v762
    %v765 = vmul.f32 %v763, 1.442695
    %v766 = vpow.pop %v765
    %v767 = vmul.f32 %v764, 1.442695
    %v768 = vpow.pop %v767
    %v769 = vsel %vm513, %v766, 0.0
    %770 = vadd.xlane.f32.xlu0 %v769
    %v771 = vpop.xlane.xlu0 %770
    %v772 = vsel %vm513, %v768, 0.0
    %773 = vadd.xlane.f32.xlu0 %v772
    %v774 = vpop.xlane.xlu0 %773
    %v775 = vrcp.pop %v771
    %v776 = vrcp.pop %v774
    %v777 = vmul.f32 %v766, %v775
    %v778 = vmul.f32 %v768, %v776
    %v779 = vpack.c.bf16 %v778, %v777
    %780 = vrot.lane.b32.xlu0 %v461, 48
    %v781 = vpop.permute.xlu0 %780
    %v784 = vsel %vm513, %v779, 0
    %786 = vmatprep.subr.bf16.mxu0 0
    %787 = vmatpush1.bf16.msra.mxu0 0
    %788 = vmatprep.subr.bf16.mxu0 0
    %789 = vmatpush1.bf16.msra.mxu0 0
    %790 = vmatprep.subr.bf16.mxu0 0
    %791 = vmatpush1.bf16.msra.mxu0 0
    %792 = vmatprep.subr.bf16.mxu0 0
    %793 = vmatpush1.bf16.msra.mxu0 0
    %794 = vmatprep.subr.bf16.mxu0 0
    %795 = vmatpush1.bf16.msra.mxu0 0
    %796 = vmatprep.subr.bf16.mxu0 0
    %797 = vmatpush1.bf16.msra.mxu0 0
    %798 = vmatprep.subr.bf16.mxu0 0
    %799 = vmatpush1.bf16.msra.mxu0 0
    %800 = vmatprep.subr.bf16.mxu0 0
    %801 = vmatpush1.bf16.msra.mxu0 %v781
    %802 = vmatprep.subr.bf16.mxu0 0
    %803 = vmatpush2.bf16.msra.mxu0 0
    %804 = vmatprep.subr.bf16.mxu0 0
    %805 = vmatpush2.bf16.msra.mxu0 0
    %806 = vmatprep.subr.bf16.mxu0 0
    %807 = vmatpush2.bf16.msra.mxu0 0
    %808 = vmatprep.subr.bf16.mxu0 0
    %809 = vmatpush2.bf16.msra.mxu0 0
    %810 = vmatprep.subr.bf16.mxu0 0
    %811 = vmatpush2.bf16.msra.mxu0 0
    %812 = vmatprep.subr.bf16.mxu0 0
    %813 = vmatpush2.bf16.msra.mxu0 0
    %814 = vmatprep.subr.bf16.mxu0 0
    %815 = vmatpush2.bf16.msra.mxu0 0
    %816 = vmatprep.subr.bf16.mxu0 0
    %817 = vmatpush2.bf16.msra.mxu0 0
    %818 = vmatprep.mubr.bf16.mxu0 0
    %819 = vmatmul.mubr.bf16.gmra.mxu0 %v784
    %v820 = vpop.f32.mrf.mxu0
    %v821 = vadd.f32 0.0, %v820
    %v822 = vpop.f32.mrf.mxu0
    %v823 = vpop.f32.mrf.mxu0
    %v824 = vadd.f32 0.0, %v823
    %v825 = vpop.f32.mrf.mxu0
    %826 = vdwg.mxu0
    %827 = vrot.lane.b32.xlu0 %v460, 104
    %v828 = vpop.permute.xlu0 %827
    %829 = vrot.lane.b32.xlu0 %v461, 72
    %v830 = vpop.permute.xlu0 %829
    %v832 = vsel %vm465, %v828, 0
    %v835 = vsel %vm465, %v830, 0
    %837 = vmatprep.subr.bf16.mxu0 0
    %838 = vmatpush1.bf16.xpose.msra.mxu0 0
    %839 = vmatprep.subr.bf16.mxu0 0
    %840 = vmatpush1.bf16.xpose.msra.mxu0 0
    %841 = vmatprep.subr.bf16.mxu0 0
    %842 = vmatpush1.bf16.xpose.msra.mxu0 0
    %843 = vmatprep.subr.bf16.mxu0 0
    %844 = vmatpush1.bf16.xpose.msra.mxu0 0
    %845 = vmatprep.subr.bf16.mxu0 0
    %846 = vmatpush1.bf16.xpose.msra.mxu0 0
    %847 = vmatprep.subr.bf16.mxu0 0
    %848 = vmatpush1.bf16.xpose.msra.mxu0 0
    %849 = vmatprep.subr.bf16.mxu0 0
    %850 = vmatpush1.bf16.xpose.msra.mxu0 0
    %851 = vmatprep.subr.bf16.mxu0 0
    %852 = vmatpush1.bf16.xpose.msra.mxu0 %v835
    %853 = vmatprep.subr.bf16.mxu0 0
    %854 = vmatpush2.bf16.xpose.msra.mxu0 0
    %855 = vmatprep.subr.bf16.mxu0 0
    %856 = vmatpush2.bf16.xpose.msra.mxu0 0
    %857 = vmatprep.subr.bf16.mxu0 0
    %858 = vmatpush2.bf16.xpose.msra.mxu0 0
    %859 = vmatprep.subr.bf16.mxu0 0
    %860 = vmatpush2.bf16.xpose.msra.mxu0 0
    %861 = vmatprep.subr.bf16.mxu0 0
    %862 = vmatpush2.bf16.xpose.msra.mxu0 0
    %863 = vmatprep.subr.bf16.mxu0 0
    %864 = vmatpush2.bf16.xpose.msra.mxu0 0
    %865 = vmatprep.subr.bf16.mxu0 0
    %866 = vmatpush2.bf16.xpose.msra.mxu0 0
    %867 = vmatprep.subr.bf16.mxu0 0
    %868 = vmatpush2.bf16.xpose.msra.mxu0 0
    %869 = vmatprep.mubr.bf16.mxu0 0
    %870 = vmatmul.mubr.bf16.gmra.mxu0 %v832
    %v871 = vpop.f32.mrf.mxu0
    %v872 = vadd.f32 %v390, %v871
    %v873 = vpop.f32.mrf.mxu0
    %v874 = vpop.f32.mrf.mxu0
    %v875 = vadd.f32 %v391, %v874
    %v876 = vpop.f32.mrf.mxu0
    %877 = vdwg.mxu0
    %v878 = vsel %vm513, %v872, -inf
    %879 = vmax.xlane.f32.xlu0 %v878
    %v880 = vpop.xlane.xlu0 %879
    %v881 = vsel %vm513, %v875, -inf
    %882 = vmax.xlane.f32.xlu0 %v881
    %v883 = vpop.xlane.xlu0 %882
    %v884 = vsub.f32 %v872, %v880
    %v885 = vsub.f32 %v875, %v883
    %v886 = vmul.f32 %v884, 1.442695
    %v887 = vpow.pop %v886
    %v888 = vmul.f32 %v885, 1.442695
    %v889 = vpow.pop %v888
    %v890 = vsel %vm513, %v887, 0.0
    %891 = vadd.xlane.f32.xlu0 %v890
    %v892 = vpop.xlane.xlu0 %891
    %v893 = vsel %vm513, %v889, 0.0
    %894 = vadd.xlane.f32.xlu0 %v893
    %v895 = vpop.xlane.xlu0 %894
    %v896 = vrcp.pop %v892
    %v897 = vrcp.pop %v895
    %v898 = vmul.f32 %v887, %v896
    %v899 = vmul.f32 %v889, %v897
    %v900 = vpack.c.bf16 %v899, %v898
    %901 = vrot.lane.b32.xlu0 %v461, 40
    %v902 = vpop.permute.xlu0 %901
    %v905 = vsel %vm513, %v900, 0
    %907 = vmatprep.subr.bf16.mxu0 0
    %908 = vmatpush1.bf16.msra.mxu0 0
    %909 = vmatprep.subr.bf16.mxu0 0
    %910 = vmatpush1.bf16.msra.mxu0 0
    %911 = vmatprep.subr.bf16.mxu0 0
    %912 = vmatpush1.bf16.msra.mxu0 0
    %913 = vmatprep.subr.bf16.mxu0 0
    %914 = vmatpush1.bf16.msra.mxu0 0
    %915 = vmatprep.subr.bf16.mxu0 0
    %916 = vmatpush1.bf16.msra.mxu0 0
    %917 = vmatprep.subr.bf16.mxu0 0
    %918 = vmatpush1.bf16.msra.mxu0 0
    %919 = vmatprep.subr.bf16.mxu0 0
    %920 = vmatpush1.bf16.msra.mxu0 0
    %921 = vmatprep.subr.bf16.mxu0 0
    %922 = vmatpush1.bf16.msra.mxu0 %v902
    %923 = vmatprep.subr.bf16.mxu0 0
    %924 = vmatpush2.bf16.msra.mxu0 0
    %925 = vmatprep.subr.bf16.mxu0 0
    %926 = vmatpush2.bf16.msra.mxu0 0
    %927 = vmatprep.subr.bf16.mxu0 0
    %928 = vmatpush2.bf16.msra.mxu0 0
    %929 = vmatprep.subr.bf16.mxu0 0
    %930 = vmatpush2.bf16.msra.mxu0 0
    %931 = vmatprep.subr.bf16.mxu0 0
    %932 = vmatpush2.bf16.msra.mxu0 0
    %933 = vmatprep.subr.bf16.mxu0 0
    %934 = vmatpush2.bf16.msra.mxu0 0
    %935 = vmatprep.subr.bf16.mxu0 0
    %936 = vmatpush2.bf16.msra.mxu0 0
    %937 = vmatprep.subr.bf16.mxu0 0
    %938 = vmatpush2.bf16.msra.mxu0 0
    %939 = vmatprep.mubr.bf16.mxu0 0
    %940 = vmatmul.mubr.bf16.gmra.mxu0 %v905
    %v941 = vpop.f32.mrf.mxu0
    %v942 = vadd.f32 0.0, %v941
    %v943 = vpop.f32.mrf.mxu0
    %v944 = vpop.f32.mrf.mxu0
    %v945 = vadd.f32 0.0, %v944
    %v946 = vpop.f32.mrf.mxu0
    %947 = vdwg.mxu0
    %950 = vrot.lane.b32.xlu0 %v700, 8
    %v951 = vpop.permute.xlu0 %950
    %952 = vrot.lane.b32.xlu0 %v703, 8
    %v953 = vpop.permute.xlu0 %952
    %958 = vrot.lane.b32.xlu0 %v821, 16
    %v959 = vpop.permute.xlu0 %958
    %960 = vrot.lane.b32.xlu0 %v824, 16
    %v961 = vpop.permute.xlu0 %960
    %966 = vrot.lane.b32.xlu0 %v942, 24
    %v967 = vpop.permute.xlu0 %966
    %968 = vrot.lane.b32.xlu0 %v945, 24
    %v969 = vpop.permute.xlu0 %968
    %v972 = vsel %vm465, %v578, %v951
    %v973 = vsel %vm465, %v581, %v953
    %v974 = vsel %vm513, %v972, %v959
    %v975 = vsel %vm513, %v973, %v961
    %vm976 = vcmask 195584
    %v977 = vsel %vm976, %v974, %v967
    %v978 = vsel %vm976, %v975, %v969
    %v979 = vpack.c.bf16 %v978, %v977
    %v980 = vld [vmem:[#allocation7] sm:$0xf]
    %v981 = vld [vmem:[#allocation7 + $0x4] sm:$0xf]
    %v982 = vld [vmem:[#allocation7 + $0x8] sm:$0xf]
    %v983 = vld [vmem:[#allocation7 + $0xc] sm:$0xf]
    %v984 = vlaneseq
    %v985 = vshrl.u32 %v984, 7
    %v986 = vsub.s32 1, %v985
    %v987 = vrot.slane %v392, %v986
    %v992 = vunpack.c.l.b16 %v980
    %v993 = vunpack.c.l.b16 %v981
    %v994 = vunpack.c.l.b16 %v982
    %v995 = vunpack.c.l.b16 %v983
    %v996 = vpack.c.b16 %v993, %v992
    %v997 = vpack.c.b16 %v995, %v994
    %v1001 = vsel %vm350, %v979, 0
    %1003 = vmatprep.subr.bf16.mxu0 0
    %1004 = vmatpush1.bf16.msra.mxu0 0
    %1005 = vmatprep.subr.bf16.mxu0 0
    %1006 = vmatpush1.bf16.msra.mxu0 0
    %1007 = vmatprep.subr.bf16.mxu0 0
    %1008 = vmatpush1.bf16.msra.mxu0 0
    %1009 = vmatprep.subr.bf16.mxu0 0
    %1010 = vmatpush1.bf16.msra.mxu0 0
    %1011 = vmatprep.subr.bf16.mxu0 0
    %1012 = vmatpush1.bf16.msra.mxu0 0
    %1013 = vmatprep.subr.bf16.mxu0 0
    %1014 = vmatpush1.bf16.msra.mxu0 0
    %1015 = vmatprep.subr.bf16.mxu0 0
    %1016 = vmatpush1.bf16.msra.mxu0 %v997
    %1017 = vmatprep.subr.bf16.mxu0 0
    %1018 = vmatpush1.bf16.msra.mxu0 %v996
    %1019 = vmatprep.subr.bf16.mxu0 0
    %1020 = vmatpush2.bf16.msra.mxu0 0
    %1021 = vmatprep.subr.bf16.mxu0 0
    %1022 = vmatpush2.bf16.msra.mxu0 0
    %1023 = vmatprep.subr.bf16.mxu0 0
    %1024 = vmatpush2.bf16.msra.mxu0 0
    %1025 = vmatprep.subr.bf16.mxu0 0
    %1026 = vmatpush2.bf16.msra.mxu0 0
    %1027 = vmatprep.subr.bf16.mxu0 0
    %1028 = vmatpush2.bf16.msra.mxu0 0
    %1029 = vmatprep.subr.bf16.mxu0 0
    %1030 = vmatpush2.bf16.msra.mxu0 0
    %1031 = vmatprep.subr.bf16.mxu0 0
    %1032 = vmatpush2.bf16.msra.mxu0 0
    %1033 = vmatprep.subr.bf16.mxu0 0
    %1034 = vmatpush2.bf16.msra.mxu0 0
    %1035 = vmatprep.mubr.bf16.mxu0 0
    %1036 = vmatmul.mubr.bf16.gmra.mxu0 %v1001
    %v1037 = vpop.f32.mrf.mxu0
    %v1038 = vadd.f32 %v987, %v1037
    %v1039 = vpop.f32.mrf.mxu0
    %v1040 = vpop.f32.mrf.mxu0
    %v1041 = vadd.f32 %v987, %v1040
    %v1042 = vpop.f32.mrf.mxu0
    %1043 = vdwg.mxu0
    %v1044 = vadd.f32 %v1038, %v388
    %v1045 = vadd.f32 %v1041, %v389
    %v1046 = vsel %vm350, %v1044, 0.0
    %1047 = vadd.xlane.f32.xlu0 %v1046
    %v1048 = vpop.xlane.xlu0 %1047
    %v1049 = vsel %vm350, %v1045, 0.0
    %1050 = vadd.xlane.f32.xlu0 %v1049
    %v1051 = vpop.xlane.xlu0 %1050
    %v1052 = vmul.f32 %v1048, %v357
    %v1053 = vmul.f32 %v1051, %v357
    %v1054 = vsub.f32 %v1044, %v1052
    %v1055 = vsub.f32 %v1045, %v1053
    %v1056 = vmul.f32 %v1054, %v1054
    %v1057 = vmul.f32 %v1055, %v1055
    %v1058 = vsel %vm350, %v1056, 0.0
    %1059 = vadd.xlane.f32.xlu0 %v1058
    %v1060 = vpop.xlane.xlu0 %1059
    %v1061 = vsel %vm350, %v1057, 0.0
    %1062 = vadd.xlane.f32.xlu0 %v1061
    %v1063 = vpop.xlane.xlu0 %1062
    %v1064 = vmul.f32 %v1060, %v357
    %v1065 = vmul.f32 %v1063, %v357
    %v1066 = vadd.f32 %v1064, 1e-05
    %v1067 = vadd.f32 %v1065, 1e-05
    %v1068 = vrsqrt.pop %v1066
    %v1069 = vrsqrt.pop %v1067
    %v1070 = vmul.f32 %v1054, %v1068
    %v1071 = vmul.f32 %v1055, %v1069
    %v1072 = vlaneseq
    %v1073 = vshrl.u32 %v1072, 7
    %v1074 = vsub.s32 2, %v1073
    %v1075 = vrot.slane %v392, %v1074
    %v1076 = vmul.f32 %v1070, %v1075
    %v1077 = vmul.f32 %v1071, %v1075
    %v1078 = vlaneseq
    %v1079 = vshrl.u32 %v1078, 7
    %v1080 = vsub.s32 3, %v1079
    %v1081 = vrot.slane %v392, %v1080
    %v1082 = vadd.f32 %v1076, %v1081
    %v1083 = vadd.f32 %v1077, %v1081
    %v1084 = vpack.c.bf16 %v1083, %v1082
    %v1085 = vld [vmem:[%s6] sm:$0xf]
    %v1086 = vld [vmem:[%s6 + $0x4] sm:$0xf]
    %v1087 = vld [vmem:[%s6 + $0x8] sm:$0xf]
    %v1088 = vld [vmem:[%s6 + $0xc] sm:$0xf]
    %v1089 = vlaneseq
    %v1090 = vshrl.u32 %v1089, 7
    %v1091 = vsub.s32 4, %v1090
    %v1092 = vrot.slane %v392, %v1091
    %v1097 = vunpack.c.l.b16 %v1085
    %v1098 = vunpack.c.l.b16 %v1086
    %v1099 = vunpack.c.l.b16 %v1087
    %v1100 = vunpack.c.l.b16 %v1088
    %v1101 = vpack.c.b16 %v1098, %v1097
    %v1102 = vpack.c.b16 %v1100, %v1099
    %v1106 = vsel %vm350, %v1084, 0
    %1108 = vmatprep.subr.bf16.mxu0 0
    %1109 = vmatpush1.bf16.msra.mxu0 0
    %1110 = vmatprep.subr.bf16.mxu0 0
    %1111 = vmatpush1.bf16.msra.mxu0 0
    %1112 = vmatprep.subr.bf16.mxu0 0
    %1113 = vmatpush1.bf16.msra.mxu0 0
    %1114 = vmatprep.subr.bf16.mxu0 0
    %1115 = vmatpush1.bf16.msra.mxu0 0
    %1116 = vmatprep.subr.bf16.mxu0 0
    %1117 = vmatpush1.bf16.msra.mxu0 0
    %1118 = vmatprep.subr.bf16.mxu0 0
    %1119 = vmatpush1.bf16.msra.mxu0 0
    %1120 = vmatprep.subr.bf16.mxu0 0
    %1121 = vmatpush1.bf16.msra.mxu0 %v1102
    %1122 = vmatprep.subr.bf16.mxu0 0
    %1123 = vmatpush1.bf16.msra.mxu0 %v1101
    %1124 = vmatprep.subr.bf16.mxu0 0
    %1125 = vmatpush2.bf16.msra.mxu0 0
    %1126 = vmatprep.subr.bf16.mxu0 0
    %1127 = vmatpush2.bf16.msra.mxu0 0
    %1128 = vmatprep.subr.bf16.mxu0 0
    %1129 = vmatpush2.bf16.msra.mxu0 0
    %1130 = vmatprep.subr.bf16.mxu0 0
    %1131 = vmatpush2.bf16.msra.mxu0 0
    %1132 = vmatprep.subr.bf16.mxu0 0
    %1133 = vmatpush2.bf16.msra.mxu0 0
    %1134 = vmatprep.subr.bf16.mxu0 0
    %1135 = vmatpush2.bf16.msra.mxu0 0
    %1136 = vmatprep.subr.bf16.mxu0 0
    %1137 = vmatpush2.bf16.msra.mxu0 0
    %1138 = vmatprep.subr.bf16.mxu0 0
    %1139 = vmatpush2.bf16.msra.mxu0 0
    %1140 = vmatprep.mubr.bf16.mxu0 0
    %1141 = vmatmul.mubr.bf16.gmra.mxu0 %v1106
    %v1142 = vpop.f32.mrf.mxu0
    %v1143 = vadd.f32 %v1092, %v1142
    %v1144 = vpop.f32.mrf.mxu0
    %v1145 = vpop.f32.mrf.mxu0
    %v1146 = vadd.f32 %v1092, %v1145
    %v1147 = vpop.f32.mrf.mxu0
    %1148 = vdwg.mxu0
    %v1149 = vmul.f32 %v1143, %v1143
    %v1150 = vmul.f32 %v1146, %v1146
    %v1151 = vmul.f32 %v1143, %v1149
    %v1152 = vmul.f32 %v1146, %v1150
    %v1153 = vmul.f32 %v1151, 0.044715
    %v1154 = vmul.f32 %v1152, 0.044715
    %v1155 = vadd.f32 %v1143, %v1153
    %v1156 = vadd.f32 %v1146, %v1154
    %v1157 = vmul.f32 %v1155, 0.7978846
    %v1158 = vmul.f32 %v1156, 0.7978846
    %v1159 = vtanh.pop %v1157
    %v1160 = vtanh.pop %v1158
    %v1161 = vadd.f32 %v1159, 1.0
    %v1162 = vadd.f32 %v1160, 1.0
    %v1163 = vmul.f32 %v1161, 0.5
    %v1164 = vmul.f32 %v1162, 0.5
    %v1165 = vmul.f32 %v1143, %v1163
    %v1166 = vmul.f32 %v1146, %v1164
    %v1167 = vpack.c.bf16 %v1166, %v1165
    %v1168 = vld [vmem:[#allocation9] sm:$0xf]
    %v1169 = vld [vmem:[#allocation9 + $0x4] sm:$0xf]
    %v1170 = vld [vmem:[#allocation9 + $0x8] sm:$0xf]
    %v1171 = vld [vmem:[#allocation9 + $0xc] sm:$0xf]
    %v1172 = vld [vmem:[#allocation9 + $0x10] sm:$0xf]
    %v1173 = vld [vmem:[#allocation9 + $0x14] sm:$0xf]
    %v1174 = vld [vmem:[#allocation9 + $0x18] sm:$0xf]
    %v1175 = vld [vmem:[#allocation9 + $0x1c] sm:$0xf]
    %v1176 = vlaneseq
    %v1177 = vshrl.u32 %v1176, 7
    %v1178 = vsub.s32 5, %v1177
    %v1179 = vrot.slane %v392, %v1178
    %v1188 = vunpack.c.l.b16 %v1168
    %v1189 = vunpack.c.l.b16 %v1169
    %v1190 = vunpack.c.l.b16 %v1170
    %v1191 = vunpack.c.l.b16 %v1171
    %v1192 = vunpack.c.l.b16 %v1172
    %v1193 = vunpack.c.l.b16 %v1173
    %v1194 = vunpack.c.l.b16 %v1174
    %v1195 = vunpack.c.l.b16 %v1175
    %v1196 = vpack.c.b16 %v1189, %v1188
    %v1197 = vpack.c.b16 %v1191, %v1190
    %v1198 = vpack.c.b16 %v1193, %v1192
    %v1199 = vpack.c.b16 %v1195, %v1194
    %vm1204 = vcmask 523264
    %v1206 = vsel %vm1204, %v1167, 0
    %1208 = vmatprep.subr.bf16.mxu0 0
    %1209 = vmatpush1.bf16.msra.mxu0 0
    %1210 = vmatprep.subr.bf16.mxu0 0
    %1211 = vmatpush1.bf16.msra.mxu0 0
    %1212 = vmatprep.subr.bf16.mxu0 0
    %1213 = vmatpush1.bf16.msra.mxu0 0
    %1214 = vmatprep.subr.bf16.mxu0 0
    %1215 = vmatpush1.bf16.msra.mxu0 0
    %1216 = vmatprep.subr.bf16.mxu0 0
    %1217 = vmatpush1.bf16.msra.mxu0 %v1199
    %1218 = vmatprep.subr.bf16.mxu0 0
    %1219 = vmatpush1.bf16.msra.mxu0 %v1198
    %1220 = vmatprep.subr.bf16.mxu0 0
    %1221 = vmatpush1.bf16.msra.mxu0 %v1197
    %1222 = vmatprep.subr.bf16.mxu0 0
    %1223 = vmatpush1.bf16.msra.mxu0 %v1196
    %1224 = vmatprep.subr.bf16.mxu0 0
    %1225 = vmatpush2.bf16.msra.mxu0 0
    %1226 = vmatprep.subr.bf16.mxu0 0
    %1227 = vmatpush2.bf16.msra.mxu0 0
    %1228 = vmatprep.subr.bf16.mxu0 0
    %1229 = vmatpush2.bf16.msra.mxu0 0
    %1230 = vmatprep.subr.bf16.mxu0 0
    %1231 = vmatpush2.bf16.msra.mxu0 0
    %1232 = vmatprep.subr.bf16.mxu0 0
    %1233 = vmatpush2.bf16.msra.mxu0 0
    %1234 = vmatprep.subr.bf16.mxu0 0
    %1235 = vmatpush2.bf16.msra.mxu0 0
    %1236 = vmatprep.subr.bf16.mxu0 0
    %1237 = vmatpush2.bf16.msra.mxu0 0
    %1238 = vmatprep.subr.bf16.mxu0 0
    %1239 = vmatpush2.bf16.msra.mxu0 0
    %1240 = vmatprep.mubr.bf16.mxu0 0
    %1241 = vmatmul.mubr.bf16.gmra.mxu0 %v1206
    %v1242 = vpop.f32.mrf.mxu0
    %v1243 = vadd.f32 %v1179, %v1242
    %v1244 = vpop.f32.mrf.mxu0
    %v1245 = vpop.f32.mrf.mxu0
    %v1246 = vadd.f32 %v1179, %v1245
    %v1247 = vpop.f32.mrf.mxu0
    %1248 = vdwg.mxu0
    %v1249 = vadd.f32 %v1243, %v1082
    %v1250 = vadd.f32 %v1246, %v1083
    %v1251 = vsel %vm350, %v1249, 0.0
    %1252 = vadd.xlane.f32.xlu0 %v1251
    %v1253 = vpop.xlane.xlu0 %1252
    %v1254 = vsel %vm350, %v1250, 0.0
    %1255 = vadd.xlane.f32.xlu0 %v1254
    %v1256 = vpop.xlane.xlu0 %1255
    %v1257 = vmul.f32 %v1253, %v357
    %v1258 = vmul.f32 %v1256, %v357
    %v1259 = vsub.f32 %v1249, %v1257
    %v1260 = vsub.f32 %v1250, %v1258
    %v1261 = vmul.f32 %v1259, %v1259
    %v1262 = vmul.f32 %v1260, %v1260
    %v1263 = vsel %vm350, %v1261, 0.0
    %1264 = vadd.xlane.f32.xlu0 %v1263
    %v1265 = vpop.xlane.xlu0 %1264
    %v1266 = vsel %vm350, %v1262, 0.0
    %1267 = vadd.xlane.f32.xlu0 %v1266
    %v1268 = vpop.xlane.xlu0 %1267
    %v1269 = vmul.f32 %v1265, %v357
    %v1270 = vmul.f32 %v1268, %v357
    %v1271 = vadd.f32 %v1269, 1e-05
    %v1272 = vadd.f32 %v1270, 1e-05
    %v1273 = vrsqrt.pop %v1271
    %v1274 = vrsqrt.pop %v1272
    %v1275 = vmul.f32 %v1259, %v1273
    %v1276 = vmul.f32 %v1260, %v1274
    %v1277 = vlaneseq
    %v1278 = vshrl.u32 %v1277, 7
    %v1279 = vsub.s32 6, %v1278
    %v1280 = vrot.slane %v392, %v1279
    %v1281 = vmul.f32 %v1275, %v1280
    %v1282 = vmul.f32 %v1276, %v1280
    %v1283 = vlaneseq
    %v1284 = vshrl.u32 %v1283, 7
    %v1285 = vsub.s32 7, %v1284
    %v1286 = vrot.slane %v392, %v1285
    %v1287 = vadd.f32 %v1281, %v1286
    %v1288 = vadd.f32 %v1282, %v1286
    %s1289 = scalar_lea.vmem [#allocation10], 8
    %v1290 = vld [vmem:[%s1289] sm:$0xff]
    %v1291 = vpack.c.bf16 %v1288, %v1287
    %s1292 = scalar_lea.vmem [#allocation6], 16
    %v1293 = vld [vmem:[%s1292] sm:$0xf]
    %v1294 = vld [vmem:[%s1292 + $0x4] sm:$0xf]
    %v1295 = vld [vmem:[%s1292 + $0x8] sm:$0xf]
    %v1296 = vld [vmem:[%s1292 + $0xc] sm:$0xf]
    %v1297 = vlaneseq
    %v1298 = vshrl.u32 %v1297, 7
    %v1299 = vsub.s32 0, %v1298
    %v1300 = vrot.slane %v1290, %v1299
    %v1305 = vunpack.c.l.b16 %v1293
    %v1306 = vunpack.c.l.b16 %v1294
    %v1307 = vunpack.c.l.b16 %v1295
    %v1308 = vunpack.c.l.b16 %v1296
    %v1309 = vpack.c.b16 %v1306, %v1305
    %v1310 = vpack.c.b16 %v1308, %v1307
    %v1314 = vsel %vm350, %v1291, 0
    %1316 = vmatprep.subr.bf16.mxu0 0
    %1317 = vmatpush1.bf16.msra.mxu0 0
    %1318 = vmatprep.subr.bf16.mxu0 0
    %1319 = vmatpush1.bf16.msra.mxu0 0
    %1320 = vmatprep.subr.bf16.mxu0 0
    %1321 = vmatpush1.bf16.msra.mxu0 0
    %1322 = vmatprep.subr.bf16.mxu0 0
    %1323 = vmatpush1.bf16.msra.mxu0 0
    %1324 = vmatprep.subr.bf16.mxu0 0
    %1325 = vmatpush1.bf16.msra.mxu0 0
    %1326 = vmatprep.subr.bf16.mxu0 0
    %1327 = vmatpush1.bf16.msra.mxu0 0
    %1328 = vmatprep.subr.bf16.mxu0 0
    %1329 = vmatpush1.bf16.msra.mxu0 %v1310
    %1330 = vmatprep.subr.bf16.mxu0 0
    %1331 = vmatpush1.bf16.msra.mxu0 %v1309
    %1332 = vmatprep.subr.bf16.mxu0 0
    %1333 = vmatpush2.bf16.msra.mxu0 0
    %1334 = vmatprep.subr.bf16.mxu0 0
    %1335 = vmatpush2.bf16.msra.mxu0 0
    %1336 = vmatprep.subr.bf16.mxu0 0
    %1337 = vmatpush2.bf16.msra.mxu0 0
    %1338 = vmatprep.subr.bf16.mxu0 0
    %1339 = vmatpush2.bf16.msra.mxu0 0
    %1340 = vmatprep.subr.bf16.mxu0 0
    %1341 = vmatpush2.bf16.msra.mxu0 0
    %1342 = vmatprep.subr.bf16.mxu0 0
    %1343 = vmatpush2.bf16.msra.mxu0 0
    %1344 = vmatprep.subr.bf16.mxu0 0
    %1345 = vmatpush2.bf16.msra.mxu0 0
    %1346 = vmatprep.subr.bf16.mxu0 0
    %1347 = vmatpush2.bf16.msra.mxu0 0
    %1348 = vmatprep.mubr.bf16.mxu0 0
    %1349 = vmatmul.mubr.bf16.gmra.mxu0 %v1314
    %v1350 = vpop.f32.mrf.mxu0
    %v1351 = vadd.f32 %v1300, %v1350
    %v1352 = vpop.f32.mrf.mxu0
    %v1353 = vpop.f32.mrf.mxu0
    %v1354 = vadd.f32 %v1300, %v1353
    %v1355 = vpop.f32.mrf.mxu0
    %1356 = vdwg.mxu0
    %v1357 = vmul.f32 %v1351, 0.35355338
    %v1358 = vmul.f32 %v1354, 0.35355338
    %v1359 = vpack.c.bf16 %v1358, %v1357
    %v1360 = vpack.c.bf16 %v1354, %v1351
    %1362 = vrot.lane.b32.xlu0 %v1360, 96
    %v1363 = vpop.permute.xlu0 %1362
    %v1365 = vsel %vm465, %v1359, 0
    %v1368 = vsel %vm465, %v1363, 0
    %1370 = vmatprep.subr.bf16.mxu0 0
    %1371 = vmatpush1.bf16.xpose.msra.mxu0 0
    %1372 = vmatprep.subr.bf16.mxu0 0
    %1373 = vmatpush1.bf16.xpose.msra.mxu0 0
    %1374 = vmatprep.subr.bf16.mxu0 0
    %1375 = vmatpush1.bf16.xpose.msra.mxu0 0
    %1376 = vmatprep.subr.bf16.mxu0 0
    %1377 = vmatpush1.bf16.xpose.msra.mxu0 0
    %1378 = vmatprep.subr.bf16.mxu0 0
    %1379 = vmatpush1.bf16.xpose.msra.mxu0 0
    %1380 = vmatprep.subr.bf16.mxu0 0
    %1381 = vmatpush1.bf16.xpose.msra.mxu0 0
    %1382 = vmatprep.subr.bf16.mxu0 0
    %1383 = vmatpush1.bf16.xpose.msra.mxu0 0
    %1384 = vmatprep.subr.bf16.mxu0 0
    %1385 = vmatpush1.bf16.xpose.msra.mxu0 %v1368
    %1386 = vmatprep.subr.bf16.mxu0 0
    %1387 = vmatpush2.bf16.xpose.msra.mxu0 0
    %1388 = vmatprep.subr.bf16.mxu0 0
    %1389 = vmatpush2.bf16.xpose.msra.mxu0 0
    %1390 = vmatprep.subr.bf16.mxu0 0
    %1391 = vmatpush2.bf16.xpose.msra.mxu0 0
    %1392 = vmatprep.subr.bf16.mxu0 0
    %1393 = vmatpush2.bf16.xpose.msra.mxu0 0
    %1394 = vmatprep.subr.bf16.mxu0 0
    %1395 = vmatpush2.bf16.xpose.msra.mxu0 0
    %1396 = vmatprep.subr.bf16.mxu0 0
    %1397 = vmatpush2.bf16.xpose.msra.mxu0 0
    %1398 = vmatprep.subr.bf16.mxu0 0
    %1399 = vmatpush2.bf16.xpose.msra.mxu0 0
    %1400 = vmatprep.subr.bf16.mxu0 0
    %1401 = vmatpush2.bf16.xpose.msra.mxu0 0
    %1402 = vmatprep.mubr.bf16.mxu0 0
    %1403 = vmatmul.mubr.bf16.gmra.mxu0 %v1365
    %v1404 = vpop.f32.mrf.mxu0
    %v1405 = vadd.f32 %v390, %v1404
    %v1406 = vpop.f32.mrf.mxu0
    %v1407 = vpop.f32.mrf.mxu0
    %v1408 = vadd.f32 %v391, %v1407
    %v1409 = vpop.f32.mrf.mxu0
    %1410 = vdwg.mxu0
    %v1411 = vsel %vm513, %v1405, -inf
    %1412 = vmax.xlane.f32.xlu0 %v1411
    %v1413 = vpop.xlane.xlu0 %1412
    %v1414 = vsel %vm513, %v1408, -inf
    %1415 = vmax.xlane.f32.xlu0 %v1414
    %v1416 = vpop.xlane.xlu0 %1415
    %v1417 = vsub.f32 %v1405, %v1413
    %v1418 = vsub.f32 %v1408, %v1416
    %v1419 = vmul.f32 %v1417, 1.442695
    %v1420 = vpow.pop %v1419
    %v1421 = vmul.f32 %v1418, 1.442695
    %v1422 = vpow.pop %v1421
    %v1423 = vsel %vm513, %v1420, 0.0
    %1424 = vadd.xlane.f32.xlu0 %v1423
    %v1425 = vpop.xlane.xlu0 %1424
    %v1426 = vsel %vm513, %v1422, 0.0
    %1427 = vadd.xlane.f32.xlu0 %v1426
    %v1428 = vpop.xlane.xlu0 %1427
    %v1429 = vrcp.pop %v1425
    %v1430 = vrcp.pop %v1428
    %v1431 = vmul.f32 %v1420, %v1429
    %v1432 = vmul.f32 %v1422, %v1430
    %v1433 = vpack.c.bf16 %v1432, %v1431
    %1434 = vrot.lane.b32.xlu0 %v1360, 64
    %v1435 = vpop.permute.xlu0 %1434
    %v1438 = vsel %vm513, %v1433, 0
    %1440 = vmatprep.subr.bf16.mxu0 0
    %1441 = vmatpush1.bf16.msra.mxu0 0
    %1442 = vmatprep.subr.bf16.mxu0 0
    %1443 = vmatpush1.bf16.msra.mxu0 0
    %1444 = vmatprep.subr.bf16.mxu0 0
    %1445 = vmatpush1.bf16.msra.mxu0 0
    %1446 = vmatprep.subr.bf16.mxu0 0
    %1447 = vmatpush1.bf16.msra.mxu0 0
    %1448 = vmatprep.subr.bf16.mxu0 0
    %1449 = vmatpush1.bf16.msra.mxu0 0
    %1450 = vmatprep.subr.bf16.mxu0 0
    %1451 = vmatpush1.bf16.msra.mxu0 0
    %1452 = vmatprep.subr.bf16.mxu0 0
    %1453 = vmatpush1.bf16.msra.mxu0 0
    %1454 = vmatprep.subr.bf16.mxu0 0
    %1455 = vmatpush1.bf16.msra.mxu0 %v1435
    %1456 = vmatprep.subr.bf16.mxu0 0
    %1457 = vmatpush2.bf16.msra.mxu0 0
    %1458 = vmatprep.subr.bf16.mxu0 0
    %1459 = vmatpush2.bf16.msra.mxu0 0
    %1460 = vmatprep.subr.bf16.mxu0 0
    %1461 = vmatpush2.bf16.msra.mxu0 0
    %1462 = vmatprep.subr.bf16.mxu0 0
    %1463 = vmatpush2.bf16.msra.mxu0 0
    %1464 = vmatprep.subr.bf16.mxu0 0
    %1465 = vmatpush2.bf16.msra.mxu0 0
    %1466 = vmatprep.subr.bf16.mxu0 0
    %1467 = vmatpush2.bf16.msra.mxu0 0
    %1468 = vmatprep.subr.bf16.mxu0 0
    %1469 = vmatpush2.bf16.msra.mxu0 0
    %1470 = vmatprep.subr.bf16.mxu0 0
    %1471 = vmatpush2.bf16.msra.mxu0 0
    %1472 = vmatprep.mubr.bf16.mxu0 0
    %1473 = vmatmul.mubr.bf16.gmra.mxu0 %v1438
    %v1474 = vpop.f32.mrf.mxu0
    %v1475 = vadd.f32 0.0, %v1474
    %v1476 = vpop.f32.mrf.mxu0
    %v1477 = vpop.f32.mrf.mxu0
    %v1478 = vadd.f32 0.0, %v1477
    %v1479 = vpop.f32.mrf.mxu0
    %1480 = vdwg.mxu0
    %1482 = vrot.lane.b32.xlu0 %v1359, 120
    %v1483 = vpop.permute.xlu0 %1482
    %1484 = vrot.lane.b32.xlu0 %v1360, 88
    %v1485 = vpop.permute.xlu0 %1484
    %v1487 = vsel %vm465, %v1483, 0
    %v1490 = vsel %vm465, %v1485, 0
    %1492 = vmatprep.subr.bf16.mxu0 0
    %1493 = vmatpush1.bf16.xpose.msra.mxu0 0
    %1494 = vmatprep.subr.bf16.mxu0 0
    %1495 = vmatpush1.bf16.xpose.msra.mxu0 0
    %1496 = vmatprep.subr.bf16.mxu0 0
    %1497 = vmatpush1.bf16.xpose.msra.mxu0 0
    %1498 = vmatprep.subr.bf16.mxu0 0
    %1499 = vmatpush1.bf16.xpose.msra.mxu0 0
    %1500 = vmatprep.subr.bf16.mxu0 0
    %1501 = vmatpush1.bf16.xpose.msra.mxu0 0
    %1502 = vmatprep.subr.bf16.mxu0 0
    %1503 = vmatpush1.bf16.xpose.msra.mxu0 0
    %1504 = vmatprep.subr.bf16.mxu0 0
    %1505 = vmatpush1.bf16.xpose.msra.mxu0 0
    %1506 = vmatprep.subr.bf16.mxu0 0
    %1507 = vmatpush1.bf16.xpose.msra.mxu0 %v1490
    %1508 = vmatprep.subr.bf16.mxu0 0
    %1509 = vmatpush2.bf16.xpose.msra.mxu0 0
    %1510 = vmatprep.subr.bf16.mxu0 0
    %1511 = vmatpush2.bf16.xpose.msra.mxu0 0
    %1512 = vmatprep.subr.bf16.mxu0 0
    %1513 = vmatpush2.bf16.xpose.msra.mxu0 0
    %1514 = vmatprep.subr.bf16.mxu0 0
    %1515 = vmatpush2.bf16.xpose.msra.mxu0 0
    %1516 = vmatprep.subr.bf16.mxu0 0
    %1517 = vmatpush2.bf16.xpose.msra.mxu0 0
    %1518 = vmatprep.subr.bf16.mxu0 0
    %1519 = vmatpush2.bf16.xpose.msra.mxu0 0
    %1520 = vmatprep.subr.bf16.mxu0 0
    %1521 = vmatpush2.bf16.xpose.msra.mxu0 0
    %1522 = vmatprep.subr.bf16.mxu0 0
    %1523 = vmatpush2.bf16.xpose.msra.mxu0 0
    %1524 = vmatprep.mubr.bf16.mxu0 0
    %1525 = vmatmul.mubr.bf16.gmra.mxu0 %v1487
    %v1526 = vpop.f32.mrf.mxu0
    %v1527 = vadd.f32 %v390, %v1526
    %v1528 = vpop.f32.mrf.mxu0
    %v1529 = vpop.f32.mrf.mxu0
    %v1530 = vadd.f32 %v391, %v1529
    %v1531 = vpop.f32.mrf.mxu0
    %1532 = vdwg.mxu0
    %v1533 = vsel %vm513, %v1527, -inf
    %1534 = vmax.xlane.f32.xlu0 %v1533
    %v1535 = vpop.xlane.xlu0 %1534
    %v1536 = vsel %vm513, %v1530, -inf
    %1537 = vmax.xlane.f32.xlu0 %v1536
    %v1538 = vpop.xlane.xlu0 %1537
    %v1539 = vsub.f32 %v1527, %v1535
    %v1540 = vsub.f32 %v1530, %v1538
    %v1541 = vmul.f32 %v1539, 1.442695
    %v1542 = vpow.pop %v1541
    %v1543 = vmul.f32 %v1540, 1.442695
    %v1544 = vpow.pop %v1543
    %v1545 = vsel %vm513, %v1542, 0.0
    %1546 = vadd.xlane.f32.xlu0 %v1545
    %v1547 = vpop.xlane.xlu0 %1546
    %v1548 = vsel %vm513, %v1544, 0.0
    %1549 = vadd.xlane.f32.xlu0 %v1548
    %v1550 = vpop.xlane.xlu0 %1549
    %v1551 = vrcp.pop %v1547
    %v1552 = vrcp.pop %v1550
    %v1553 = vmul.f32 %v1542, %v1551
    %v1554 = vmul.f32 %v1544, %v1552
    %v1555 = vpack.c.bf16 %v1554, %v1553
    %1556 = vrot.lane.b32.xlu0 %v1360, 56
    %v1557 = vpop.permute.xlu0 %1556
    %v1560 = vsel %vm513, %v1555, 0
    %1562 = vmatprep.subr.bf16.mxu0 0
    %1563 = vmatpush1.bf16.msra.mxu0 0
    %1564 = vmatprep.subr.bf16.mxu0 0
    %1565 = vmatpush1.bf16.msra.mxu0 0
    %1566 = vmatprep.subr.bf16.mxu0 0
    %1567 = vmatpush1.bf16.msra.mxu0 0
    %1568 = vmatprep.subr.bf16.mxu0 0
    %1569 = vmatpush1.bf16.msra.mxu0 0
    %1570 = vmatprep.subr.bf16.mxu0 0
    %1571 = vmatpush1.bf16.msra.mxu0 0
    %1572 = vmatprep.subr.bf16.mxu0 0
    %1573 = vmatpush1.bf16.msra.mxu0 0
    %1574 = vmatprep.subr.bf16.mxu0 0
    %1575 = vmatpush1.bf16.msra.mxu0 0
    %1576 = vmatprep.subr.bf16.mxu0 0
    %1577 = vmatpush1.bf16.msra.mxu0 %v1557
    %1578 = vmatprep.subr.bf16.mxu0 0
    %1579 = vmatpush2.bf16.msra.mxu0 0
    %1580 = vmatprep.subr.bf16.mxu0 0
    %1581 = vmatpush2.bf16.msra.mxu0 0
    %1582 = vmatprep.subr.bf16.mxu0 0
    %1583 = vmatpush2.bf16.msra.mxu0 0
    %1584 = vmatprep.subr.bf16.mxu0 0
    %1585 = vmatpush2.bf16.msra.mxu0 0
    %1586 = vmatprep.subr.bf16.mxu0 0
    %1587 = vmatpush2.bf16.msra.mxu0 0
    %1588 = vmatprep.subr.bf16.mxu0 0
    %1589 = vmatpush2.bf16.msra.mxu0 0
    %1590 = vmatprep.subr.bf16.mxu0 0
    %1591 = vmatpush2.bf16.msra.mxu0 0
    %1592 = vmatprep.subr.bf16.mxu0 0
    %1593 = vmatpush2.bf16.msra.mxu0 0
    %1594 = vmatprep.mubr.bf16.mxu0 0
    %1595 = vmatmul.mubr.bf16.gmra.mxu0 %v1560
    %v1596 = vpop.f32.mrf.mxu0
    %v1597 = vadd.f32 0.0, %v1596
    %v1598 = vpop.f32.mrf.mxu0
    %v1599 = vpop.f32.mrf.mxu0
    %v1600 = vadd.f32 0.0, %v1599
    %v1601 = vpop.f32.mrf.mxu0
    %1602 = vdwg.mxu0
    %1603 = vrot.lane.b32.xlu0 %v1359, 112
    %v1604 = vpop.permute.xlu0 %1603
    %1605 = vrot.lane.b32.xlu0 %v1360, 80
    %v1606 = vpop.permute.xlu0 %1605
    %v1608 = vsel %vm465, %v1604, 0
    %v1611 = vsel %vm465, %v1606, 0
    %1613 = vmatprep.subr.bf16.mxu0 0
    %1614 = vmatpush1.bf16.xpose.msra.mxu0 0
    %1615 = vmatprep.subr.bf16.mxu0 0
    %1616 = vmatpush1.bf16.xpose.msra.mxu0 0
    %1617 = vmatprep.subr.bf16.mxu0 0
    %1618 = vmatpush1.bf16.xpose.msra.mxu0 0
    %1619 = vmatprep.subr.bf16.mxu0 0
    %1620 = vmatpush1.bf16.xpose.msra.mxu0 0
    %1621 = vmatprep.subr.bf16.mxu0 0
    %1622 = vmatpush1.bf16.xpose.msra.mxu0 0
    %1623 = vmatprep.subr.bf16.mxu0 0
    %1624 = vmatpush1.bf16.xpose.msra.mxu0 0
    %1625 = vmatprep.subr.bf16.mxu0 0
    %1626 = vmatpush1.bf16.xpose.msra.mxu0 0
    %1627 = vmatprep.subr.bf16.mxu0 0
    %1628 = vmatpush1.bf16.xpose.msra.mxu0 %v1611
    %1629 = vmatprep.subr.bf16.mxu0 0
    %1630 = vmatpush2.bf16.xpose.msra.mxu0 0
    %1631 = vmatprep.subr.bf16.mxu0 0
    %1632 = vmatpush2.bf16.xpose.msra.mxu0 0
    %1633 = vmatprep.subr.bf16.mxu0 0
    %1634 = vmatpush2.bf16.xpose.msra.mxu0 0
    %1635 = vmatprep.subr.bf16.mxu0 0
    %1636 = vmatpush2.bf16.xpose.msra.mxu0 0
    %1637 = vmatprep.subr.bf16.mxu0 0
    %1638 = vmatpush2.bf16.xpose.msra.mxu0 0
    %1639 = vmatprep.subr.bf16.mxu0 0
    %1640 = vmatpush2.bf16.xpose.msra.mxu0 0
    %1641 = vmatprep.subr.bf16.mxu0 0
    %1642 = vmatpush2.bf16.xpose.msra.mxu0 0
    %1643 = vmatprep.subr.bf16.mxu0 0
    %1644 = vmatpush2.bf16.xpose.msra.mxu0 0
    %1645 = vmatprep.mubr.bf16.mxu0 0
    %1646 = vmatmul.mubr.bf16.gmra.mxu0 %v1608
    %v1647 = vpop.f32.mrf.mxu0
    %v1648 = vadd.f32 %v390, %v1647
    %v1649 = vpop.f32.mrf.mxu0
    %v1650 = vpop.f32.mrf.mxu0
    %v1651 = vadd.f32 %v391, %v1650
    %v1652 = vpop.f32.mrf.mxu0
    %1653 = vdwg.mxu0
    %v1654 = vsel %vm513, %v1648, -inf
    %1655 = vmax.xlane.f32.xlu0 %v1654
    %v1656 = vpop.xlane.xlu0 %1655
    %v1657 = vsel %vm513, %v1651, -inf
    %1658 = vmax.xlane.f32.xlu0 %v1657
    %v1659 = vpop.xlane.xlu0 %1658
    %v1660 = vsub.f32 %v1648, %v1656
    %v1661 = vsub.f32 %v1651, %v1659
    %v1662 = vmul.f32 %v1660, 1.442695
    %v1663 = vpow.pop %v1662
    %v1664 = vmul.f32 %v1661, 1.442695
    %v1665 = vpow.pop %v1664
    %v1666 = vsel %vm513, %v1663, 0.0
    %1667 = vadd.xlane.f32.xlu0 %v1666
    %v1668 = vpop.xlane.xlu0 %1667
    %v1669 = vsel %vm513, %v1665, 0.0
    %1670 = vadd.xlane.f32.xlu0 %v1669
    %v1671 = vpop.xlane.xlu0 %1670
    %v1672 = vrcp.pop %v1668
    %v1673 = vrcp.pop %v1671
    %v1674 = vmul.f32 %v1663, %v1672
    %v1675 = vmul.f32 %v1665, %v1673
    %v1676 = vpack.c.bf16 %v1675, %v1674
    %1677 = vrot.lane.b32.xlu0 %v1360, 48
    %v1678 = vpop.permute.xlu0 %1677
    %v1681 = vsel %vm513, %v1676, 0
    %1683 = vmatprep.subr.bf16.mxu0 0
    %1684 = vmatpush1.bf16.msra.mxu0 0
    %1685 = vmatprep.subr.bf16.mxu0 0
    %1686 = vmatpush1.bf16.msra.mxu0 0
    %1687 = vmatprep.subr.bf16.mxu0 0
    %1688 = vmatpush1.bf16.msra.mxu0 0
    %1689 = vmatprep.subr.bf16.mxu0 0
    %1690 = vmatpush1.bf16.msra.mxu0 0
    %1691 = vmatprep.subr.bf16.mxu0 0
    %1692 = vmatpush1.bf16.msra.mxu0 0
    %1693 = vmatprep.subr.bf16.mxu0 0
    %1694 = vmatpush1.bf16.msra.mxu0 0
    %1695 = vmatprep.subr.bf16.mxu0 0
    %1696 = vmatpush1.bf16.msra.mxu0 0
    %1697 = vmatprep.subr.bf16.mxu0 0
    %1698 = vmatpush1.bf16.msra.mxu0 %v1678
    %1699 = vmatprep.subr.bf16.mxu0 0
    %1700 = vmatpush2.bf16.msra.mxu0 0
    %1701 = vmatprep.subr.bf16.mxu0 0
    %1702 = vmatpush2.bf16.msra.mxu0 0
    %1703 = vmatprep.subr.bf16.mxu0 0
    %1704 = vmatpush2.bf16.msra.mxu0 0
    %1705 = vmatprep.subr.bf16.mxu0 0
    %1706 = vmatpush2.bf16.msra.mxu0 0
    %1707 = vmatprep.subr.bf16.mxu0 0
    %1708 = vmatpush2.bf16.msra.mxu0 0
    %1709 = vmatprep.subr.bf16.mxu0 0
    %1710 = vmatpush2.bf16.msra.mxu0 0
    %1711 = vmatprep.subr.bf16.mxu0 0
    %1712 = vmatpush2.bf16.msra.mxu0 0
    %1713 = vmatprep.subr.bf16.mxu0 0
    %1714 = vmatpush2.bf16.msra.mxu0 0
    %1715 = vmatprep.mubr.bf16.mxu0 0
    %1716 = vmatmul.mubr.bf16.gmra.mxu0 %v1681
    %v1717 = vpop.f32.mrf.mxu0
    %v1718 = vadd.f32 0.0, %v1717
    %v1719 = vpop.f32.mrf.mxu0
    %v1720 = vpop.f32.mrf.mxu0
    %v1721 = vadd.f32 0.0, %v1720
    %v1722 = vpop.f32.mrf.mxu0
    %1723 = vdwg.mxu0
    %1724 = vrot.lane.b32.xlu0 %v1359, 104
    %v1725 = vpop.permute.xlu0 %1724
    %1726 = vrot.lane.b32.xlu0 %v1360, 72
    %v1727 = vpop.permute.xlu0 %1726
    %v1729 = vsel %vm465, %v1725, 0
    %v1732 = vsel %vm465, %v1727, 0
    %1734 = vmatprep.subr.bf16.mxu0 0
    %1735 = vmatpush1.bf16.xpose.msra.mxu0 0
    %1736 = vmatprep.subr.bf16.mxu0 0
    %1737 = vmatpush1.bf16.xpose.msra.mxu0 0
    %1738 = vmatprep.subr.bf16.mxu0 0
    %1739 = vmatpush1.bf16.xpose.msra.mxu0 0
    %1740 = vmatprep.subr.bf16.mxu0 0
    %1741 = vmatpush1.bf16.xpose.msra.mxu0 0
    %1742 = vmatprep.subr.bf16.mxu0 0
    %1743 = vmatpush1.bf16.xpose.msra.mxu0 0
    %1744 = vmatprep.subr.bf16.mxu0 0
    %1745 = vmatpush1.bf16.xpose.msra.mxu0 0
    %1746 = vmatprep.subr.bf16.mxu0 0
    %1747 = vmatpush1.bf16.xpose.msra.mxu0 0
    %1748 = vmatprep.subr.bf16.mxu0 0
    %1749 = vmatpush1.bf16.xpose.msra.mxu0 %v1732
    %1750 = vmatprep.subr.bf16.mxu0 0
    %1751 = vmatpush2.bf16.xpose.msra.mxu0 0
    %1752 = vmatprep.subr.bf16.mxu0 0
    %1753 = vmatpush2.bf16.xpose.msra.mxu0 0
    %1754 = vmatprep.subr.bf16.mxu0 0
    %1755 = vmatpush2.bf16.xpose.msra.mxu0 0
    %1756 = vmatprep.subr.bf16.mxu0 0
    %1757 = vmatpush2.bf16.xpose.msra.mxu0 0
    %1758 = vmatprep.subr.bf16.mxu0 0
    %1759 = vmatpush2.bf16.xpose.msra.mxu0 0
    %1760 = vmatprep.subr.bf16.mxu0 0
    %1761 = vmatpush2.bf16.xpose.msra.mxu0 0
    %1762 = vmatprep.subr.bf16.mxu0 0
    %1763 = vmatpush2.bf16.xpose.msra.mxu0 0
    %1764 = vmatprep.subr.bf16.mxu0 0
    %1765 = vmatpush2.bf16.xpose.msra.mxu0 0
    %1766 = vmatprep.mubr.bf16.mxu0 0
    %1767 = vmatmul.mubr.bf16.gmra.mxu0 %v1729
    %v1768 = vpop.f32.mrf.mxu0
    %v1769 = vadd.f32 %v390, %v1768
    %v1770 = vpop.f32.mrf.mxu0
    %v1771 = vpop.f32.mrf.mxu0
    %v1772 = vadd.f32 %v391, %v1771
    %v1773 = vpop.f32.mrf.mxu0
    %1774 = vdwg.mxu0
    %v1775 = vsel %vm513, %v1769, -inf
    %1776 = vmax.xlane.f32.xlu0 %v1775
    %v1777 = vpop.xlane.xlu0 %1776
    %v1778 = vsel %vm513, %v1772, -inf
    %1779 = vmax.xlane.f32.xlu0 %v1778
    %v1780 = vpop.xlane.xlu0 %1779
    %v1781 = vsub.f32 %v1769, %v1777
    %v1782 = vsub.f32 %v1772, %v1780
    %v1783 = vmul.f32 %v1781, 1.442695
    %v1784 = vpow.pop %v1783
    %v1785 = vmul.f32 %v1782, 1.442695
    %v1786 = vpow.pop %v1785
    %v1787 = vsel %vm513, %v1784, 0.0
    %1788 = vadd.xlane.f32.xlu0 %v1787
    %v1789 = vpop.xlane.xlu0 %1788
    %v1790 = vsel %vm513, %v1786, 0.0
    %1791 = vadd.xlane.f32.xlu0 %v1790
    %v1792 = vpop.xlane.xlu0 %1791
    %v1793 = vrcp.pop %v1789
    %v1794 = vrcp.pop %v1792
    %v1795 = vmul.f32 %v1784, %v1793
    %v1796 = vmul.f32 %v1786, %v1794
    %v1797 = vpack.c.bf16 %v1796, %v1795
    %1798 = vrot.lane.b32.xlu0 %v1360, 40
    %v1799 = vpop.permute.xlu0 %1798
    %v1802 = vsel %vm513, %v1797, 0
    %1804 = vmatprep.subr.bf16.mxu0 0
    %1805 = vmatpush1.bf16.msra.mxu0 0
    %1806 = vmatprep.subr.bf16.mxu0 0
    %1807 = vmatpush1.bf16.msra.mxu0 0
    %1808 = vmatprep.subr.bf16.mxu0 0
    %1809 = vmatpush1.bf16.msra.mxu0 0
    %1810 = vmatprep.subr.bf16.mxu0 0
    %1811 = vmatpush1.bf16.msra.mxu0 0
    %1812 = vmatprep.subr.bf16.mxu0 0
    %1813 = vmatpush1.bf16.msra.mxu0 0
    %1814 = vmatprep.subr.bf16.mxu0 0
    %1815 = vmatpush1.bf16.msra.mxu0 0
    %1816 = vmatprep.subr.bf16.mxu0 0
    %1817 = vmatpush1.bf16.msra.mxu0 0
    %1818 = vmatprep.subr.bf16.mxu0 0
    %1819 = vmatpush1.bf16.msra.mxu0 %v1799
    %1820 = vmatprep.subr.bf16.mxu0 0
    %1821 = vmatpush2.bf16.msra.mxu0 0
    %1822 = vmatprep.subr.bf16.mxu0 0
    %1823 = vmatpush2.bf16.msra.mxu0 0
    %1824 = vmatprep.subr.bf16.mxu0 0
    %1825 = vmatpush2.bf16.msra.mxu0 0
    %1826 = vmatprep.subr.bf16.mxu0 0
    %1827 = vmatpush2.bf16.msra.mxu0 0
    %1828 = vmatprep.subr.bf16.mxu0 0
    %1829 = vmatpush2.bf16.msra.mxu0 0
    %1830 = vmatprep.subr.bf16.mxu0 0
    %1831 = vmatpush2.bf16.msra.mxu0 0
    %1832 = vmatprep.subr.bf16.mxu0 0
    %1833 = vmatpush2.bf16.msra.mxu0 0
    %1834 = vmatprep.subr.bf16.mxu0 0
    %1835 = vmatpush2.bf16.msra.mxu0 0
    %1836 = vmatprep.mubr.bf16.mxu0 0
    %1837 = vmatmul.mubr.bf16.gmra.mxu0 %v1802
    %v1838 = vpop.f32.mrf.mxu0
    %v1839 = vadd.f32 0.0, %v1838
    %v1840 = vpop.f32.mrf.mxu0
    %v1841 = vpop.f32.mrf.mxu0
    %v1842 = vadd.f32 0.0, %v1841
    %v1843 = vpop.f32.mrf.mxu0
    %1844 = vdwg.mxu0
    %1847 = vrot.lane.b32.xlu0 %v1597, 8
    %v1848 = vpop.permute.xlu0 %1847
    %1849 = vrot.lane.b32.xlu0 %v1600, 8
    %v1850 = vpop.permute.xlu0 %1849
    %1855 = vrot.lane.b32.xlu0 %v1718, 16
    %v1856 = vpop.permute.xlu0 %1855
    %1857 = vrot.lane.b32.xlu0 %v1721, 16
    %v1858 = vpop.permute.xlu0 %1857
    %1863 = vrot.lane.b32.xlu0 %v1839, 24
    %v1864 = vpop.permute.xlu0 %1863
    %1865 = vrot.lane.b32.xlu0 %v1842, 24
    %v1866 = vpop.permute.xlu0 %1865
    %v1869 = vsel %vm465, %v1475, %v1848
    %v1870 = vsel %vm465, %v1478, %v1850
    %v1871 = vsel %vm513, %v1869, %v1856
    %v1872 = vsel %vm513, %v1870, %v1858
    %v1873 = vsel %vm976, %v1871, %v1864
    %v1874 = vsel %vm976, %v1872, %v1866
    %v1875 = vpack.c.bf16 %v1874, %v1873
    %s1876 = scalar_lea.vmem [#allocation7], 16
    %v1877 = vld [vmem:[%s1876] sm:$0xf]
    %v1878 = vld [vmem:[%s1876 + $0x4] sm:$0xf]
    %v1879 = vld [vmem:[%s1876 + $0x8] sm:$0xf]
    %v1880 = vld [vmem:[%s1876 + $0xc] sm:$0xf]
    %v1881 = vlaneseq
    %v1882 = vshrl.u32 %v1881, 7
    %v1883 = vsub.s32 1, %v1882
    %v1884 = vrot.slane %v1290, %v1883
    %v1889 = vunpack.c.l.b16 %v1877
    %v1890 = vunpack.c.l.b16 %v1878
    %v1891 = vunpack.c.l.b16 %v1879
    %v1892 = vunpack.c.l.b16 %v1880
    %v1893 = vpack.c.b16 %v1890, %v1889
    %v1894 = vpack.c.b16 %v1892, %v1891
    %v1898 = vsel %vm350, %v1875, 0
    %1900 = vmatprep.subr.bf16.mxu0 0
    %1901 = vmatpush1.bf16.msra.mxu0 0
    %1902 = vmatprep.subr.bf16.mxu0 0
    %1903 = vmatpush1.bf16.msra.mxu0 0
    %1904 = vmatprep.subr.bf16.mxu0 0
    %1905 = vmatpush1.bf16.msra.mxu0 0
    %1906 = vmatprep.subr.bf16.mxu0 0
    %1907 = vmatpush1.bf16.msra.mxu0 0
    %1908 = vmatprep.subr.bf16.mxu0 0
    %1909 = vmatpush1.bf16.msra.mxu0 0
    %1910 = vmatprep.subr.bf16.mxu0 0
    %1911 = vmatpush1.bf16.msra.mxu0 0
    %1912 = vmatprep.subr.bf16.mxu0 0
    %1913 = vmatpush1.bf16.msra.mxu0 %v1894
    %1914 = vmatprep.subr.bf16.mxu0 0
    %1915 = vmatpush1.bf16.msra.mxu0 %v1893
    %1916 = vmatprep.subr.bf16.mxu0 0
    %1917 = vmatpush2.bf16.msra.mxu0 0
    %1918 = vmatprep.subr.bf16.mxu0 0
    %1919 = vmatpush2.bf16.msra.mxu0 0
    %1920 = vmatprep.subr.bf16.mxu0 0
    %1921 = vmatpush2.bf16.msra.mxu0 0
    %1922 = vmatprep.subr.bf16.mxu0 0
    %1923 = vmatpush2.bf16.msra.mxu0 0
    %1924 = vmatprep.subr.bf16.mxu0 0
    %1925 = vmatpush2.bf16.msra.mxu0 0
    %1926 = vmatprep.subr.bf16.mxu0 0
    %1927 = vmatpush2.bf16.msra.mxu0 0
    %1928 = vmatprep.subr.bf16.mxu0 0
    %1929 = vmatpush2.bf16.msra.mxu0 0
    %1930 = vmatprep.subr.bf16.mxu0 0
    %1931 = vmatpush2.bf16.msra.mxu0 0
    %1932 = vmatprep.mubr.bf16.mxu0 0
    %1933 = vmatmul.mubr.bf16.gmra.mxu0 %v1898
    %v1934 = vpop.f32.mrf.mxu0
    %v1935 = vadd.f32 %v1884, %v1934
    %v1936 = vpop.f32.mrf.mxu0
    %v1937 = vpop.f32.mrf.mxu0
    %v1938 = vadd.f32 %v1884, %v1937
    %v1939 = vpop.f32.mrf.mxu0
    %1940 = vdwg.mxu0
    %v1941 = vadd.f32 %v1935, %v1287
    %v1942 = vadd.f32 %v1938, %v1288
    %v1943 = vsel %vm350, %v1941, 0.0
    %1944 = vadd.xlane.f32.xlu0 %v1943
    %v1945 = vpop.xlane.xlu0 %1944
    %v1946 = vsel %vm350, %v1942, 0.0
    %1947 = vadd.xlane.f32.xlu0 %v1946
    %v1948 = vpop.xlane.xlu0 %1947
    %v1949 = vmul.f32 %v1945, %v357
    %v1950 = vmul.f32 %v1948, %v357
    %v1951 = vsub.f32 %v1941, %v1949
    %v1952 = vsub.f32 %v1942, %v1950
    %v1953 = vmul.f32 %v1951, %v1951
    %v1954 = vmul.f32 %v1952, %v1952
    %v1955 = vsel %vm350, %v1953, 0.0
    %1956 = vadd.xlane.f32.xlu0 %v1955
    %v1957 = vpop.xlane.xlu0 %1956
    %v1958 = vsel %vm350, %v1954, 0.0
    %1959 = vadd.xlane.f32.xlu0 %v1958
    %v1960 = vpop.xlane.xlu0 %1959
    %v1961 = vmul.f32 %v1957, %v357
    %v1962 = vmul.f32 %v1960, %v357
    %v1963 = vadd.f32 %v1961, 1e-05
    %v1964 = vadd.f32 %v1962, 1e-05
    %v1965 = vrsqrt.pop %v1963
    %v1966 = vrsqrt.pop %v1964
    %v1967 = vmul.f32 %v1951, %v1965
    %v1968 = vmul.f32 %v1952, %v1966
    %v1969 = vlaneseq
    %v1970 = vshrl.u32 %v1969, 7
    %v1971 = vsub.s32 2, %v1970
    %v1972 = vrot.slane %v1290, %v1971
    %v1973 = vmul.f32 %v1967, %v1972
    %v1974 = vmul.f32 %v1968, %v1972
    %v1975 = vlaneseq
    %v1976 = vshrl.u32 %v1975, 7
    %v1977 = vsub.s32 3, %v1976
    %v1978 = vrot.slane %v1290, %v1977
    %v1979 = vadd.f32 %v1973, %v1978
    %v1980 = vadd.f32 %v1974, %v1978
    %v1981 = vpack.c.bf16 %v1980, %v1979
    %s1982 = scalar_lea.vmem %s6, 16
    %v1983 = vld [vmem:[%s1982] sm:$0xf]
    %v1984 = vld [vmem:[%s1982 + $0x4] sm:$0xf]
    %v1985 = vld [vmem:[%s1982 + $0x8] sm:$0xf]
    %v1986 = vld [vmem:[%s1982 + $0xc] sm:$0xf]
    %v1987 = vlaneseq
    %v1988 = vshrl.u32 %v1987, 7
    %v1989 = vsub.s32 4, %v1988
    %v1990 = vrot.slane %v1290, %v1989
    %v1995 = vunpack.c.l.b16 %v1983
    %v1996 = vunpack.c.l.b16 %v1984
    %v1997 = vunpack.c.l.b16 %v1985
    %v1998 = vunpack.c.l.b16 %v1986
    %v1999 = vpack.c.b16 %v1996, %v1995
    %v2000 = vpack.c.b16 %v1998, %v1997
    %v2004 = vsel %vm350, %v1981, 0
    %2006 = vmatprep.subr.bf16.mxu0 0
    %2007 = vmatpush1.bf16.msra.mxu0 0
    %2008 = vmatprep.subr.bf16.mxu0 0
    %2009 = vmatpush1.bf16.msra.mxu0 0
    %2010 = vmatprep.subr.bf16.mxu0 0
    %2011 = vmatpush1.bf16.msra.mxu0 0
    %2012 = vmatprep.subr.bf16.mxu0 0
    %2013 = vmatpush1.bf16.msra.mxu0 0
    %2014 = vmatprep.subr.bf16.mxu0 0
    %2015 = vmatpush1.bf16.msra.mxu0 0
    %2016 = vmatprep.subr.bf16.mxu0 0
    %2017 = vmatpush1.bf16.msra.mxu0 0
    %2018 = vmatprep.subr.bf16.mxu0 0
    %2019 = vmatpush1.bf16.msra.mxu0 %v2000
    %2020 = vmatprep.subr.bf16.mxu0 0
    %2021 = vmatpush1.bf16.msra.mxu0 %v1999
    %2022 = vmatprep.subr.bf16.mxu0 0
    %2023 = vmatpush2.bf16.msra.mxu0 0
    %2024 = vmatprep.subr.bf16.mxu0 0
    %2025 = vmatpush2.bf16.msra.mxu0 0
    %2026 = vmatprep.subr.bf16.mxu0 0
    %2027 = vmatpush2.bf16.msra.mxu0 0
    %2028 = vmatprep.subr.bf16.mxu0 0
    %2029 = vmatpush2.bf16.msra.mxu0 0
    %2030 = vmatprep.subr.bf16.mxu0 0
    %2031 = vmatpush2.bf16.msra.mxu0 0
    %2032 = vmatprep.subr.bf16.mxu0 0
    %2033 = vmatpush2.bf16.msra.mxu0 0
    %2034 = vmatprep.subr.bf16.mxu0 0
    %2035 = vmatpush2.bf16.msra.mxu0 0
    %2036 = vmatprep.subr.bf16.mxu0 0
    %2037 = vmatpush2.bf16.msra.mxu0 0
    %2038 = vmatprep.mubr.bf16.mxu0 0
    %2039 = vmatmul.mubr.bf16.gmra.mxu0 %v2004
    %v2040 = vpop.f32.mrf.mxu0
    %v2041 = vadd.f32 %v1990, %v2040
    %v2042 = vpop.f32.mrf.mxu0
    %v2043 = vpop.f32.mrf.mxu0
    %v2044 = vadd.f32 %v1990, %v2043
    %v2045 = vpop.f32.mrf.mxu0
    %2046 = vdwg.mxu0
    %v2047 = vmul.f32 %v2041, %v2041
    %v2048 = vmul.f32 %v2044, %v2044
    %v2049 = vmul.f32 %v2041, %v2047
    %v2050 = vmul.f32 %v2044, %v2048
    %v2051 = vmul.f32 %v2049, 0.044715
    %v2052 = vmul.f32 %v2050, 0.044715
    %v2053 = vadd.f32 %v2041, %v2051
    %v2054 = vadd.f32 %v2044, %v2052
    %v2055 = vmul.f32 %v2053, 0.7978846
    %v2056 = vmul.f32 %v2054, 0.7978846
    %v2057 = vtanh.pop %v2055
    %v2058 = vtanh.pop %v2056
    %v2059 = vadd.f32 %v2057, 1.0
    %v2060 = vadd.f32 %v2058, 1.0
    %v2061 = vmul.f32 %v2059, 0.5
    %v2062 = vmul.f32 %v2060, 0.5
    %v2063 = vmul.f32 %v2041, %v2061
    %v2064 = vmul.f32 %v2044, %v2062
    %v2065 = vpack.c.bf16 %v2064, %v2063
    %s2066 = scalar_lea.vmem [#allocation9], 32
    %v2067 = vld [vmem:[%s2066] sm:$0xf]
    %v2068 = vld [vmem:[%s2066 + $0x4] sm:$0xf]
    %v2069 = vld [vmem:[%s2066 + $0x8] sm:$0xf]
    %v2070 = vld [vmem:[%s2066 + $0xc] sm:$0xf]
    %v2071 = vld [vmem:[%s2066 + $0x10] sm:$0xf]
    %v2072 = vld [vmem:[%s2066 + $0x14] sm:$0xf]
    %v2073 = vld [vmem:[%s2066 + $0x18] sm:$0xf]
    %v2074 = vld [vmem:[%s2066 + $0x1c] sm:$0xf]
    %v2075 = vlaneseq
    %v2076 = vshrl.u32 %v2075, 7
    %v2077 = vsub.s32 5, %v2076
    %v2078 = vrot.slane %v1290, %v2077
    %v2087 = vunpack.c.l.b16 %v2067
    %v2088 = vunpack.c.l.b16 %v2068
    %v2089 = vunpack.c.l.b16 %v2069
    %v2090 = vunpack.c.l.b16 %v2070
    %v2091 = vunpack.c.l.b16 %v2071
    %v2092 = vunpack.c.l.b16 %v2072
    %v2093 = vunpack.c.l.b16 %v2073
    %v2094 = vunpack.c.l.b16 %v2074
    %v2095 = vpack.c.b16 %v2088, %v2087
    %v2096 = vpack.c.b16 %v2090, %v2089
    %v2097 = vpack.c.b16 %v2092, %v2091
    %v2098 = vpack.c.b16 %v2094, %v2093
    %v2104 = vsel %vm1204, %v2065, 0
    %2106 = vmatprep.subr.bf16.mxu0 0
    %2107 = vmatpush1.bf16.msra.mxu0 0
    %2108 = vmatprep.subr.bf16.mxu0 0
    %2109 = vmatpush1.bf16.msra.mxu0 0
    %2110 = vmatprep.subr.bf16.mxu0 0
    %2111 = vmatpush1.bf16.msra.mxu0 0
    %2112 = vmatprep.subr.bf16.mxu0 0
    %2113 = vmatpush1.bf16.msra.mxu0 0
    %2114 = vmatprep.subr.bf16.mxu0 0
    %2115 = vmatpush1.bf16.msra.mxu0 %v2098
    %2116 = vmatprep.subr.bf16.mxu0 0
    %2117 = vmatpush1.bf16.msra.mxu0 %v2097
    %2118 = vmatprep.subr.bf16.mxu0 0
    %2119 = vmatpush1.bf16.msra.mxu0 %v2096
    %2120 = vmatprep.subr.bf16.mxu0 0
    %2121 = vmatpush1.bf16.msra.mxu0 %v2095
    %2122 = vmatprep.subr.bf16.mxu0 0
    %2123 = vmatpush2.bf16.msra.mxu0 0
    %2124 = vmatprep.subr.bf16.mxu0 0
    %2125 = vmatpush2.bf16.msra.mxu0 0
    %2126 = vmatprep.subr.bf16.mxu0 0
    %2127 = vmatpush2.bf16.msra.mxu0 0
    %2128 = vmatprep.subr.bf16.mxu0 0
    %2129 = vmatpush2.bf16.msra.mxu0 0
    %2130 = vmatprep.subr.bf16.mxu0 0
    %2131 = vmatpush2.bf16.msra.mxu0 0
    %2132 = vmatprep.subr.bf16.mxu0 0
    %2133 = vmatpush2.bf16.msra.mxu0 0
    %2134 = vmatprep.subr.bf16.mxu0 0
    %2135 = vmatpush2.bf16.msra.mxu0 0
    %2136 = vmatprep.subr.bf16.mxu0 0
    %2137 = vmatpush2.bf16.msra.mxu0 0
    %2138 = vmatprep.mubr.bf16.mxu0 0
    %2139 = vmatmul.mubr.bf16.gmra.mxu0 %v2104
    %v2140 = vpop.f32.mrf.mxu0
    %v2141 = vadd.f32 %v2078, %v2140
    %v2142 = vpop.f32.mrf.mxu0
    %v2143 = vpop.f32.mrf.mxu0
    %v2144 = vadd.f32 %v2078, %v2143
    %v2145 = vpop.f32.mrf.mxu0
    %2146 = vdwg.mxu0
    %v2147 = vadd.f32 %v2141, %v1979
    %v2148 = vadd.f32 %v2144, %v1980
    %v2149 = vsel %vm350, %v2147, 0.0
    %2150 = vadd.xlane.f32.xlu0 %v2149
    %v2151 = vpop.xlane.xlu0 %2150
    %v2152 = vsel %vm350, %v2148, 0.0
    %2153 = vadd.xlane.f32.xlu0 %v2152
    %v2154 = vpop.xlane.xlu0 %2153
    %v2155 = vmul.f32 %v2151, %v357
    %v2156 = vmul.f32 %v2154, %v357
    %v2157 = vsub.f32 %v2147, %v2155
    %v2158 = vsub.f32 %v2148, %v2156
    %v2159 = vmul.f32 %v2157, %v2157
    %v2160 = vmul.f32 %v2158, %v2158
    %v2161 = vsel %vm350, %v2159, 0.0
    %2162 = vadd.xlane.f32.xlu0 %v2161
    %v2163 = vpop.xlane.xlu0 %2162
    %v2164 = vsel %vm350, %v2160, 0.0
    %2165 = vadd.xlane.f32.xlu0 %v2164
    %v2166 = vpop.xlane.xlu0 %2165
    %v2167 = vmul.f32 %v2163, %v357
    %v2168 = vmul.f32 %v2166, %v357
    %v2169 = vadd.f32 %v2167, 1e-05
    %v2170 = vadd.f32 %v2168, 1e-05
    %v2171 = vrsqrt.pop %v2169
    %v2172 = vrsqrt.pop %v2170
    %v2173 = vmul.f32 %v2157, %v2171
    %v2174 = vmul.f32 %v2158, %v2172
    %v2175 = vlaneseq
    %v2176 = vshrl.u32 %v2175, 7
    %v2177 = vsub.s32 6, %v2176
    %v2178 = vrot.slane %v1290, %v2177
    %v2179 = vmul.f32 %v2173, %v2178
    %v2180 = vmul.f32 %v2174, %v2178
    %v2181 = vlaneseq
    %v2182 = vshrl.u32 %v2181, 7
    %v2183 = vsub.s32 7, %v2182
    %v2184 = vrot.slane %v1290, %v2183
    %v2185 = vadd.f32 %v2179, %v2184
    %v2186 = vadd.f32 %v2180, %v2184
    %v2187 = vpack.c.bf16 %v2186, %v2185
    %v2188 = vld [vmem:[%s9] sm:$0xff]
    %v2189 = vld [vmem:[%s9 + $0x8] sm:$0xff]
    %v2190 = vld [vmem:[%s9 + $0x10] sm:$0xff]
    %v2191 = vld [vmem:[%s9 + $0x18] sm:$0xff]
    %v2192 = vld [vmem:[%s9 + $0x20] sm:$0xff]
    %v2193 = vld [vmem:[%s9 + $0x28] sm:$0xff]
    %v2194 = vld [vmem:[%s9 + $0x30] sm:$0xff]
    %v2195 = vld [vmem:[%s9 + $0x38] sm:$0xff]
    %v2196 = vld [vmem:[%s11] ss:$2 sm:$0xf]
    %v2198 = vlaneseq
    %v2199 = vshrl.u32 %v2198, 7
    %v2200 = vsub.s32 0, %v2199
    %v2201 = vrot.slane %v2196, %v2200
    %v2202 = vlaneseq
    %v2203 = vshrl.u32 %v2202, 7
    %v2204 = vsub.s32 1, %v2203
    %v2205 = vrot.slane %v2196, %v2204
    %v2206 = vlaneseq
    %v2207 = vshrl.u32 %v2206, 7
    %v2208 = vsub.s32 2, %v2207
    %v2209 = vrot.slane %v2196, %v2208
    %v2210 = vlaneseq
    %v2211 = vshrl.u32 %v2210, 7
    %v2212 = vsub.s32 3, %v2211
    %v2213 = vrot.slane %v2196, %v2212
    %v2226 = vunpack.c.l.b16 %v2188
    %v2227 = vunpack.c.h.b16 %v2188
    %v2228 = vunpack.c.l.b16 %v2189
    %v2229 = vunpack.c.h.b16 %v2189
    %v2230 = vunpack.c.l.b16 %v2190
    %v2231 = vunpack.c.h.b16 %v2190
    %v2232 = vunpack.c.l.b16 %v2191
    %v2233 = vunpack.c.h.b16 %v2191
    %v2234 = vunpack.c.l.b16 %v2192
    %v2235 = vunpack.c.h.b16 %v2192
    %v2236 = vunpack.c.l.b16 %v2193
    %v2237 = vunpack.c.h.b16 %v2193
    %v2238 = vunpack.c.l.b16 %v2194
    %v2239 = vunpack.c.h.b16 %v2194
    %v2240 = vunpack.c.l.b16 %v2195
    %v2241 = vunpack.c.h.b16 %v2195
    %v2242 = vpack.c.b16 %v2230, %v2226
    %v2243 = vpack.c.b16 %v2231, %v2227
    %v2244 = vpack.c.b16 %v2232, %v2228
    %v2245 = vpack.c.b16 %v2233, %v2229
    %v2246 = vpack.c.b16 %v2238, %v2234
    %v2247 = vpack.c.b16 %v2239, %v2235
    %v2248 = vpack.c.b16 %v2240, %v2236
    %v2249 = vpack.c.b16 %v2241, %v2237
    %v2259 = vsel %vm350, %v2187, 0
    %2261 = vmatprep.subr.bf16.mxu0 0
    %2262 = vmatpush1.bf16.msra.mxu0 0
    %2263 = vmatprep.subr.bf16.mxu0 0
    %2264 = vmatpush1.bf16.msra.mxu0 0
    %2265 = vmatprep.subr.bf16.mxu0 0
    %2266 = vmatpush1.bf16.msra.mxu0 0
    %2267 = vmatprep.subr.bf16.mxu0 0
    %2268 = vmatpush1.bf16.msra.mxu0 0
    %2269 = vmatprep.subr.bf16.mxu0 0
    %2270 = vmatpush1.bf16.msra.mxu0 0
    %2271 = vmatprep.subr.bf16.mxu0 0
    %2272 = vmatpush1.bf16.msra.mxu0 0
    %2273 = vmatprep.subr.bf16.mxu0 %v2247
    %2274 = vmatpush1.bf16.msra.mxu0 %v2246
    %2275 = vmatprep.subr.bf16.mxu0 %v2243
    %2276 = vmatpush1.bf16.msra.mxu0 %v2242
    %2277 = vmatprep.subr.bf16.mxu0 0
    %2278 = vmatpush2.bf16.msra.mxu0 0
    %2279 = vmatprep.subr.bf16.mxu0 0
    %2280 = vmatpush2.bf16.msra.mxu0 0
    %2281 = vmatprep.subr.bf16.mxu0 0
    %2282 = vmatpush2.bf16.msra.mxu0 0
    %2283 = vmatprep.subr.bf16.mxu0 0
    %2284 = vmatpush2.bf16.msra.mxu0 0
    %2285 = vmatprep.subr.bf16.mxu0 0
    %2286 = vmatpush2.bf16.msra.mxu0 0
    %2287 = vmatprep.subr.bf16.mxu0 0
    %2288 = vmatpush2.bf16.msra.mxu0 0
    %2289 = vmatprep.subr.bf16.mxu0 0
    %2290 = vmatpush2.bf16.msra.mxu0 0
    %2291 = vmatprep.subr.bf16.mxu0 0
    %2292 = vmatpush2.bf16.msra.mxu0 0
    %2293 = vmatprep.mubr.bf16.mxu0 0
    %2294 = vmatmul.mubr.bf16.gmra.mxu0 %v2259
    %v2295 = vpop.f32.mrf.mxu0
    %v2296 = vadd.f32 %v2201, %v2295
    %v2297 = vpop.f32.mrf.mxu0
    %v2298 = vadd.f32 %v2205, %v2297
    %v2299 = vpop.f32.mrf.mxu0
    %v2300 = vadd.f32 %v2201, %v2299
    %v2301 = vpop.f32.mrf.mxu0
    %v2302 = vadd.f32 %v2205, %v2301
    %2303 = vdwg.mxu0
    %2304 = vmatprep.subr.bf16.mxu0 0
    %2305 = vmatpush1.bf16.msra.mxu0 0
    %2306 = vmatprep.subr.bf16.mxu0 0
    %2307 = vmatpush1.bf16.msra.mxu0 0
    %2308 = vmatprep.subr.bf16.mxu0 0
    %2309 = vmatpush1.bf16.msra.mxu0 0
    %2310 = vmatprep.subr.bf16.mxu0 0
    %2311 = vmatpush1.bf16.msra.mxu0 0
    %2312 = vmatprep.subr.bf16.mxu0 0
    %2313 = vmatpush1.bf16.msra.mxu0 0
    %2314 = vmatprep.subr.bf16.mxu0 0
    %2315 = vmatpush1.bf16.msra.mxu0 0
    %2316 = vmatprep.subr.bf16.mxu0 %v2249
    %2317 = vmatpush1.bf16.msra.mxu0 %v2248
    %2318 = vmatprep.subr.bf16.mxu0 %v2245
    %2319 = vmatpush1.bf16.msra.mxu0 %v2244
    %2320 = vmatprep.subr.bf16.mxu0 0
    %2321 = vmatpush2.bf16.msra.mxu0 0
    %2322 = vmatprep.subr.bf16.mxu0 0
    %2323 = vmatpush2.bf16.msra.mxu0 0
    %2324 = vmatprep.subr.bf16.mxu0 0
    %2325 = vmatpush2.bf16.msra.mxu0 0
    %2326 = vmatprep.subr.bf16.mxu0 0
    %2327 = vmatpush2.bf16.msra.mxu0 0
    %2328 = vmatprep.subr.bf16.mxu0 0
    %2329 = vmatpush2.bf16.msra.mxu0 0
    %2330 = vmatprep.subr.bf16.mxu0 0
    %2331 = vmatpush2.bf16.msra.mxu0 0
    %2332 = vmatprep.subr.bf16.mxu0 0
    %2333 = vmatpush2.bf16.msra.mxu0 0
    %2334 = vmatprep.subr.bf16.mxu0 0
    %2335 = vmatpush2.bf16.msra.mxu0 0
    %2336 = vmatprep.mubr.bf16.mxu0 0
    %2337 = vmatmul.mubr.bf16.gmra.mxu0 %v2259
    %v2338 = vpop.f32.mrf.mxu0
    %v2339 = vadd.f32 %v2209, %v2338
    %v2340 = vpop.f32.mrf.mxu0
    %v2341 = vadd.f32 %v2213, %v2340
    %v2342 = vpop.f32.mrf.mxu0
    %v2343 = vadd.f32 %v2209, %v2342
    %v2344 = vpop.f32.mrf.mxu0
    %v2345 = vadd.f32 %v2213, %v2344
    %2346 = vdwg.mxu0
    %v2347 = vmax.f32 %v2296, 0.0
    %v2348 = vmax.f32 %v2298, 0.0
    %v2349 = vmax.f32 %v2339, 0.0
    %v2350 = vmax.f32 %v2341, 0.0
    %v2351 = vmax.f32 %v2300, 0.0
    %v2352 = vmax.f32 %v2302, 0.0
    %v2353 = vmax.f32 %v2343, 0.0
    %v2354 = vmax.f32 %v2345, 0.0
    %v2355 = vpack.c.bf16 %v2351, %v2347
    %v2356 = vpack.c.bf16 %v2352, %v2348
    %v2357 = vpack.c.bf16 %v2353, %v2349
    %v2358 = vpack.c.bf16 %v2354, %v2350
    %v2359 = vld [vmem:[#allocation12] sm:$0xff]
    %v2360 = vld [vmem:[#allocation12 + $0x8] sm:$0xff]
    %v2361 = vld [vmem:[#allocation12 + $0x10] sm:$0xff]
    %v2362 = vld [vmem:[#allocation12 + $0x18] sm:$0xff]
    %v2363 = vld [vmem:[#allocation12 + $0x20] sm:$0xff]
    %v2364 = vld [vmem:[#allocation12 + $0x28] sm:$0xff]
    %v2365 = vld [vmem:[#allocation12 + $0x30] sm:$0xff]
    %v2366 = vld [vmem:[#allocation12 + $0x38] sm:$0xff]
    %v2367 = vld [vmem:[#allocation12 + $0x40] sm:$0xff]
    %v2368 = vld [vmem:[#allocation12 + $0x48] sm:$0xff]
    %v2369 = vld [vmem:[#allocation12 + $0x50] sm:$0xff]
    %v2370 = vld [vmem:[#allocation12 + $0x58] sm:$0xff]
    %v2371 = vld [vmem:[#allocation12 + $0x60] sm:$0xff]
    %v2372 = vld [vmem:[#allocation12 + $0x68] sm:$0xff]
    %v2373 = vld [vmem:[#allocation12 + $0x70] sm:$0xff]
    %v2374 = vld [vmem:[#allocation12 + $0x78] sm:$0xff]
    %v2375 = vld [vmem:[#allocation12 + $0x80] sm:$0xff]
    %v2376 = vld [vmem:[#allocation12 + $0x88] sm:$0xff]
    %v2377 = vld [vmem:[#allocation12 + $0x90] sm:$0xff]
    %v2378 = vld [vmem:[#allocation12 + $0x98] sm:$0xff]
    %v2379 = vld [vmem:[#allocation12 + $0xa0] sm:$0xff]
    %v2380 = vld [vmem:[#allocation12 + $0xa8] sm:$0xff]
    %v2381 = vld [vmem:[#allocation12 + $0xb0] sm:$0xff]
    %v2382 = vld [vmem:[#allocation12 + $0xb8] sm:$0xff]
    %v2383 = vld [vmem:[#allocation12 + $0xc0] sm:$0xff]
    %v2384 = vld [vmem:[#allocation12 + $0xc8] sm:$0xff]
    %v2385 = vld [vmem:[#allocation12 + $0xd0] sm:$0xff]
    %v2386 = vld [vmem:[#allocation12 + $0xd8] sm:$0xff]
    %v2387 = vld [vmem:[#allocation12 + $0xe0] sm:$0xff]
    %v2388 = vld [vmem:[#allocation12 + $0xe8] sm:$0xff]
    %v2389 = vld [vmem:[#allocation12 + $0xf0] sm:$0xff]
    %v2390 = vld [vmem:[#allocation12 + $0xf8] sm:$0xff]
    %v2391 = vld [vmem:[#allocation12 + $0x100] sm:$0xff]
    %v2392 = vld [vmem:[#allocation12 + $0x108] sm:$0xff]
    %v2393 = vld [vmem:[#allocation12 + $0x110] sm:$0xff]
    %v2394 = vld [vmem:[#allocation12 + $0x118] sm:$0xff]
    %v2395 = vld [vmem:[#allocation12 + $0x120] sm:$0xff]
    %v2396 = vld [vmem:[#allocation12 + $0x128] sm:$0xff]
    %v2397 = vld [vmem:[#allocation12 + $0x130] sm:$0xff]
    %v2398 = vld [vmem:[#allocation12 + $0x138] sm:$0xff]
    %v2399 = vld [vmem:[#allocation12 + $0x140] sm:$0xff]
    %v2400 = vld [vmem:[#allocation12 + $0x148] sm:$0xff]
    %v2401 = vld [vmem:[#allocation12 + $0x150] sm:$0xff]
    %v2402 = vld [vmem:[#allocation12 + $0x158] sm:$0xff]
    %v2403 = vld [vmem:[#allocation12 + $0x160] sm:$0xff]
    %v2404 = vld [vmem:[#allocation12 + $0x168] sm:$0xff]
    %v2405 = vld [vmem:[#allocation12 + $0x170] sm:$0xff]
    %v2406 = vld [vmem:[#allocation12 + $0x178] sm:$0xff]
    %v2407 = vld [vmem:[#allocation12 + $0x180] sm:$0xff]
    %v2408 = vld [vmem:[#allocation12 + $0x188] sm:$0xff]
    %v2409 = vld [vmem:[#allocation12 + $0x190] sm:$0xff]
    %v2410 = vld [vmem:[#allocation12 + $0x198] sm:$0xff]
    %v2411 = vld [vmem:[#allocation12 + $0x1a0] sm:$0xff]
    %v2412 = vld [vmem:[#allocation12 + $0x1a8] sm:$0xff]
    %v2413 = vld [vmem:[#allocation12 + $0x1b0] sm:$0xff]
    %v2414 = vld [vmem:[#allocation12 + $0x1b8] sm:$0xff]
    %v2415 = vld [vmem:[#allocation12 + $0x1c0] sm:$0xff]
    %v2416 = vld [vmem:[#allocation12 + $0x1c8] sm:$0xff]
    %v2417 = vld [vmem:[#allocation12 + $0x1d0] sm:$0xff]
    %v2418 = vld [vmem:[#allocation12 + $0x1d8] sm:$0xff]
    %v2419 = vld [vmem:[#allocation12 + $0x1e0] sm:$0xff]
    %v2420 = vld [vmem:[#allocation12 + $0x1e8] sm:$0xff]
    %v2421 = vld [vmem:[#allocation12 + $0x1f0] sm:$0xff]
    %v2422 = vld [vmem:[#allocation12 + $0x1f8] sm:$0xff]
    %s2423 = scalar_lea.vmem %s11, 1
    %v2424 = vld [vmem:[%s2423] ss:$2 sm:$0x3]
    %v2426 = vlaneseq
    %v2427 = vshrl.u32 %v2426, 7
    %v2428 = vsub.s32 0, %v2427
    %v2429 = vrot.slane %v2424, %v2428
    %v2430 = vlaneseq
    %v2431 = vshrl.u32 %v2430, 7
    %v2432 = vsub.s32 1, %v2431
    %v2433 = vrot.slane %v2424, %v2432
    %v2500 = vunpack.c.l.b16 %v2359
    %v2501 = vunpack.c.h.b16 %v2359
    %v2502 = vunpack.c.l.b16 %v2360
    %v2503 = vunpack.c.h.b16 %v2360
    %v2504 = vunpack.c.l.b16 %v2361
    %v2505 = vunpack.c.h.b16 %v2361
    %v2506 = vunpack.c.l.b16 %v2362
    %v2507 = vunpack.c.h.b16 %v2362
    %v2508 = vunpack.c.l.b16 %v2363
    %v2509 = vunpack.c.h.b16 %v2363
    %v2510 = vunpack.c.l.b16 %v2364
    %v2511 = vunpack.c.h.b16 %v2364
    %v2512 = vunpack.c.l.b16 %v2365
    %v2513 = vunpack.c.h.b16 %v2365
    %v2514 = vunpack.c.l.b16 %v2366
    %v2515 = vunpack.c.h.b16 %v2366
    %v2516 = vunpack.c.l.b16 %v2367
    %v2517 = vunpack.c.h.b16 %v2367
    %v2518 = vunpack.c.l.b16 %v2368
    %v2519 = vunpack.c.h.b16 %v2368
    %v2520 = vunpack.c.l.b16 %v2369
    %v2521 = vunpack.c.h.b16 %v2369
    %v2522 = vunpack.c.l.b16 %v2370
    %v2523 = vunpack.c.h.b16 %v2370
    %v2524 = vunpack.c.l.b16 %v2371
    %v2525 = vunpack.c.h.b16 %v2371
    %v2526 = vunpack.c.l.b16 %v2372
    %v2527 = vunpack.c.h.b16 %v2372
    %v2528 = vunpack.c.l.b16 %v2373
    %v2529 = vunpack.c.h.b16 %v2373
    %v2530 = vunpack.c.l.b16 %v2374
    %v2531 = vunpack.c.h.b16 %v2374
    %v2532 = vunpack.c.l.b16 %v2375
    %v2533 = vunpack.c.h.b16 %v2375
    %v2534 = vunpack.c.l.b16 %v2376
    %v2535 = vunpack.c.h.b16 %v2376
    %v2536 = vunpack.c.l.b16 %v2377
    %v2537 = vunpack.c.h.b16 %v2377
    %v2538 = vunpack.c.l.b16 %v2378
    %v2539 = vunpack.c.h.b16 %v2378
    %v2540 = vunpack.c.l.b16 %v2379
    %v2541 = vunpack.c.h.b16 %v2379
    %v2542 = vunpack.c.l.b16 %v2380
    %v2543 = vunpack.c.h.b16 %v2380
    %v2544 = vunpack.c.l.b16 %v2381
    %v2545 = vunpack.c.h.b16 %v2381
    %v2546 = vunpack.c.l.b16 %v2382
    %v2547 = vunpack.c.h.b16 %v2382
    %v2548 = vunpack.c.l.b16 %v2383
    %v2549 = vunpack.c.h.b16 %v2383
    %v2550 = vunpack.c.l.b16 %v2384
    %v2551 = vunpack.c.h.b16 %v2384
    %v2552 = vunpack.c.l.b16 %v2385
    %v2553 = vunpack.c.h.b16 %v2385
    %v2554 = vunpack.c.l.b16 %v2386
    %v2555 = vunpack.c.h.b16 %v2386
    %v2556 = vunpack.c.l.b16 %v2387
    %v2557 = vunpack.c.h.b16 %v2387
    %v2558 = vunpack.c.l.b16 %v2388
    %v2559 = vunpack.c.h.b16 %v2388
    %v2560 = vunpack.c.l.b16 %v2389
    %v2561 = vunpack.c.h.b16 %v2389
    %v2562 = vunpack.c.l.b16 %v2390
    %v2563 = vunpack.c.h.b16 %v2390
    %v2564 = vunpack.c.l.b16 %v2391
    %v2565 = vunpack.c.h.b16 %v2391
    %v2566 = vunpack.c.l.b16 %v2392
    %v2567 = vunpack.c.h.b16 %v2392
    %v2568 = vunpack.c.l.b16 %v2393
    %v2569 = vunpack.c.h.b16 %v2393
    %v2570 = vunpack.c.l.b16 %v2394
    %v2571 = vunpack.c.h.b16 %v2394
    %v2572 = vunpack.c.l.b16 %v2395
    %v2573 = vunpack.c.h.b16 %v2395
    %v2574 = vunpack.c.l.b16 %v2396
    %v2575 = vunpack.c.h.b16 %v2396
    %v2576 = vunpack.c.l.b16 %v2397
    %v2577 = vunpack.c.h.b16 %v2397
    %v2578 = vunpack.c.l.b16 %v2398
    %v2579 = vunpack.c.h.b16 %v2398
    %v2580 = vunpack.c.l.b16 %v2399
    %v2581 = vunpack.c.h.b16 %v2399
    %v2582 = vunpack.c.l.b16 %v2400
    %v2583 = vunpack.c.h.b16 %v2400
    %v2584 = vunpack.c.l.b16 %v2401
    %v2585 = vunpack.c.h.b16 %v2401
    %v2586 = vunpack.c.l.b16 %v2402
    %v2587 = vunpack.c.h.b16 %v2402
    %v2588 = vunpack.c.l.b16 %v2403
    %v2589 = vunpack.c.h.b16 %v2403
    %v2590 = vunpack.c.l.b16 %v2404
    %v2591 = vunpack.c.h.b16 %v2404
    %v2592 = vunpack.c.l.b16 %v2405
    %v2593 = vunpack.c.h.b16 %v2405
    %v2594 = vunpack.c.l.b16 %v2406
    %v2595 = vunpack.c.h.b16 %v2406
    %v2596 = vunpack.c.l.b16 %v2407
    %v2597 = vunpack.c.h.b16 %v2407
    %v2598 = vunpack.c.l.b16 %v2408
    %v2599 = vunpack.c.h.b16 %v2408
    %v2600 = vunpack.c.l.b16 %v2409
    %v2601 = vunpack.c.h.b16 %v2409
    %v2602 = vunpack.c.l.b16 %v2410
    %v2603 = vunpack.c.h.b16 %v2410
    %v2604 = vunpack.c.l.b16 %v2411
    %v2605 = vunpack.c.h.b16 %v2411
    %v2606 = vunpack.c.l.b16 %v2412
    %v2607 = vunpack.c.h.b16 %v2412
    %v2608 = vunpack.c.l.b16 %v2413
    %v2609 = vunpack.c.h.b16 %v2413
    %v2610 = vunpack.c.l.b16 %v2414
    %v2611 = vunpack.c.h.b16 %v2414
    %v2612 = vunpack.c.l.b16 %v2415
    %v2613 = vunpack.c.h.b16 %v2415
    %v2614 = vunpack.c.l.b16 %v2416
    %v2615 = vunpack.c.h.b16 %v2416
    %v2616 = vunpack.c.l.b16 %v2417
    %v2617 = vunpack.c.h.b16 %v2417
    %v2618 = vunpack.c.l.b16 %v2418
    %v2619 = vunpack.c.h.b16 %v2418
    %v2620 = vunpack.c.l.b16 %v2419
    %v2621 = vunpack.c.h.b16 %v2419
    %v2622 = vunpack.c.l.b16 %v2420
    %v2623 = vunpack.c.h.b16 %v2420
    %v2624 = vunpack.c.l.b16 %v2421
    %v2625 = vunpack.c.h.b16 %v2421
    %v2626 = vunpack.c.l.b16 %v2422
    %v2627 = vunpack.c.h.b16 %v2422
    %v2628 = vpack.c.b16 %v2502, %v2500
    %v2629 = vpack.c.b16 %v2503, %v2501
    %v2630 = vpack.c.b16 %v2506, %v2504
    %v2631 = vpack.c.b16 %v2507, %v2505
    %v2632 = vpack.c.b16 %v2510, %v2508
    %v2633 = vpack.c.b16 %v2511, %v2509
    %v2634 = vpack.c.b16 %v2514, %v2512
    %v2635 = vpack.c.b16 %v2515, %v2513
    %v2636 = vpack.c.b16 %v2518, %v2516
    %v2637 = vpack.c.b16 %v2519, %v2517
    %v2638 = vpack.c.b16 %v2522, %v2520
    %v2639 = vpack.c.b16 %v2523, %v2521
    %v2640 = vpack.c.b16 %v2526, %v2524
    %v2641 = vpack.c.b16 %v2527, %v2525
    %v2642 = vpack.c.b16 %v2530, %v2528
    %v2643 = vpack.c.b16 %v2531, %v2529
    %v2644 = vpack.c.b16 %v2534, %v2532
    %v2645 = vpack.c.b16 %v2535, %v2533
    %v2646 = vpack.c.b16 %v2538, %v2536
    %v2647 = vpack.c.b16 %v2539, %v2537
    %v2648 = vpack.c.b16 %v2542, %v2540
    %v2649 = vpack.c.b16 %v2543, %v2541
    %v2650 = vpack.c.b16 %v2546, %v2544
    %v2651 = vpack.c.b16 %v2547, %v2545
    %v2652 = vpack.c.b16 %v2550, %v2548
    %v2653 = vpack.c.b16 %v2551, %v2549
    %v2654 = vpack.c.b16 %v2554, %v2552
    %v2655 = vpack.c.b16 %v2555, %v2553
    %v2656 = vpack.c.b16 %v2558, %v2556
    %v2657 = vpack.c.b16 %v2559, %v2557
    %v2658 = vpack.c.b16 %v2562, %v2560
    %v2659 = vpack.c.b16 %v2563, %v2561
    %v2660 = vpack.c.b16 %v2566, %v2564
    %v2661 = vpack.c.b16 %v2567, %v2565
    %v2662 = vpack.c.b16 %v2570, %v2568
    %v2663 = vpack.c.b16 %v2571, %v2569
    %v2664 = vpack.c.b16 %v2574, %v2572
    %v2665 = vpack.c.b16 %v2575, %v2573
    %v2666 = vpack.c.b16 %v2578, %v2576
    %v2667 = vpack.c.b16 %v2579, %v2577
    %v2668 = vpack.c.b16 %v2582, %v2580
    %v2669 = vpack.c.b16 %v2583, %v2581
    %v2670 = vpack.c.b16 %v2586, %v2584
    %v2671 = vpack.c.b16 %v2587, %v2585
    %v2672 = vpack.c.b16 %v2590, %v2588
    %v2673 = vpack.c.b16 %v2591, %v2589
    %v2674 = vpack.c.b16 %v2594, %v2592
    %v2675 = vpack.c.b16 %v2595, %v2593
    %v2676 = vpack.c.b16 %v2598, %v2596
    %v2677 = vpack.c.b16 %v2599, %v2597
    %v2678 = vpack.c.b16 %v2602, %v2600
    %v2679 = vpack.c.b16 %v2603, %v2601
    %v2680 = vpack.c.b16 %v2606, %v2604
    %v2681 = vpack.c.b16 %v2607, %v2605
    %v2682 = vpack.c.b16 %v2610, %v2608
    %v2683 = vpack.c.b16 %v2611, %v2609
    %v2684 = vpack.c.b16 %v2614, %v2612
    %v2685 = vpack.c.b16 %v2615, %v2613
    %v2686 = vpack.c.b16 %v2618, %v2616
    %v2687 = vpack.c.b16 %v2619, %v2617
    %v2688 = vpack.c.b16 %v2622, %v2620
    %v2689 = vpack.c.b16 %v2623, %v2621
    %v2690 = vpack.c.b16 %v2626, %v2624
    %v2691 = vpack.c.b16 %v2627, %v2625
    %2756 = vmatprep.subr.bf16.mxu0 %v2643
    %2757 = vmatpush1.bf16.msra.mxu0 %v2642
    %2758 = vmatprep.subr.bf16.mxu0 %v2641
    %2759 = vmatpush1.bf16.msra.mxu0 %v2640
    %2760 = vmatprep.subr.bf16.mxu0 %v2639
    %2761 = vmatpush1.bf16.msra.mxu0 %v2638
    %2762 = vmatprep.subr.bf16.mxu0 %v2637
    %2763 = vmatpush1.bf16.msra.mxu0 %v2636
    %2764 = vmatprep.subr.bf16.mxu0 %v2635
    %2765 = vmatpush1.bf16.msra.mxu0 %v2634
    %2766 = vmatprep.subr.bf16.mxu0 %v2633
    %2767 = vmatpush1.bf16.msra.mxu0 %v2632
    %2768 = vmatprep.subr.bf16.mxu0 %v2631
    %2769 = vmatpush1.bf16.msra.mxu0 %v2630
    %2770 = vmatprep.subr.bf16.mxu0 %v2629
    %2771 = vmatpush1.bf16.msra.mxu0 %v2628
    %2772 = vmatprep.subr.bf16.mxu0 %v2659
    %2773 = vmatpush2.bf16.msra.mxu0 %v2658
    %2774 = vmatprep.subr.bf16.mxu0 %v2657
    %2775 = vmatpush2.bf16.msra.mxu0 %v2656
    %2776 = vmatprep.subr.bf16.mxu0 %v2655
    %2777 = vmatpush2.bf16.msra.mxu0 %v2654
    %2778 = vmatprep.subr.bf16.mxu0 %v2653
    %2779 = vmatpush2.bf16.msra.mxu0 %v2652
    %2780 = vmatprep.subr.bf16.mxu0 %v2651
    %2781 = vmatpush2.bf16.msra.mxu0 %v2650
    %2782 = vmatprep.subr.bf16.mxu0 %v2649
    %2783 = vmatpush2.bf16.msra.mxu0 %v2648
    %2784 = vmatprep.subr.bf16.mxu0 %v2647
    %2785 = vmatpush2.bf16.msra.mxu0 %v2646
    %2786 = vmatprep.subr.bf16.mxu0 %v2645
    %2787 = vmatpush2.bf16.msra.mxu0 %v2644
    %2788 = vmatprep.mubr.bf16.mxu0 %v2356
    %2789 = vmatmul.mubr.bf16.gmra.mxu0 %v2355
    %v2790 = vpop.f32.mrf.mxu0
    %v2791 = vadd.f32 %v2429, %v2790
    %v2792 = vpop.f32.mrf.mxu0
    %v2793 = vadd.f32 %v2433, %v2792
    %v2794 = vpop.f32.mrf.mxu0
    %v2795 = vadd.f32 %v2429, %v2794
    %v2796 = vpop.f32.mrf.mxu0
    %v2797 = vadd.f32 %v2433, %v2796
    %2798 = vdwg.mxu0
    %2799 = vmatprep.subr.bf16.mxu0 %v2675
    %2800 = vmatpush1.bf16.msra.mxu0 %v2674
    %2801 = vmatprep.subr.bf16.mxu0 %v2673
    %2802 = vmatpush1.bf16.msra.mxu0 %v2672
    %2803 = vmatprep.subr.bf16.mxu0 %v2671
    %2804 = vmatpush1.bf16.msra.mxu0 %v2670
    %2805 = vmatprep.subr.bf16.mxu0 %v2669
    %2806 = vmatpush1.bf16.msra.mxu0 %v2668
    %2807 = vmatprep.subr.bf16.mxu0 %v2667
    %2808 = vmatpush1.bf16.msra.mxu0 %v2666
    %2809 = vmatprep.subr.bf16.mxu0 %v2665
    %2810 = vmatpush1.bf16.msra.mxu0 %v2664
    %2811 = vmatprep.subr.bf16.mxu0 %v2663
    %2812 = vmatpush1.bf16.msra.mxu0 %v2662
    %2813 = vmatprep.subr.bf16.mxu0 %v2661
    %2814 = vmatpush1.bf16.msra.mxu0 %v2660
    %2815 = vmatprep.subr.bf16.mxu0 %v2691
    %2816 = vmatpush2.bf16.msra.mxu0 %v2690
    %2817 = vmatprep.subr.bf16.mxu0 %v2689
    %2818 = vmatpush2.bf16.msra.mxu0 %v2688
    %2819 = vmatprep.subr.bf16.mxu0 %v2687
    %2820 = vmatpush2.bf16.msra.mxu0 %v2686
    %2821 = vmatprep.subr.bf16.mxu0 %v2685
    %2822 = vmatpush2.bf16.msra.mxu0 %v2684
    %2823 = vmatprep.subr.bf16.mxu0 %v2683
    %2824 = vmatpush2.bf16.msra.mxu0 %v2682
    %2825 = vmatprep.subr.bf16.mxu0 %v2681
    %2826 = vmatpush2.bf16.msra.mxu0 %v2680
    %2827 = vmatprep.subr.bf16.mxu0 %v2679
    %2828 = vmatpush2.bf16.msra.mxu0 %v2678
    %2829 = vmatprep.subr.bf16.mxu0 %v2677
    %2830 = vmatpush2.bf16.msra.mxu0 %v2676
    %2831 = vmatprep.mubr.bf16.mxu0 %v2358
    %2832 = vmatmul.mubr.bf16.gmra.mxu0 %v2357
    %v2833 = vpop.f32.mrf.mxu0
    %v2834 = vadd.f32 %v2791, %v2833
    %v2835 = vpop.f32.mrf.mxu0
    %v2836 = vadd.f32 %v2793, %v2835
    %v2837 = vpop.f32.mrf.mxu0
    %v2838 = vadd.f32 %v2795, %v2837
    %v2839 = vpop.f32.mrf.mxu0
    %v2840 = vadd.f32 %v2797, %v2839
    %2841 = vdwg.mxu0
    %2842 = vst [vmem:[%s12] sm:$0xff] %v2834
    %2843 = vst [vmem:[%s12 + $0x8] sm:$0xff] %v2836
    %2844 = vst [vmem:[%s12 + $0x10] sm:$0xff] %v2838
    %2845 = vst [vmem:[%s12 + $0x18] sm:$0xff] %v2840
    // Predicated region
    $region78: #{_lambda_.1} parent=1 // pred_check
      _
    $region79: #{_lambda_.1} parent=1 // pred_check_branch
      %2847 = sbr.rel (0) target = $region81
    $region80: #{_lambda_.1} parent=1 // pred_region
      _
    $region81: #{_lambda_.1} parent=1 // pred_fallthru
      _
    // Predicated region
    $region82: #{_lambda_.1} parent=1 // pred_check
      _
    $region83: #{_lambda_.1} parent=1 // pred_check_branch
      %2849 = sbr.rel (0) target = $region85
    $region84: #{_lambda_.1} parent=1 // pred_region
      _
    $region85: #{_lambda_.1} parent=1 // pred_fallthru
      _
    %2850 = vsyncpa [#allocation3], 1
    %2851 = vsyncpa [#allocation5], 1
    %2852 = vsyncpa [#allocation8], 1
    %2853 = vsyncpa [#allocation11], 1

</llo_original>
